<compile_context>
chip_gen: v7x
topology: tpu7x:2x2x1
jax: 0.10.0
libtpu: 0.0.40
codegen_flags: <defaults>
</compile_context>

<pallas_src>
import numpy as np
import jax
import jax.numpy as jnp
from jax import lax
from jax.experimental import pallas as pl
from jax.experimental.pallas import tpu as pltpu

_NPAD = 128          # lane-dense padded width of the final Linear output


# ---------------------------------------------------------------------------
# Fused kernel: whole SimpleCNN forward for a tile of TB images per grid step.
# ---------------------------------------------------------------------------
def _simplecnn_kernel(x_ref,
                      w1a_ref, b1a_ref, s1_ref, w1k_ref, b1b_ref,
                      w2a_ref, b2a_ref, s2_ref, w2k_ref, b2b_ref,
                      pool_ref, wfc1_ref, bfc1_ref, wfc2_ref, bfc2_ref,
                      out_ref,
                      p1_ref, p2_ref, xf_ref):
    f32, bf16 = jnp.float32, jnp.bfloat16

    tb, cin, _ = x_ref.shape
    cm1 = w1a_ref.shape[0]            # channels after block-1 1x1 (64)
    cm2 = w2a_ref.shape[1]            # channels after block-2 1x1 (32)
    c2o = w2k_ref.shape[1]            # channels after block-2 3x3 (32)
    h1w1 = s1_ref.shape[0] // 9       # spatial size after block-1 stride-2 conv
    h2w2 = s2_ref.shape[0] // 9       # spatial size after block-2 stride-2 conv

    s1 = s1_ref[...]                  # (9*h1w1, H*W)   bf16 0/1 taps (stacked)
    w1a = w1a_ref[...]                # (cm1, cin)      f32, BN folded
    b1a = b1a_ref[...]                # (cm1, 1)        f32

    # ---- conv block 1: 1x1+BN+ReLU (VPU) then fused 9-tap gather (MXU) ------
    for b in range(tb):
        xb = x_ref[b]                                            # (cin, H*W) f32
        if cin <= 4:
            # Tiny contraction depth: broadcast multiply-adds on the VPU.
            acc = b1a
            for ci in range(cin):
                acc = acc + xb[ci:ci + 1, :] * w1a[:, ci:ci + 1]
        else:
            acc = jnp.dot(w1a.astype(bf16), xb.astype(bf16),
                          preferred_element_type=f32) + b1a
        a1 = jnp.maximum(acc, 0.0).astype(bf16)                  # (cm1, H*W)
        # One MXU pass gathers all 9 taps: contract the spatial (lane) axis of
        # both operands (sel rows are one-hot, so this is exact in bf16).
        g = lax.dot_general(s1, a1, (((1,), (1,)), ((), ())),
                            preferred_element_type=f32)          # (9*h1w1, cm1)
        # Repack (tap, q) rows x (c) lanes -> (b, q) rows x (tap, c) lanes.
        for t in range(9):
            p1_ref[b * h1w1:(b + 1) * h1w1, t * cm1:(t + 1) * cm1] = \
                g[t * h1w1:(t + 1) * h1w1, :]

    # block-1 3x3 weights: one K-packed matmul for the whole batch tile.
    a2 = jnp.maximum(
        jnp.dot(p1_ref[...].astype(bf16), w1k_ref[...],
                preferred_element_type=f32) + b1b_ref[...], 0.0)  # (tb*h1w1, cm1)

    # ---- conv block 2: 1x1+BN+ReLU, batched over the tile -------------------
    a3 = jnp.maximum(
        jnp.dot(a2.astype(bf16), w2a_ref[...],
                preferred_element_type=f32) + b2a_ref[...], 0.0)  # (tb*h1w1, cm2)
    a3 = a3.astype(bf16)

    s2 = s2_ref[...]                                              # (9*h2w2, h1w1)
    for b in range(tb):
        g2 = jnp.dot(s2, a3[b * h1w1:(b + 1) * h1w1, :],
                     preferred_element_type=f32)                  # (9*h2w2, cm2)
        for t in range(9):
            p2_ref[b * h2w2:(b + 1) * h2w2, t * cm2:(t + 1) * cm2] = \
                g2[t * h2w2:(t + 1) * h2w2, :]

    a4 = jnp.maximum(
        jnp.dot(p2_ref[...].astype(bf16), w2k_ref[...],
                preferred_element_type=f32) + b2b_ref[...], 0.0)  # (tb*h2w2, c2o)

    # ---- AdaptiveAvgPool2d((3,3)) + NCHW flatten, lane-packed per image -----
    pool = pool_ref[...]                                          # (9, h2w2) f32
    for b in range(tb):
        pooled = jnp.dot(pool, a4[b * h2w2:(b + 1) * h2w2, :],
                         preferred_element_type=f32)              # (9, c2o)
        for s in range(9):
            xf_ref[b:b + 1, s * c2o:(s + 1) * c2o] = pooled[s:s + 1, :]

    # ---- classifier: Linear(288,256)+ReLU, Linear(256,nc) padded to 128 -----
    h = jnp.maximum(
        jnp.dot(xf_ref[...].astype(bf16), wfc1_ref[...],
                preferred_element_type=f32) + bfc1_ref[...], 0.0)  # (tb, 256)
    out = jnp.dot(h.astype(bf16), wfc2_ref[...],
                  preferred_element_type=f32) + bfc2_ref[...]      # (tb, 128)
    out_ref[0] = out.astype(out_ref.dtype)


# ---------------------------------------------------------------------------
# Wrapper-side preprocessing (one-time XLA glue: BN folding, weight re-layout,
# stacked spatial selection / pooling matrices).
# ---------------------------------------------------------------------------
def _conv_out_hw(h):
    return (h - 1) // 2 + 1      # kernel 3, stride 2, pad 1


def _conv3x3_select_np(hin, win):
    ho, wo = _conv_out_hw(hin), _conv_out_hw(win)
    sel = np.zeros((9, ho * wo, hin * win), np.float32)
    for kh in range(3):
        for kw in range(3):
            t = kh * 3 + kw
            for i in range(ho):
                hi = 2 * i + kh - 1
                if hi < 0 or hi >= hin:
                    continue
                for j in range(wo):
                    wi = 2 * j + kw - 1
                    if wi < 0 or wi >= win:
                        continue
                    sel[t, i * wo + j, hi * win + wi] = 1.0
    return sel.reshape(9 * ho * wo, hin * win)          # tap-major stacking


def _adaptive_pool_mat_np(hin, win, hout=3, wout=3):
    mat = np.zeros((hout * wout, hin * win), np.float32)
    for i in range(hout):
        hs, he = (i * hin) // hout, -(-((i + 1) * hin) // hout)
        for j in range(wout):
            ws, we = (j * win) // wout, -(-((j + 1) * win) // wout)
            inv_area = 1.0 / float((he - hs) * (we - ws))
            for h in range(hs, he):
                for w in range(ws, we):
                    mat[i * wout + j, h * win + w] = inv_area
    return mat


def _bn_fold(conv_bias, gamma, beta, mean, var, eps=1e-5):
    scale = gamma / jnp.sqrt(var + eps)
    bias = (conv_bias - mean) * scale + beta
    return scale, bias


def _prep_conv_block(p, hin, win):
    # 1x1 conv (CHW orientation) with BN folded.
    sc1, bias1 = _bn_fold(p["b1"], p["bn1_g"], p["bn1_b"], p["bn1_m"], p["bn1_v"])
    w1 = (p["w1"][:, :, 0, 0] * sc1[:, None]).astype(jnp.float32)      # (Cout, Cin)
    # 3x3 stride-2 conv: K-packed weight (9*Cin, Cout) with tap t = kh*3+kw.
    sc2, bias2 = _bn_fold(p["b2"], p["bn2_g"], p["bn2_b"], p["bn2_m"], p["bn2_v"])
    cout, cin2 = p["w2"].shape[0], p["w2"].shape[1]
    w2k = (jnp.transpose(p["w2"], (2, 3, 1, 0)).reshape(9, cin2, cout)
           * sc2[None, None, :]).reshape(9 * cin2, cout).astype(jnp.bfloat16)
    sel = jnp.asarray(_conv3x3_select_np(hin, win), jnp.bfloat16)      # exact 0/1
    return (w1, bias1.astype(jnp.float32), sel, w2k,
            bias2.reshape(1, -1).astype(jnp.float32))


def _prep_classifier(p, c2, num_classes):
    o1 = p["w1"].shape[0]                                              # 256
    # torch flatten of (B, C, 3, 3): feature index c*9 + s.  The kernel packs
    # the pooled features with lane index s*C + c, so permute accordingly.
    wfc1 = jnp.transpose(p["w1"].reshape(o1, c2, 9), (2, 1, 0)).reshape(9 * c2, o1)
    bfc1 = p["b1"].reshape(1, o1).astype(jnp.float32)
    wfc2 = jnp.zeros((o1, _NPAD), jnp.float32).at[:, :num_classes].set(p["w2"].T)
    bfc2 = jnp.zeros((1, _NPAD), jnp.float32).at[:, :num_classes].set(p["b2"][None, :])
    return (wfc1.astype(jnp.bfloat16), bfc1,
            wfc2.astype(jnp.bfloat16), bfc2)


def _pick_batch_tile(batch, cap=8):
    def _largest_divisor(n, c):
        c = max(1, min(n, c))
        for t in range(c, 0, -1):
            if n % t == 0:
                return t
        return 1
    tb = _largest_divisor(batch, cap)
    # Keep >= 2 grid steps when possible so a v7x chip can shard the batch
    # across its two TensorCores; on v5e/v6e (1 TC) this costs nothing here.
    if batch > 1 and batch // tb < 2:
        tb = _largest_divisor(batch, max(1, batch // 2))
    return tb


# ---------------------------------------------------------------------------
# Forward pass (matches SimpleCNN.forward, BatchNorm in eval mode)
# ---------------------------------------------------------------------------
def simple_cnn_forward(x_nchw, params):
    B, cin, H, W = x_nchw.shape
    HW = H * W
    # Lane-dense input slab: channels on sublanes, spatial (>=128) on lanes.
    x3d = x_nchw.reshape(B, cin, HW).astype(jnp.float32)

    w1a_1, b1a_1, s1, w1k_1, b1b_1 = _prep_conv_block(params["conv1"], H, W)
    b1a_col = b1a_1.reshape(-1, 1)
    H1, W1 = _conv_out_hw(H), _conv_out_hw(W)

    w1a_2, b1a_2, s2, w2k_2, b2b_2 = _prep_conv_block(params["conv2"], H1, W1)
    w2a = jnp.transpose(w1a_2).astype(jnp.bfloat16)          # (C1, C2) for batched matmul
    b2a_row = b1a_2.reshape(1, -1)
    H2, W2 = _conv_out_hw(H1), _conv_out_hw(W1)
    pool = jnp.asarray(_adaptive_pool_mat_np(H2, W2), jnp.float32)     # (9, H2*W2)

    cm1 = w1a_1.shape[0]           # 64
    cm2 = w2a.shape[1]             # 32
    c2o = w2k_2.shape[1]           # 32
    num_classes = params["classifier"]["w2"].shape[0]
    assert num_classes <= _NPAD
    wfc1, bfc1, wfc2, bfc2 = _prep_classifier(params["classifier"], c2o, num_classes)

    TB = _pick_batch_tile(B)
    G = B // TB

    def _resident(a):
        return pl.BlockSpec(a.shape, lambda i, _nd=a.ndim: (0,) * _nd)

    out3 = pl.pallas_call(
        _simplecnn_kernel,
        out_shape=jax.ShapeDtypeStruct((G, TB, _NPAD), jnp.float32),
        grid=(G,),
        in_specs=[
            pl.BlockSpec((TB, cin, HW), lambda i: (i, 0, 0)),
            _resident(w1a_1), _resident(b1a_col), _resident(s1),
            _resident(w1k_1), _resident(b1b_1),
            _resident(w2a), _resident(b2a_row), _resident(s2),
            _resident(w2k_2), _resident(b2b_2),
            _resident(pool), _resident(wfc1), _resident(bfc1),
            _resident(wfc2), _resident(bfc2),
        ],
        out_specs=pl.BlockSpec((1, TB, _NPAD), lambda i: (i, 0, 0)),
        scratch_shapes=[
            pltpu.VMEM((TB * H1 * W1, 9 * cm1), jnp.float32),   # block-1 patches
            pltpu.VMEM((TB * H2 * W2, 9 * cm2), jnp.float32),   # block-2 patches
            pltpu.VMEM((TB, 9 * c2o), jnp.float32),             # pooled + flattened
        ],
        compiler_params=pltpu.CompilerParams(dimension_semantics=("parallel",)),
    )(x3d, w1a_1, b1a_col, s1, w1k_1, b1b_1,
      w2a, b2a_row, s2, w2k_2, b2b_2,
      pool, wfc1, bfc1, wfc2, bfc2)

    return out3.reshape(B, _NPAD)[:, :num_classes]


# ---------------------------------------------------------------------------
# Pure-XLA reference (same math, no Pallas) for a correctness check.
# ---------------------------------------------------------------------------
def reference_forward(x_nchw, params, eps=1e-5):
    hp = lax.Precision.HIGHEST
    x = jnp.transpose(x_nchw, (0, 2, 3, 1)).astype(jnp.float32)     # NHWC

    def bn(y, g, b, m, v):
        return (y - m) / jnp.sqrt(v + eps) * g + b

    def block(y, p):
        w1 = jnp.transpose(p["w1"], (2, 3, 1, 0))
        y = lax.conv_general_dilated(
            y, w1, (1, 1), "VALID",
            dimension_numbers=("NHWC", "HWIO", "NHWC"), precision=hp) + p["b1"]
        y = jax.nn.relu(bn(y, p["bn1_g"], p["bn1_b"], p["bn1_m"], p["bn1_v"]))
        w2 = jnp.transpose(p["w2"], (2, 3, 1, 0))
        y = lax.conv_general_dilated(
            y, w2, (2, 2), ((1, 1), (1, 1)),
            dimension_numbers=("NHWC", "HWIO", "NHWC"), precision=hp) + p["b2"]
        return jax.nn.relu(bn(y, p["bn2_g"], p["bn2_b"], p["bn2_m"], p["bn2_v"]))

    x = block(x, params["conv1"])
    x = block(x, params["conv2"])

    B, H, W, C = x.shape
    rows = []
    for i in range(3):
        hs, he = (i * H) // 3, -(-((i + 1) * H) // 3)
        cols = []
        for j in range(3):
            ws, we = (j * W) // 3, -(-((j + 1) * W) // 3)
            cols.append(jnp.mean(x[:, hs:he, ws:we, :], axis=(1, 2)))
        rows.append(jnp.stack(cols, axis=1))
    pooled = jnp.stack(rows, axis=1)                                # (B, 3, 3, C)
    xf = jnp.transpose(pooled, (0, 3, 1, 2)).reshape(B, -1)         # NCHW flatten

    cp = params["classifier"]
    h = jax.nn.relu(jnp.dot(xf, cp["w1"].T, precision=hp) + cp["b1"])
    return jnp.dot(h, cp["w2"].T, precision=hp) + cp["b2"]


# ---------------------------------------------------------------------------
# Deterministic parameter init (torch-style shapes)
# ---------------------------------------------------------------------------
def init_params(key, in_channel=1, num_classes=10):
    ks = iter(jax.random.split(key, 32))

    def conv_block_params(cin, cout):
        return {
            "w1": 0.1 * jax.random.normal(next(ks), (cout, cin, 1, 1), jnp.float32),
            "b1": 0.1 * jax.random.normal(next(ks), (cout,), jnp.float32),
            "bn1_g": 1.0 + 0.1 * jax.random.normal(next(ks), (cout,), jnp.float32),
            "bn1_b": 0.1 * jax.random.normal(next(ks), (cout,), jnp.float32),
            "bn1_m": 0.1 * jax.random.normal(next(ks), (cout,), jnp.float32),
            "bn1_v": 1.0 + jnp.abs(0.1 * jax.random.normal(next(ks), (cout,), jnp.float32)),
            "w2": 0.05 * jax.random.normal(next(ks), (cout, cout, 3, 3), jnp.float32),
            "b2": 0.1 * jax.random.normal(next(ks), (cout,), jnp.float32),
            "bn2_g": 1.0 + 0.1 * jax.random.normal(next(ks), (cout,), jnp.float32),
            "bn2_b": 0.1 * jax.random.normal(next(ks), (cout,), jnp.float32),
            "bn2_m": 0.1 * jax.random.normal(next(ks), (cout,), jnp.float32),
            "bn2_v": 1.0 + jnp.abs(0.1 * jax.random.normal(next(ks), (cout,), jnp.float32)),
        }

    return {
        "conv1": conv_block_params(in_channel, 64),
        "conv2": conv_block_params(64, 32),
        "classifier": {
            "w1": 0.05 * jax.random.normal(next(ks), (256, 32 * 3 * 3), jnp.float32),
            "b1": 0.1 * jax.random.normal(next(ks), (256,), jnp.float32),
            "w2": 0.05 * jax.random.normal(next(ks), (num_classes, 256), jnp.float32),
            "b2": 0.1 * jax.random.normal(next(ks), (num_classes,), jnp.float32),
        },
    }


if __name__ == "__main__":
    key = jax.random.PRNGKey(0)
    kx, kp = jax.random.split(key)
    x = jax.random.normal(kx, (4, 1, 16, 16), jnp.float32)   # NCHW, in_channel=1
    params = init_params(kp, in_channel=1, num_classes=10)

    out = jax.block_until_ready(jax.jit(simple_cnn_forward)(x, params))
    assert out.shape == (4, 10) and out.dtype == jnp.float32

    ref = jax.block_until_ready(jax.jit(reference_forward)(x, params))
    max_err = float(jnp.max(jnp.abs(out - ref)))
    tol = 2e-2 * (1.0 + float(jnp.max(jnp.abs(ref))))
    assert max_err < tol, f"kernel mismatch: max|diff|={max_err:.3e} (tol {tol:.3e})"

    print("KERNEL_OK")
</pallas_src>

<mosaic_0001>
module attributes {stable_mosaic.version = 11 : i64} {
  func.func @_simplecnn_kernel(%arg0: i32, %arg1: memref<2x1x256xf32, #tpu.memory_space<vmem>>, %arg2: memref<64x1xf32, #tpu.memory_space<vmem>>, %arg3: memref<64x1xf32, #tpu.memory_space<vmem>>, %arg4: memref<576x256xbf16, #tpu.memory_space<vmem>>, %arg5: memref<576x64xbf16, #tpu.memory_space<vmem>>, %arg6: memref<1x64xf32, #tpu.memory_space<vmem>>, %arg7: memref<64x32xbf16, #tpu.memory_space<vmem>>, %arg8: memref<1x32xf32, #tpu.memory_space<vmem>>, %arg9: memref<144x64xbf16, #tpu.memory_space<vmem>>, %arg10: memref<288x32xbf16, #tpu.memory_space<vmem>>, %arg11: memref<1x32xf32, #tpu.memory_space<vmem>>, %arg12: memref<9x16xf32, #tpu.memory_space<vmem>>, %arg13: memref<288x256xbf16, #tpu.memory_space<vmem>>, %arg14: memref<1x256xf32, #tpu.memory_space<vmem>>, %arg15: memref<256x128xbf16, #tpu.memory_space<vmem>>, %arg16: memref<1x128xf32, #tpu.memory_space<vmem>>, %arg17: memref<1x2x128xf32, #tpu.memory_space<vmem>>, %arg18: memref<128x576xf32, #tpu.memory_space<vmem>>, %arg19: memref<32x288xf32, #tpu.memory_space<vmem>>, %arg20: memref<2x288xf32, #tpu.memory_space<vmem>>) attributes {dimension_semantics = [#tpu.dimension_semantics<parallel>], iteration_bounds = array<i64: 2>, scalar_prefetch = 0 : i64, scratch_operands = 3 : i64, tpu.core_type = #tpu.core_type<tc>, window_params = [{transform_indices = @transform_0, window_bounds = array<i64: 2, 1, 256>}, {pipeline_mode = #tpu.pipeline_mode<synchronous>, transform_indices = @transform_1, window_bounds = array<i64: 64, 1>}, {pipeline_mode = #tpu.pipeline_mode<synchronous>, transform_indices = @transform_2, window_bounds = array<i64: 64, 1>}, {pipeline_mode = #tpu.pipeline_mode<synchronous>, transform_indices = @transform_3, window_bounds = array<i64: 576, 256>}, {pipeline_mode = #tpu.pipeline_mode<synchronous>, transform_indices = @transform_4, window_bounds = array<i64: 576, 64>}, {pipeline_mode = #tpu.pipeline_mode<synchronous>, transform_indices = @transform_5, window_bounds = array<i64: 1, 64>}, {pipeline_mode = #tpu.pipeline_mode<synchronous>, transform_indices = @transform_6, window_bounds = array<i64: 64, 32>}, {pipeline_mode = #tpu.pipeline_mode<synchronous>, transform_indices = @transform_7, window_bounds = array<i64: 1, 32>}, {pipeline_mode = #tpu.pipeline_mode<synchronous>, transform_indices = @transform_8, window_bounds = array<i64: 144, 64>}, {pipeline_mode = #tpu.pipeline_mode<synchronous>, transform_indices = @transform_9, window_bounds = array<i64: 288, 32>}, {pipeline_mode = #tpu.pipeline_mode<synchronous>, transform_indices = @transform_10, window_bounds = array<i64: 1, 32>}, {pipeline_mode = #tpu.pipeline_mode<synchronous>, transform_indices = @transform_11, window_bounds = array<i64: 9, 16>}, {pipeline_mode = #tpu.pipeline_mode<synchronous>, transform_indices = @transform_12, window_bounds = array<i64: 288, 256>}, {pipeline_mode = #tpu.pipeline_mode<synchronous>, transform_indices = @transform_13, window_bounds = array<i64: 1, 256>}, {pipeline_mode = #tpu.pipeline_mode<synchronous>, transform_indices = @transform_14, window_bounds = array<i64: 256, 128>}, {pipeline_mode = #tpu.pipeline_mode<synchronous>, transform_indices = @transform_15, window_bounds = array<i64: 1, 128>}, {transform_indices = @transform_16, window_bounds = array<i64: 1, 2, 128>}]} {
    %c0 = arith.constant 0 : index
    %c0_0 = arith.constant 0 : index
    %0 = vector.load %arg4[%c0, %c0_0] : memref<576x256xbf16, #tpu.memory_space<vmem>>, vector<576x256xbf16>
    %c0_1 = arith.constant 0 : index
    %c0_2 = arith.constant 0 : index
    %1 = vector.load %arg2[%c0_1, %c0_2] : memref<64x1xf32, #tpu.memory_space<vmem>>, vector<64x1xf32>
    %c0_3 = arith.constant 0 : index
    %c0_4 = arith.constant 0 : index
    %2 = vector.load %arg3[%c0_3, %c0_4] : memref<64x1xf32, #tpu.memory_space<vmem>>, vector<64x1xf32>
    %c0_5 = arith.constant 0 : index
    %c0_6 = arith.constant 0 : index
    %c0_7 = arith.constant 0 : index
    %3 = vector.load %arg1[%c0_5, %c0_6, %c0_7] : memref<2x1x256xf32, #tpu.memory_space<vmem>>, vector<1x1x256xf32>
    %4 = vector.shape_cast %3 : vector<1x1x256xf32> to vector<1x256xf32>
    %5 = vector.broadcast %4 : vector<1x256xf32> to vector<64x256xf32>
    %6 = vector.broadcast %1 : vector<64x1xf32> to vector<64x256xf32>
    %7 = arith.mulf %5, %6 : vector<64x256xf32>
    %8 = vector.broadcast %2 : vector<64x1xf32> to vector<64x256xf32>
    %9 = arith.addf %8, %7 : vector<64x256xf32>
    %cst = arith.constant 0.000000e+00 : f32
    %10 = vector.broadcast %cst : f32 to vector<64x256xf32>
    %11 = arith.maximumf %9, %10 : vector<64x256xf32>
    %12 = arith.truncf %11 : vector<64x256xf32> to vector<64x256xbf16>
    %cst_8 = arith.constant dense<0.000000e+00> : vector<576x64xf32>
    %13 = tpu.matmul %0, %12, %cst_8 {dimension_numbers = #tpu.dot_dimension_numbers<[1], [1], [0], [0], [0, 0, 1, 0], [], []>} : vector<576x256xbf16>, vector<64x256xbf16>, vector<576x64xf32> -> vector<576x64xf32>
    %14 = vector.extract_strided_slice %13 {offsets = [0, 0], sizes = [64, 64], strides = [1, 1]} : vector<576x64xf32> to vector<64x64xf32>
    %c0_9 = arith.constant 0 : index
    %c0_10 = arith.constant 0 : index
    %15 = vector.load %arg18[%c0_9, %c0_10] : memref<128x576xf32, #tpu.memory_space<vmem>>, vector<64x64xf32>
    tpu.vector_store %arg18[%c0_9, %c0_10], %14 {strides = array<i32>} : memref<128x576xf32, #tpu.memory_space<vmem>>, vector<64x64xf32>,
    %16 = vector.extract_strided_slice %13 {offsets = [64, 0], sizes = [64, 64], strides = [1, 1]} : vector<576x64xf32> to vector<64x64xf32>
    %c0_11 = arith.constant 0 : index
    %c64 = arith.constant 64 : index
    %17 = vector.load %arg18[%c0_11, %c64] : memref<128x576xf32, #tpu.memory_space<vmem>>, vector<64x64xf32>
    tpu.vector_store %arg18[%c0_11, %c64], %16 {strides = array<i32>} : memref<128x576xf32, #tpu.memory_space<vmem>>, vector<64x64xf32>,
    %18 = vector.extract_strided_slice %13 {offsets = [128, 0], sizes = [64, 64], strides = [1, 1]} : vector<576x64xf32> to vector<64x64xf32>
    %c0_12 = arith.constant 0 : index
    %c128 = arith.constant 128 : index
    %19 = vector.load %arg18[%c0_12, %c128] : memref<128x576xf32, #tpu.memory_space<vmem>>, vector<64x64xf32>
    tpu.vector_store %arg18[%c0_12, %c128], %18 {strides = array<i32>} : memref<128x576xf32, #tpu.memory_space<vmem>>, vector<64x64xf32>,
    %20 = vector.extract_strided_slice %13 {offsets = [192, 0], sizes = [64, 64], strides = [1, 1]} : vector<576x64xf32> to vector<64x64xf32>
    %c0_13 = arith.constant 0 : index
    %c192 = arith.constant 192 : index
    %21 = vector.load %arg18[%c0_13, %c192] : memref<128x576xf32, #tpu.memory_space<vmem>>, vector<64x64xf32>
    tpu.vector_store %arg18[%c0_13, %c192], %20 {strides = array<i32>} : memref<128x576xf32, #tpu.memory_space<vmem>>, vector<64x64xf32>,
    %22 = vector.extract_strided_slice %13 {offsets = [256, 0], sizes = [64, 64], strides = [1, 1]} : vector<576x64xf32> to vector<64x64xf32>
    %c0_14 = arith.constant 0 : index
    %c256 = arith.constant 256 : index
    %23 = vector.load %arg18[%c0_14, %c256] : memref<128x576xf32, #tpu.memory_space<vmem>>, vector<64x64xf32>
    tpu.vector_store %arg18[%c0_14, %c256], %22 {strides = array<i32>} : memref<128x576xf32, #tpu.memory_space<vmem>>, vector<64x64xf32>,
    %24 = vector.extract_strided_slice %13 {offsets = [320, 0], sizes = [64, 64], strides = [1, 1]} : vector<576x64xf32> to vector<64x64xf32>
    %c0_15 = arith.constant 0 : index
    %c320 = arith.constant 320 : index
    %25 = vector.load %arg18[%c0_15, %c320] : memref<128x576xf32, #tpu.memory_space<vmem>>, vector<64x64xf32>
    tpu.vector_store %arg18[%c0_15, %c320], %24 {strides = array<i32>} : memref<128x576xf32, #tpu.memory_space<vmem>>, vector<64x64xf32>,
    %26 = vector.extract_strided_slice %13 {offsets = [384, 0], sizes = [64, 64], strides = [1, 1]} : vector<576x64xf32> to vector<64x64xf32>
    %c0_16 = arith.constant 0 : index
    %c384 = arith.constant 384 : index
    %27 = vector.load %arg18[%c0_16, %c384] : memref<128x576xf32, #tpu.memory_space<vmem>>, vector<64x64xf32>
    tpu.vector_store %arg18[%c0_16, %c384], %26 {strides = array<i32>} : memref<128x576xf32, #tpu.memory_space<vmem>>, vector<64x64xf32>,
    %28 = vector.extract_strided_slice %13 {offsets = [448, 0], sizes = [64, 64], strides = [1, 1]} : vector<576x64xf32> to vector<64x64xf32>
    %c0_17 = arith.constant 0 : index
    %c448 = arith.constant 448 : index
    %29 = vector.load %arg18[%c0_17, %c448] : memref<128x576xf32, #tpu.memory_space<vmem>>, vector<64x64xf32>
    tpu.vector_store %arg18[%c0_17, %c448], %28 {strides = array<i32>} : memref<128x576xf32, #tpu.memory_space<vmem>>, vector<64x64xf32>,
    %30 = vector.extract_strided_slice %13 {offsets = [512, 0], sizes = [64, 64], strides = [1, 1]} : vector<576x64xf32> to vector<64x64xf32>
    %c0_18 = arith.constant 0 : index
    %c512 = arith.constant 512 : index
    %31 = vector.load %arg18[%c0_18, %c512] : memref<128x576xf32, #tpu.memory_space<vmem>>, vector<64x64xf32>
    tpu.vector_store %arg18[%c0_18, %c512], %30 {strides = array<i32>} : memref<128x576xf32, #tpu.memory_space<vmem>>, vector<64x64xf32>,
    %c1 = arith.constant 1 : index
    %c0_19 = arith.constant 0 : index
    %c0_20 = arith.constant 0 : index
    %32 = vector.load %arg1[%c1, %c0_19, %c0_20] : memref<2x1x256xf32, #tpu.memory_space<vmem>>, vector<1x1x256xf32>
    %33 = vector.shape_cast %32 : vector<1x1x256xf32> to vector<1x256xf32>
    %34 = vector.broadcast %33 : vector<1x256xf32> to vector<64x256xf32>
    %35 = vector.broadcast %1 : vector<64x1xf32> to vector<64x256xf32>
    %36 = arith.mulf %34, %35 : vector<64x256xf32>
    %37 = vector.broadcast %2 : vector<64x1xf32> to vector<64x256xf32>
    %38 = arith.addf %37, %36 : vector<64x256xf32>
    %cst_21 = arith.constant 0.000000e+00 : f32
    %39 = vector.broadcast %cst_21 : f32 to vector<64x256xf32>
    %40 = arith.maximumf %38, %39 : vector<64x256xf32>
    %41 = arith.truncf %40 : vector<64x256xf32> to vector<64x256xbf16>
    %cst_22 = arith.constant dense<0.000000e+00> : vector<576x64xf32>
    %42 = tpu.matmul %0, %41, %cst_22 {dimension_numbers = #tpu.dot_dimension_numbers<[1], [1], [0], [0], [0, 0, 1, 0], [], []>} : vector<576x256xbf16>, vector<64x256xbf16>, vector<576x64xf32> -> vector<576x64xf32>
    %43 = vector.extract_strided_slice %42 {offsets = [0, 0], sizes = [64, 64], strides = [1, 1]} : vector<576x64xf32> to vector<64x64xf32>
    %c64_23 = arith.constant 64 : index
    %c0_24 = arith.constant 0 : index
    %44 = vector.load %arg18[%c64_23, %c0_24] : memref<128x576xf32, #tpu.memory_space<vmem>>, vector<64x64xf32>
    tpu.vector_store %arg18[%c64_23, %c0_24], %43 {strides = array<i32>} : memref<128x576xf32, #tpu.memory_space<vmem>>, vector<64x64xf32>,
    %45 = vector.extract_strided_slice %42 {offsets = [64, 0], sizes = [64, 64], strides = [1, 1]} : vector<576x64xf32> to vector<64x64xf32>
    %c64_25 = arith.constant 64 : index
    %c64_26 = arith.constant 64 : index
    %46 = vector.load %arg18[%c64_25, %c64_26] : memref<128x576xf32, #tpu.memory_space<vmem>>, vector<64x64xf32>
    tpu.vector_store %arg18[%c64_25, %c64_26], %45 {strides = array<i32>} : memref<128x576xf32, #tpu.memory_space<vmem>>, vector<64x64xf32>,
    %47 = vector.extract_strided_slice %42 {offsets = [128, 0], sizes = [64, 64], strides = [1, 1]} : vector<576x64xf32> to vector<64x64xf32>
    %c64_27 = arith.constant 64 : index
    %c128_28 = arith.constant 128 : index
    %48 = vector.load %arg18[%c64_27, %c128_28] : memref<128x576xf32, #tpu.memory_space<vmem>>, vector<64x64xf32>
    tpu.vector_store %arg18[%c64_27, %c128_28], %47 {strides = array<i32>} : memref<128x576xf32, #tpu.memory_space<vmem>>, vector<64x64xf32>,
    %49 = vector.extract_strided_slice %42 {offsets = [192, 0], sizes = [64, 64], strides = [1, 1]} : vector<576x64xf32> to vector<64x64xf32>
    %c64_29 = arith.constant 64 : index
    %c192_30 = arith.constant 192 : index
    %50 = vector.load %arg18[%c64_29, %c192_30] : memref<128x576xf32, #tpu.memory_space<vmem>>, vector<64x64xf32>
    tpu.vector_store %arg18[%c64_29, %c192_30], %49 {strides = array<i32>} : memref<128x576xf32, #tpu.memory_space<vmem>>, vector<64x64xf32>,
    %51 = vector.extract_strided_slice %42 {offsets = [256, 0], sizes = [64, 64], strides = [1, 1]} : vector<576x64xf32> to vector<64x64xf32>
    %c64_31 = arith.constant 64 : index
    %c256_32 = arith.constant 256 : index
    %52 = vector.load %arg18[%c64_31, %c256_32] : memref<128x576xf32, #tpu.memory_space<vmem>>, vector<64x64xf32>
    tpu.vector_store %arg18[%c64_31, %c256_32], %51 {strides = array<i32>} : memref<128x576xf32, #tpu.memory_space<vmem>>, vector<64x64xf32>,
    %53 = vector.extract_strided_slice %42 {offsets = [320, 0], sizes = [64, 64], strides = [1, 1]} : vector<576x64xf32> to vector<64x64xf32>
    %c64_33 = arith.constant 64 : index
    %c320_34 = arith.constant 320 : index
    %54 = vector.load %arg18[%c64_33, %c320_34] : memref<128x576xf32, #tpu.memory_space<vmem>>, vector<64x64xf32>
    tpu.vector_store %arg18[%c64_33, %c320_34], %53 {strides = array<i32>} : memref<128x576xf32, #tpu.memory_space<vmem>>, vector<64x64xf32>,
    %55 = vector.extract_strided_slice %42 {offsets = [384, 0], sizes = [64, 64], strides = [1, 1]} : vector<576x64xf32> to vector<64x64xf32>
    %c64_35 = arith.constant 64 : index
    %c384_36 = arith.constant 384 : index
    %56 = vector.load %arg18[%c64_35, %c384_36] : memref<128x576xf32, #tpu.memory_space<vmem>>, vector<64x64xf32>
    tpu.vector_store %arg18[%c64_35, %c384_36], %55 {strides = array<i32>} : memref<128x576xf32, #tpu.memory_space<vmem>>, vector<64x64xf32>,
    %57 = vector.extract_strided_slice %42 {offsets = [448, 0], sizes = [64, 64], strides = [1, 1]} : vector<576x64xf32> to vector<64x64xf32>
    %c64_37 = arith.constant 64 : index
    %c448_38 = arith.constant 448 : index
    %58 = vector.load %arg18[%c64_37, %c448_38] : memref<128x576xf32, #tpu.memory_space<vmem>>, vector<64x64xf32>
    tpu.vector_store %arg18[%c64_37, %c448_38], %57 {strides = array<i32>} : memref<128x576xf32, #tpu.memory_space<vmem>>, vector<64x64xf32>,
    %59 = vector.extract_strided_slice %42 {offsets = [512, 0], sizes = [64, 64], strides = [1, 1]} : vector<576x64xf32> to vector<64x64xf32>
    %c64_39 = arith.constant 64 : index
    %c512_40 = arith.constant 512 : index
    %60 = vector.load %arg18[%c64_39, %c512_40] : memref<128x576xf32, #tpu.memory_space<vmem>>, vector<64x64xf32>
    tpu.vector_store %arg18[%c64_39, %c512_40], %59 {strides = array<i32>} : memref<128x576xf32, #tpu.memory_space<vmem>>, vector<64x64xf32>,
    %c0_41 = arith.constant 0 : index
    %c0_42 = arith.constant 0 : index
    %61 = vector.load %arg18[%c0_41, %c0_42] : memref<128x576xf32, #tpu.memory_space<vmem>>, vector<128x576xf32>
    %62 = arith.truncf %61 : vector<128x576xf32> to vector<128x576xbf16>
    %c0_43 = arith.constant 0 : index
    %c0_44 = arith.constant 0 : index
    %63 = vector.load %arg5[%c0_43, %c0_44] : memref<576x64xbf16, #tpu.memory_space<vmem>>, vector<576x64xbf16>
    %cst_45 = arith.constant dense<0.000000e+00> : vector<128x64xf32>
    %64 = tpu.matmul %62, %63, %cst_45 {dimension_numbers = #tpu.dot_dimension_numbers<[1], [0], [0], [1], [0, 0, 1, 1], [], []>} : vector<128x576xbf16>, vector<576x64xbf16>, vector<128x64xf32> -> vector<128x64xf32>
    %c0_46 = arith.constant 0 : index
    %c0_47 = arith.constant 0 : index
    %65 = vector.load %arg6[%c0_46, %c0_47] : memref<1x64xf32, #tpu.memory_space<vmem>>, vector<1x64xf32>
    %66 = vector.broadcast %65 : vector<1x64xf32> to vector<128x64xf32>
    %67 = arith.addf %64, %66 : vector<128x64xf32>
    %cst_48 = arith.constant 0.000000e+00 : f32
    %68 = vector.broadcast %cst_48 : f32 to vector<128x64xf32>
    %69 = arith.maximumf %67, %68 : vector<128x64xf32>
    %70 = arith.truncf %69 : vector<128x64xf32> to vector<128x64xbf16>
    %c0_49 = arith.constant 0 : index
    %c0_50 = arith.constant 0 : index
    %71 = vector.load %arg7[%c0_49, %c0_50] : memref<64x32xbf16, #tpu.memory_space<vmem>>, vector<64x32xbf16>
    %cst_51 = arith.constant dense<0.000000e+00> : vector<128x32xf32>
    %72 = tpu.matmul %70, %71, %cst_51 {dimension_numbers = #tpu.dot_dimension_numbers<[1], [0], [0], [1], [0, 0, 1, 1], [], []>} : vector<128x64xbf16>, vector<64x32xbf16>, vector<128x32xf32> -> vector<128x32xf32>
    %c0_52 = arith.constant 0 : index
    %c0_53 = arith.constant 0 : index
    %73 = vector.load %arg8[%c0_52, %c0_53] : memref<1x32xf32, #tpu.memory_space<vmem>>, vector<1x32xf32>
    %74 = vector.broadcast %73 : vector<1x32xf32> to vector<128x32xf32>
    %75 = arith.addf %72, %74 : vector<128x32xf32>
    %cst_54 = arith.constant 0.000000e+00 : f32
    %76 = vector.broadcast %cst_54 : f32 to vector<128x32xf32>
    %77 = arith.maximumf %75, %76 : vector<128x32xf32>
    %78 = arith.truncf %77 : vector<128x32xf32> to vector<128x32xbf16>
    %c0_55 = arith.constant 0 : index
    %c0_56 = arith.constant 0 : index
    %79 = vector.load %arg9[%c0_55, %c0_56] : memref<144x64xbf16, #tpu.memory_space<vmem>>, vector<144x64xbf16>
    %80 = vector.extract_strided_slice %78 {offsets = [0, 0], sizes = [64, 32], strides = [1, 1]} : vector<128x32xbf16> to vector<64x32xbf16>
    %cst_57 = arith.constant dense<0.000000e+00> : vector<144x32xf32>
    %81 = tpu.matmul %79, %80, %cst_57 {dimension_numbers = #tpu.dot_dimension_numbers<[1], [0], [0], [1], [0, 0, 1, 1], [], []>} : vector<144x64xbf16>, vector<64x32xbf16>, vector<144x32xf32> -> vector<144x32xf32>
    %82 = vector.extract_strided_slice %81 {offsets = [0, 0], sizes = [16, 32], strides = [1, 1]} : vector<144x32xf32> to vector<16x32xf32>
    %c0_58 = arith.constant 0 : index
    %c0_59 = arith.constant 0 : index
    %83 = vector.load %arg19[%c0_58, %c0_59] : memref<32x288xf32, #tpu.memory_space<vmem>>, vector<16x32xf32>
    tpu.vector_store %arg19[%c0_58, %c0_59], %82 {strides = array<i32>} : memref<32x288xf32, #tpu.memory_space<vmem>>, vector<16x32xf32>,
    %84 = vector.extract_strided_slice %81 {offsets = [16, 0], sizes = [16, 32], strides = [1, 1]} : vector<144x32xf32> to vector<16x32xf32>
    %c0_60 = arith.constant 0 : index
    %c32 = arith.constant 32 : index
    %85 = vector.load %arg19[%c0_60, %c32] : memref<32x288xf32, #tpu.memory_space<vmem>>, vector<16x32xf32>
    tpu.vector_store %arg19[%c0_60, %c32], %84 {strides = array<i32>} : memref<32x288xf32, #tpu.memory_space<vmem>>, vector<16x32xf32>,
    %86 = vector.extract_strided_slice %81 {offsets = [32, 0], sizes = [16, 32], strides = [1, 1]} : vector<144x32xf32> to vector<16x32xf32>
    %c0_61 = arith.constant 0 : index
    %c64_62 = arith.constant 64 : index
    %87 = vector.load %arg19[%c0_61, %c64_62] : memref<32x288xf32, #tpu.memory_space<vmem>>, vector<16x32xf32>
    tpu.vector_store %arg19[%c0_61, %c64_62], %86 {strides = array<i32>} : memref<32x288xf32, #tpu.memory_space<vmem>>, vector<16x32xf32>,
    %88 = vector.extract_strided_slice %81 {offsets = [48, 0], sizes = [16, 32], strides = [1, 1]} : vector<144x32xf32> to vector<16x32xf32>
    %c0_63 = arith.constant 0 : index
    %c96 = arith.constant 96 : index
    %89 = vector.load %arg19[%c0_63, %c96] : memref<32x288xf32, #tpu.memory_space<vmem>>, vector<16x32xf32>
    tpu.vector_store %arg19[%c0_63, %c96], %88 {strides = array<i32>} : memref<32x288xf32, #tpu.memory_space<vmem>>, vector<16x32xf32>,
    %90 = vector.extract_strided_slice %81 {offsets = [64, 0], sizes = [16, 32], strides = [1, 1]} : vector<144x32xf32> to vector<16x32xf32>
    %c0_64 = arith.constant 0 : index
    %c128_65 = arith.constant 128 : index
    %91 = vector.load %arg19[%c0_64, %c128_65] : memref<32x288xf32, #tpu.memory_space<vmem>>, vector<16x32xf32>
    tpu.vector_store %arg19[%c0_64, %c128_65], %90 {strides = array<i32>} : memref<32x288xf32, #tpu.memory_space<vmem>>, vector<16x32xf32>,
    %92 = vector.extract_strided_slice %81 {offsets = [80, 0], sizes = [16, 32], strides = [1, 1]} : vector<144x32xf32> to vector<16x32xf32>
    %c0_66 = arith.constant 0 : index
    %c160 = arith.constant 160 : index
    %93 = vector.load %arg19[%c0_66, %c160] : memref<32x288xf32, #tpu.memory_space<vmem>>, vector<16x32xf32>
    tpu.vector_store %arg19[%c0_66, %c160], %92 {strides = array<i32>} : memref<32x288xf32, #tpu.memory_space<vmem>>, vector<16x32xf32>,
    %94 = vector.extract_strided_slice %81 {offsets = [96, 0], sizes = [16, 32], strides = [1, 1]} : vector<144x32xf32> to vector<16x32xf32>
    %c0_67 = arith.constant 0 : index
    %c192_68 = arith.constant 192 : index
    %95 = vector.load %arg19[%c0_67, %c192_68] : memref<32x288xf32, #tpu.memory_space<vmem>>, vector<16x32xf32>
    tpu.vector_store %arg19[%c0_67, %c192_68], %94 {strides = array<i32>} : memref<32x288xf32, #tpu.memory_space<vmem>>, vector<16x32xf32>,
    %96 = vector.extract_strided_slice %81 {offsets = [112, 0], sizes = [16, 32], strides = [1, 1]} : vector<144x32xf32> to vector<16x32xf32>
    %c0_69 = arith.constant 0 : index
    %c224 = arith.constant 224 : index
    %97 = vector.load %arg19[%c0_69, %c224] : memref<32x288xf32, #tpu.memory_space<vmem>>, vector<16x32xf32>
    tpu.vector_store %arg19[%c0_69, %c224], %96 {strides = array<i32>} : memref<32x288xf32, #tpu.memory_space<vmem>>, vector<16x32xf32>,
    %98 = vector.extract_strided_slice %81 {offsets = [128, 0], sizes = [16, 32], strides = [1, 1]} : vector<144x32xf32> to vector<16x32xf32>
    %c0_70 = arith.constant 0 : index
    %c256_71 = arith.constant 256 : index
    %99 = vector.load %arg19[%c0_70, %c256_71] : memref<32x288xf32, #tpu.memory_space<vmem>>, vector<16x32xf32>
    tpu.vector_store %arg19[%c0_70, %c256_71], %98 {strides = array<i32>} : memref<32x288xf32, #tpu.memory_space<vmem>>, vector<16x32xf32>,
    %100 = vector.extract_strided_slice %78 {offsets = [64, 0], sizes = [64, 32], strides = [1, 1]} : vector<128x32xbf16> to vector<64x32xbf16>
    %cst_72 = arith.constant dense<0.000000e+00> : vector<144x32xf32>
    %101 = tpu.matmul %79, %100, %cst_72 {dimension_numbers = #tpu.dot_dimension_numbers<[1], [0], [0], [1], [0, 0, 1, 1], [], []>} : vector<144x64xbf16>, vector<64x32xbf16>, vector<144x32xf32> -> vector<144x32xf32>
    %102 = vector.extract_strided_slice %101 {offsets = [0, 0], sizes = [16, 32], strides = [1, 1]} : vector<144x32xf32> to vector<16x32xf32>
    %c16 = arith.constant 16 : index
    %c0_73 = arith.constant 0 : index
    %103 = vector.load %arg19[%c16, %c0_73] : memref<32x288xf32, #tpu.memory_space<vmem>>, vector<16x32xf32>
    tpu.vector_store %arg19[%c16, %c0_73], %102 {strides = array<i32>} : memref<32x288xf32, #tpu.memory_space<vmem>>, vector<16x32xf32>,
    %104 = vector.extract_strided_slice %101 {offsets = [16, 0], sizes = [16, 32], strides = [1, 1]} : vector<144x32xf32> to vector<16x32xf32>
    %c16_74 = arith.constant 16 : index
    %c32_75 = arith.constant 32 : index
    %105 = vector.load %arg19[%c16_74, %c32_75] : memref<32x288xf32, #tpu.memory_space<vmem>>, vector<16x32xf32>
    tpu.vector_store %arg19[%c16_74, %c32_75], %104 {strides = array<i32>} : memref<32x288xf32, #tpu.memory_space<vmem>>, vector<16x32xf32>,
    %106 = vector.extract_strided_slice %101 {offsets = [32, 0], sizes = [16, 32], strides = [1, 1]} : vector<144x32xf32> to vector<16x32xf32>
    %c16_76 = arith.constant 16 : index
    %c64_77 = arith.constant 64 : index
    %107 = vector.load %arg19[%c16_76, %c64_77] : memref<32x288xf32, #tpu.memory_space<vmem>>, vector<16x32xf32>
    tpu.vector_store %arg19[%c16_76, %c64_77], %106 {strides = array<i32>} : memref<32x288xf32, #tpu.memory_space<vmem>>, vector<16x32xf32>,
    %108 = vector.extract_strided_slice %101 {offsets = [48, 0], sizes = [16, 32], strides = [1, 1]} : vector<144x32xf32> to vector<16x32xf32>
    %c16_78 = arith.constant 16 : index
    %c96_79 = arith.constant 96 : index
    %109 = vector.load %arg19[%c16_78, %c96_79] : memref<32x288xf32, #tpu.memory_space<vmem>>, vector<16x32xf32>
    tpu.vector_store %arg19[%c16_78, %c96_79], %108 {strides = array<i32>} : memref<32x288xf32, #tpu.memory_space<vmem>>, vector<16x32xf32>,
    %110 = vector.extract_strided_slice %101 {offsets = [64, 0], sizes = [16, 32], strides = [1, 1]} : vector<144x32xf32> to vector<16x32xf32>
    %c16_80 = arith.constant 16 : index
    %c128_81 = arith.constant 128 : index
    %111 = vector.load %arg19[%c16_80, %c128_81] : memref<32x288xf32, #tpu.memory_space<vmem>>, vector<16x32xf32>
    tpu.vector_store %arg19[%c16_80, %c128_81], %110 {strides = array<i32>} : memref<32x288xf32, #tpu.memory_space<vmem>>, vector<16x32xf32>,
    %112 = vector.extract_strided_slice %101 {offsets = [80, 0], sizes = [16, 32], strides = [1, 1]} : vector<144x32xf32> to vector<16x32xf32>
    %c16_82 = arith.constant 16 : index
    %c160_83 = arith.constant 160 : index
    %113 = vector.load %arg19[%c16_82, %c160_83] : memref<32x288xf32, #tpu.memory_space<vmem>>, vector<16x32xf32>
    tpu.vector_store %arg19[%c16_82, %c160_83], %112 {strides = array<i32>} : memref<32x288xf32, #tpu.memory_space<vmem>>, vector<16x32xf32>,
    %114 = vector.extract_strided_slice %101 {offsets = [96, 0], sizes = [16, 32], strides = [1, 1]} : vector<144x32xf32> to vector<16x32xf32>
    %c16_84 = arith.constant 16 : index
    %c192_85 = arith.constant 192 : index
    %115 = vector.load %arg19[%c16_84, %c192_85] : memref<32x288xf32, #tpu.memory_space<vmem>>, vector<16x32xf32>
    tpu.vector_store %arg19[%c16_84, %c192_85], %114 {strides = array<i32>} : memref<32x288xf32, #tpu.memory_space<vmem>>, vector<16x32xf32>,
    %116 = vector.extract_strided_slice %101 {offsets = [112, 0], sizes = [16, 32], strides = [1, 1]} : vector<144x32xf32> to vector<16x32xf32>
    %c16_86 = arith.constant 16 : index
    %c224_87 = arith.constant 224 : index
    %117 = vector.load %arg19[%c16_86, %c224_87] : memref<32x288xf32, #tpu.memory_space<vmem>>, vector<16x32xf32>
    tpu.vector_store %arg19[%c16_86, %c224_87], %116 {strides = array<i32>} : memref<32x288xf32, #tpu.memory_space<vmem>>, vector<16x32xf32>,
    %118 = vector.extract_strided_slice %101 {offsets = [128, 0], sizes = [16, 32], strides = [1, 1]} : vector<144x32xf32> to vector<16x32xf32>
    %c16_88 = arith.constant 16 : index
    %c256_89 = arith.constant 256 : index
    %119 = vector.load %arg19[%c16_88, %c256_89] : memref<32x288xf32, #tpu.memory_space<vmem>>, vector<16x32xf32>
    tpu.vector_store %arg19[%c16_88, %c256_89], %118 {strides = array<i32>} : memref<32x288xf32, #tpu.memory_space<vmem>>, vector<16x32xf32>,
    %c0_90 = arith.constant 0 : index
    %c0_91 = arith.constant 0 : index
    %120 = vector.load %arg19[%c0_90, %c0_91] : memref<32x288xf32, #tpu.memory_space<vmem>>, vector<32x288xf32>
    %121 = arith.truncf %120 : vector<32x288xf32> to vector<32x288xbf16>
    %c0_92 = arith.constant 0 : index
    %c0_93 = arith.constant 0 : index
    %122 = vector.load %arg10[%c0_92, %c0_93] : memref<288x32xbf16, #tpu.memory_space<vmem>>, vector<288x32xbf16>
    %cst_94 = arith.constant dense<0.000000e+00> : vector<32x32xf32>
    %123 = tpu.matmul %121, %122, %cst_94 {dimension_numbers = #tpu.dot_dimension_numbers<[1], [0], [0], [1], [0, 0, 1, 1], [], []>} : vector<32x288xbf16>, vector<288x32xbf16>, vector<32x32xf32> -> vector<32x32xf32>
    %c0_95 = arith.constant 0 : index
    %c0_96 = arith.constant 0 : index
    %124 = vector.load %arg11[%c0_95, %c0_96] : memref<1x32xf32, #tpu.memory_space<vmem>>, vector<1x32xf32>
    %125 = vector.broadcast %124 : vector<1x32xf32> to vector<32x32xf32>
    %126 = arith.addf %123, %125 : vector<32x32xf32>
    %cst_97 = arith.constant 0.000000e+00 : f32
    %127 = vector.broadcast %cst_97 : f32 to vector<32x32xf32>
    %128 = arith.maximumf %126, %127 : vector<32x32xf32>
    %c0_98 = arith.constant 0 : index
    %c0_99 = arith.constant 0 : index
    %129 = vector.load %arg12[%c0_98, %c0_99] : memref<9x16xf32, #tpu.memory_space<vmem>>, vector<9x16xf32>
    %130 = vector.extract_strided_slice %128 {offsets = [0, 0], sizes = [16, 32], strides = [1, 1]} : vector<32x32xf32> to vector<16x32xf32>
    %cst_100 = arith.constant dense<0.000000e+00> : vector<9x32xf32>
    %131 = tpu.matmul %129, %130, %cst_100 {dimension_numbers = #tpu.dot_dimension_numbers<[1], [0], [0], [1], [0, 0, 1, 1], [], []>} : vector<9x16xf32>, vector<16x32xf32>, vector<9x32xf32> -> vector<9x32xf32>
    %132 = vector.extract_strided_slice %131 {offsets = [0, 0], sizes = [1, 32], strides = [1, 1]} : vector<9x32xf32> to vector<1x32xf32>
    %c0_101 = arith.constant 0 : index
    %c0_102 = arith.constant 0 : index
    %133 = vector.load %arg20[%c0_101, %c0_102] : memref<2x288xf32, #tpu.memory_space<vmem>>, vector<1x32xf32>
    tpu.vector_store %arg20[%c0_101, %c0_102], %132 {strides = array<i32>} : memref<2x288xf32, #tpu.memory_space<vmem>>, vector<1x32xf32>,
    %134 = vector.extract_strided_slice %131 {offsets = [1, 0], sizes = [1, 32], strides = [1, 1]} : vector<9x32xf32> to vector<1x32xf32>
    %c0_103 = arith.constant 0 : index
    %c32_104 = arith.constant 32 : index
    %135 = vector.load %arg20[%c0_103, %c32_104] : memref<2x288xf32, #tpu.memory_space<vmem>>, vector<1x32xf32>
    tpu.vector_store %arg20[%c0_103, %c32_104], %134 {strides = array<i32>} : memref<2x288xf32, #tpu.memory_space<vmem>>, vector<1x32xf32>,
    %136 = vector.extract_strided_slice %131 {offsets = [2, 0], sizes = [1, 32], strides = [1, 1]} : vector<9x32xf32> to vector<1x32xf32>
    %c0_105 = arith.constant 0 : index
    %c64_106 = arith.constant 64 : index
    %137 = vector.load %arg20[%c0_105, %c64_106] : memref<2x288xf32, #tpu.memory_space<vmem>>, vector<1x32xf32>
    tpu.vector_store %arg20[%c0_105, %c64_106], %136 {strides = array<i32>} : memref<2x288xf32, #tpu.memory_space<vmem>>, vector<1x32xf32>,
    %138 = vector.extract_strided_slice %131 {offsets = [3, 0], sizes = [1, 32], strides = [1, 1]} : vector<9x32xf32> to vector<1x32xf32>
    %c0_107 = arith.constant 0 : index
    %c96_108 = arith.constant 96 : index
    %139 = vector.load %arg20[%c0_107, %c96_108] : memref<2x288xf32, #tpu.memory_space<vmem>>, vector<1x32xf32>
    tpu.vector_store %arg20[%c0_107, %c96_108], %138 {strides = array<i32>} : memref<2x288xf32, #tpu.memory_space<vmem>>, vector<1x32xf32>,
    %140 = vector.extract_strided_slice %131 {offsets = [4, 0], sizes = [1, 32], strides = [1, 1]} : vector<9x32xf32> to vector<1x32xf32>
    %c0_109 = arith.constant 0 : index
    %c128_110 = arith.constant 128 : index
    %141 = vector.load %arg20[%c0_109, %c128_110] : memref<2x288xf32, #tpu.memory_space<vmem>>, vector<1x32xf32>
    tpu.vector_store %arg20[%c0_109, %c128_110], %140 {strides = array<i32>} : memref<2x288xf32, #tpu.memory_space<vmem>>, vector<1x32xf32>,
    %142 = vector.extract_strided_slice %131 {offsets = [5, 0], sizes = [1, 32], strides = [1, 1]} : vector<9x32xf32> to vector<1x32xf32>
    %c0_111 = arith.constant 0 : index
    %c160_112 = arith.constant 160 : index
    %143 = vector.load %arg20[%c0_111, %c160_112] : memref<2x288xf32, #tpu.memory_space<vmem>>, vector<1x32xf32>
    tpu.vector_store %arg20[%c0_111, %c160_112], %142 {strides = array<i32>} : memref<2x288xf32, #tpu.memory_space<vmem>>, vector<1x32xf32>,
    %144 = vector.extract_strided_slice %131 {offsets = [6, 0], sizes = [1, 32], strides = [1, 1]} : vector<9x32xf32> to vector<1x32xf32>
    %c0_113 = arith.constant 0 : index
    %c192_114 = arith.constant 192 : index
    %145 = vector.load %arg20[%c0_113, %c192_114] : memref<2x288xf32, #tpu.memory_space<vmem>>, vector<1x32xf32>
    tpu.vector_store %arg20[%c0_113, %c192_114], %144 {strides = array<i32>} : memref<2x288xf32, #tpu.memory_space<vmem>>, vector<1x32xf32>,
    %146 = vector.extract_strided_slice %131 {offsets = [7, 0], sizes = [1, 32], strides = [1, 1]} : vector<9x32xf32> to vector<1x32xf32>
    %c0_115 = arith.constant 0 : index
    %c224_116 = arith.constant 224 : index
    %147 = vector.load %arg20[%c0_115, %c224_116] : memref<2x288xf32, #tpu.memory_space<vmem>>, vector<1x32xf32>
    tpu.vector_store %arg20[%c0_115, %c224_116], %146 {strides = array<i32>} : memref<2x288xf32, #tpu.memory_space<vmem>>, vector<1x32xf32>,
    %148 = vector.extract_strided_slice %131 {offsets = [8, 0], sizes = [1, 32], strides = [1, 1]} : vector<9x32xf32> to vector<1x32xf32>
    %c0_117 = arith.constant 0 : index
    %c256_118 = arith.constant 256 : index
    %149 = vector.load %arg20[%c0_117, %c256_118] : memref<2x288xf32, #tpu.memory_space<vmem>>, vector<1x32xf32>
    tpu.vector_store %arg20[%c0_117, %c256_118], %148 {strides = array<i32>} : memref<2x288xf32, #tpu.memory_space<vmem>>, vector<1x32xf32>,
    %150 = vector.extract_strided_slice %128 {offsets = [16, 0], sizes = [16, 32], strides = [1, 1]} : vector<32x32xf32> to vector<16x32xf32>
    %cst_119 = arith.constant dense<0.000000e+00> : vector<9x32xf32>
    %151 = tpu.matmul %129, %150, %cst_119 {dimension_numbers = #tpu.dot_dimension_numbers<[1], [0], [0], [1], [0, 0, 1, 1], [], []>} : vector<9x16xf32>, vector<16x32xf32>, vector<9x32xf32> -> vector<9x32xf32>
    %152 = vector.extract_strided_slice %151 {offsets = [0, 0], sizes = [1, 32], strides = [1, 1]} : vector<9x32xf32> to vector<1x32xf32>
    %c1_120 = arith.constant 1 : index
    %c0_121 = arith.constant 0 : index
    %153 = vector.load %arg20[%c1_120, %c0_121] : memref<2x288xf32, #tpu.memory_space<vmem>>, vector<1x32xf32>
    tpu.vector_store %arg20[%c1_120, %c0_121], %152 {strides = array<i32>} : memref<2x288xf32, #tpu.memory_space<vmem>>, vector<1x32xf32>,
    %154 = vector.extract_strided_slice %151 {offsets = [1, 0], sizes = [1, 32], strides = [1, 1]} : vector<9x32xf32> to vector<1x32xf32>
    %c1_122 = arith.constant 1 : index
    %c32_123 = arith.constant 32 : index
    %155 = vector.load %arg20[%c1_122, %c32_123] : memref<2x288xf32, #tpu.memory_space<vmem>>, vector<1x32xf32>
    tpu.vector_store %arg20[%c1_122, %c32_123], %154 {strides = array<i32>} : memref<2x288xf32, #tpu.memory_space<vmem>>, vector<1x32xf32>,
    %156 = vector.extract_strided_slice %151 {offsets = [2, 0], sizes = [1, 32], strides = [1, 1]} : vector<9x32xf32> to vector<1x32xf32>
    %c1_124 = arith.constant 1 : index
    %c64_125 = arith.constant 64 : index
    %157 = vector.load %arg20[%c1_124, %c64_125] : memref<2x288xf32, #tpu.memory_space<vmem>>, vector<1x32xf32>
    tpu.vector_store %arg20[%c1_124, %c64_125], %156 {strides = array<i32>} : memref<2x288xf32, #tpu.memory_space<vmem>>, vector<1x32xf32>,
    %158 = vector.extract_strided_slice %151 {offsets = [3, 0], sizes = [1, 32], strides = [1, 1]} : vector<9x32xf32> to vector<1x32xf32>
    %c1_126 = arith.constant 1 : index
    %c96_127 = arith.constant 96 : index
    %159 = vector.load %arg20[%c1_126, %c96_127] : memref<2x288xf32, #tpu.memory_space<vmem>>, vector<1x32xf32>
    tpu.vector_store %arg20[%c1_126, %c96_127], %158 {strides = array<i32>} : memref<2x288xf32, #tpu.memory_space<vmem>>, vector<1x32xf32>,
    %160 = vector.extract_strided_slice %151 {offsets = [4, 0], sizes = [1, 32], strides = [1, 1]} : vector<9x32xf32> to vector<1x32xf32>
    %c1_128 = arith.constant 1 : index
    %c128_129 = arith.constant 128 : index
    %161 = vector.load %arg20[%c1_128, %c128_129] : memref<2x288xf32, #tpu.memory_space<vmem>>, vector<1x32xf32>
    tpu.vector_store %arg20[%c1_128, %c128_129], %160 {strides = array<i32>} : memref<2x288xf32, #tpu.memory_space<vmem>>, vector<1x32xf32>,
    %162 = vector.extract_strided_slice %151 {offsets = [5, 0], sizes = [1, 32], strides = [1, 1]} : vector<9x32xf32> to vector<1x32xf32>
    %c1_130 = arith.constant 1 : index
    %c160_131 = arith.constant 160 : index
    %163 = vector.load %arg20[%c1_130, %c160_131] : memref<2x288xf32, #tpu.memory_space<vmem>>, vector<1x32xf32>
    tpu.vector_store %arg20[%c1_130, %c160_131], %162 {strides = array<i32>} : memref<2x288xf32, #tpu.memory_space<vmem>>, vector<1x32xf32>,
    %164 = vector.extract_strided_slice %151 {offsets = [6, 0], sizes = [1, 32], strides = [1, 1]} : vector<9x32xf32> to vector<1x32xf32>
    %c1_132 = arith.constant 1 : index
    %c192_133 = arith.constant 192 : index
    %165 = vector.load %arg20[%c1_132, %c192_133] : memref<2x288xf32, #tpu.memory_space<vmem>>, vector<1x32xf32>
    tpu.vector_store %arg20[%c1_132, %c192_133], %164 {strides = array<i32>} : memref<2x288xf32, #tpu.memory_space<vmem>>, vector<1x32xf32>,
    %166 = vector.extract_strided_slice %151 {offsets = [7, 0], sizes = [1, 32], strides = [1, 1]} : vector<9x32xf32> to vector<1x32xf32>
    %c1_134 = arith.constant 1 : index
    %c224_135 = arith.constant 224 : index
    %167 = vector.load %arg20[%c1_134, %c224_135] : memref<2x288xf32, #tpu.memory_space<vmem>>, vector<1x32xf32>
    tpu.vector_store %arg20[%c1_134, %c224_135], %166 {strides = array<i32>} : memref<2x288xf32, #tpu.memory_space<vmem>>, vector<1x32xf32>,
    %168 = vector.extract_strided_slice %151 {offsets = [8, 0], sizes = [1, 32], strides = [1, 1]} : vector<9x32xf32> to vector<1x32xf32>
    %c1_136 = arith.constant 1 : index
    %c256_137 = arith.constant 256 : index
    %169 = vector.load %arg20[%c1_136, %c256_137] : memref<2x288xf32, #tpu.memory_space<vmem>>, vector<1x32xf32>
    tpu.vector_store %arg20[%c1_136, %c256_137], %168 {strides = array<i32>} : memref<2x288xf32, #tpu.memory_space<vmem>>, vector<1x32xf32>,
    %c0_138 = arith.constant 0 : index
    %c0_139 = arith.constant 0 : index
    %170 = vector.load %arg20[%c0_138, %c0_139] : memref<2x288xf32, #tpu.memory_space<vmem>>, vector<2x288xf32>
    %171 = arith.truncf %170 : vector<2x288xf32> to vector<2x288xbf16>
    %c0_140 = arith.constant 0 : index
    %c0_141 = arith.constant 0 : index
    %172 = vector.load %arg13[%c0_140, %c0_141] : memref<288x256xbf16, #tpu.memory_space<vmem>>, vector<288x256xbf16>
    %cst_142 = arith.constant dense<0.000000e+00> : vector<2x256xf32>
    %173 = tpu.matmul %171, %172, %cst_142 {dimension_numbers = #tpu.dot_dimension_numbers<[1], [0], [0], [1], [0, 0, 1, 1], [], []>} : vector<2x288xbf16>, vector<288x256xbf16>, vector<2x256xf32> -> vector<2x256xf32>
    %c0_143 = arith.constant 0 : index
    %c0_144 = arith.constant 0 : index
    %174 = vector.load %arg14[%c0_143, %c0_144] : memref<1x256xf32, #tpu.memory_space<vmem>>, vector<1x256xf32>
    %175 = vector.broadcast %174 : vector<1x256xf32> to vector<2x256xf32>
    %176 = arith.addf %173, %175 : vector<2x256xf32>
    %cst_145 = arith.constant 0.000000e+00 : f32
    %177 = vector.broadcast %cst_145 : f32 to vector<2x256xf32>
    %178 = arith.maximumf %176, %177 : vector<2x256xf32>
    %179 = arith.truncf %178 : vector<2x256xf32> to vector<2x256xbf16>
    %c0_146 = arith.constant 0 : index
    %c0_147 = arith.constant 0 : index
    %180 = vector.load %arg15[%c0_146, %c0_147] : memref<256x128xbf16, #tpu.memory_space<vmem>>, vector<256x128xbf16>
    %cst_148 = arith.constant dense<0.000000e+00> : vector<2x128xf32>
    %181 = tpu.matmul %179, %180, %cst_148 {dimension_numbers = #tpu.dot_dimension_numbers<[1], [0], [0], [1], [0, 0, 1, 1], [], []>} : vector<2x256xbf16>, vector<256x128xbf16>, vector<2x128xf32> -> vector<2x128xf32>
    %c0_149 = arith.constant 0 : index
    %c0_150 = arith.constant 0 : index
    %182 = vector.load %arg16[%c0_149, %c0_150] : memref<1x128xf32, #tpu.memory_space<vmem>>, vector<1x128xf32>
    %183 = vector.broadcast %182 : vector<1x128xf32> to vector<2x128xf32>
    %184 = arith.addf %181, %183 : vector<2x128xf32>
    %c0_151 = arith.constant 0 : index
    %c0_152 = arith.constant 0 : index
    %c0_153 = arith.constant 0 : index
    %185 = vector.load %arg17[%c0_151, %c0_152, %c0_153] : memref<1x2x128xf32, #tpu.memory_space<vmem>>, vector<1x2x128xf32>
    %186 = vector.shape_cast %185 : vector<1x2x128xf32> to vector<2x128xf32>
    %187 = vector.shape_cast %184 : vector<2x128xf32> to vector<1x2x128xf32>
    tpu.vector_store %arg17[%c0_151, %c0_152, %c0_153], %187 {strides = array<i32>} : memref<1x2x128xf32, #tpu.memory_space<vmem>>, vector<1x2x128xf32>,
    return
  }
  func.func @transform_0(%arg0: i32) -> (i32, i32, i32) {
    %c0_i32 = arith.constant 0 : i32
    %c0_i32_0 = arith.constant 0 : i32
    %c0_i32_1 = arith.constant 0 : i32
    return %arg0, %c0_i32, %c0_i32_0 : i32, i32, i32
  }
  func.func @transform_1(%arg0: i32) -> (i32, i32) {
    %c0_i32 = arith.constant 0 : i32
    %c0_i32_0 = arith.constant 0 : i32
    %c0_i32_1 = arith.constant 0 : i32
    return %c0_i32, %c0_i32_0 : i32, i32
  }
  func.func @transform_2(%arg0: i32) -> (i32, i32) {
    %c0_i32 = arith.constant 0 : i32
    %c0_i32_0 = arith.constant 0 : i32
    %c0_i32_1 = arith.constant 0 : i32
    return %c0_i32, %c0_i32_0 : i32, i32
  }
  func.func @transform_3(%arg0: i32) -> (i32, i32) {
    %c0_i32 = arith.constant 0 : i32
    %c0_i32_0 = arith.constant 0 : i32
    %c0_i32_1 = arith.constant 0 : i32
    return %c0_i32, %c0_i32_0 : i32, i32
  }
  func.func @transform_4(%arg0: i32) -> (i32, i32) {
    %c0_i32 = arith.constant 0 : i32
    %c0_i32_0 = arith.constant 0 : i32
    %c0_i32_1 = arith.constant 0 : i32
    return %c0_i32, %c0_i32_0 : i32, i32
  }
  func.func @transform_5(%arg0: i32) -> (i32, i32) {
    %c0_i32 = arith.constant 0 : i32
    %c0_i32_0 = arith.constant 0 : i32
    %c0_i32_1 = arith.constant 0 : i32
    return %c0_i32, %c0_i32_0 : i32, i32
  }
  func.func @transform_6(%arg0: i32) -> (i32, i32) {
    %c0_i32 = arith.constant 0 : i32
    %c0_i32_0 = arith.constant 0 : i32
    %c0_i32_1 = arith.constant 0 : i32
    return %c0_i32, %c0_i32_0 : i32, i32
  }
  func.func @transform_7(%arg0: i32) -> (i32, i32) {
    %c0_i32 = arith.constant 0 : i32
    %c0_i32_0 = arith.constant 0 : i32
    %c0_i32_1 = arith.constant 0 : i32
    return %c0_i32, %c0_i32_0 : i32, i32
  }
  func.func @transform_8(%arg0: i32) -> (i32, i32) {
    %c0_i32 = arith.constant 0 : i32
    %c0_i32_0 = arith.constant 0 : i32
    %c0_i32_1 = arith.constant 0 : i32
    return %c0_i32, %c0_i32_0 : i32, i32
  }
  func.func @transform_9(%arg0: i32) -> (i32, i32) {
    %c0_i32 = arith.constant 0 : i32
    %c0_i32_0 = arith.constant 0 : i32
    %c0_i32_1 = arith.constant 0 : i32
    return %c0_i32, %c0_i32_0 : i32, i32
  }
  func.func @transform_10(%arg0: i32) -> (i32, i32) {
    %c0_i32 = arith.constant 0 : i32
    %c0_i32_0 = arith.constant 0 : i32
    %c0_i32_1 = arith.constant 0 : i32
    return %c0_i32, %c0_i32_0 : i32, i32
  }
  func.func @transform_11(%arg0: i32) -> (i32, i32) {
    %c0_i32 = arith.constant 0 : i32
    %c0_i32_0 = arith.constant 0 : i32
    %c0_i32_1 = arith.constant 0 : i32
    return %c0_i32, %c0_i32_0 : i32, i32
  }
  func.func @transform_12(%arg0: i32) -> (i32, i32) {
    %c0_i32 = arith.constant 0 : i32
    %c0_i32_0 = arith.constant 0 : i32
    %c0_i32_1 = arith.constant 0 : i32
    return %c0_i32, %c0_i32_0 : i32, i32
  }
  func.func @transform_13(%arg0: i32) -> (i32, i32) {
    %c0_i32 = arith.constant 0 : i32
    %c0_i32_0 = arith.constant 0 : i32
    %c0_i32_1 = arith.constant 0 : i32
    return %c0_i32, %c0_i32_0 : i32, i32
  }
  func.func @transform_14(%arg0: i32) -> (i32, i32) {
    %c0_i32 = arith.constant 0 : i32
    %c0_i32_0 = arith.constant 0 : i32
    %c0_i32_1 = arith.constant 0 : i32
    return %c0_i32, %c0_i32_0 : i32, i32
  }
  func.func @transform_15(%arg0: i32) -> (i32, i32) {
    %c0_i32 = arith.constant 0 : i32
    %c0_i32_0 = arith.constant 0 : i32
    %c0_i32_1 = arith.constant 0 : i32
    return %c0_i32, %c0_i32_0 : i32, i32
  }
  func.func @transform_16(%arg0: i32) -> (i32, i32, i32) {
    %c0_i32 = arith.constant 0 : i32
    %c0_i32_0 = arith.constant 0 : i32
    %c0_i32_1 = arith.constant 0 : i32
    return %arg0, %c0_i32, %c0_i32_0 : i32, i32, i32
  }
}

</mosaic_0001>

<llo_original>
// kernel: simple_cnn_forward.1
$region0: #{simple_cnn_forward.1}
  #allocation0 [shape = 'u32[]', space=smem, size = 0x4, offset = 0x4, fixed_abs, tag = 'smem constant byte address 0x4 - core index']
  #allocation1 [shape = 'u32[144,128]{1,0:T(1,128)}', space=vmem, size = 0x12000, scoped, tag = 'internal scratch']
  #allocation2 [shape = 'f32[128,576]{1,0:T(8,128)}', space=vmem, size = 0x50000, scoped, tag = 'scratch operand']
  #allocation3 [shape = 'f32[32,288]{1,0:T(8,128)}', space=vmem, size = 0xc000, scoped, tag = 'scratch operand']
  #allocation4 [shape = 'f32[2,288]{1,0:T(2,128)}', space=vmem, size = 0xc00, scoped, tag = 'scratch operand']
  %s0 = inlined_call_operand.vmem [shape: f32[4,1,256], index: 0, kind: input, shape index: {}]
  %s1 = inlined_call_operand.vmem [shape: f32[64,1], index: 1, kind: input, shape index: {}]
  %s2 = inlined_call_operand.vmem [shape: f32[64,1], index: 2, kind: input, shape index: {}]
  %s3 = inlined_call_operand.vmem [shape: bf16[576,256], index: 3, kind: input, shape index: {}]
  %s4 = inlined_call_operand.vmem [shape: bf16[576,64], index: 4, kind: input, shape index: {}]
  %s5 = inlined_call_operand.vmem [shape: f32[1,64], index: 5, kind: input, shape index: {}]
  %s6 = inlined_call_operand.vmem [shape: bf16[64,32], index: 6, kind: input, shape index: {}]
  %s7 = inlined_call_operand.vmem [shape: f32[1,32], index: 7, kind: input, shape index: {}]
  %s8 = inlined_call_operand.vmem [shape: bf16[144,64], index: 8, kind: input, shape index: {}]
  %s9 = inlined_call_operand.vmem [shape: bf16[288,32], index: 9, kind: input, shape index: {}]
  %s10 = inlined_call_operand.vmem [shape: f32[1,32], index: 10, kind: input, shape index: {}]
  %s11 = inlined_call_operand.vmem [shape: f32[9,16], index: 11, kind: input, shape index: {}]
  %s12 = inlined_call_operand.vmem [shape: bf16[288,256], index: 12, kind: input, shape index: {}]
  %s13 = inlined_call_operand.vmem [shape: f32[1,256], index: 13, kind: input, shape index: {}]
  %s14 = inlined_call_operand.vmem [shape: bf16[256,128], index: 14, kind: input, shape index: {}]
  %s15 = inlined_call_operand.vmem [shape: f32[1,128], index: 15, kind: input, shape index: {}]
  %s16 = inlined_call_operand.hbm [shape: f32[2,2,128], index: 16, kind: output, shape index: {}]
  %s17 = sld [smem:[#allocation0]]
  $region97: #{simple_cnn_forward.1} parent=0
    _
  %s19 = ssub.s32 1, %s17
  %s20 = scalar_select 0, %s19, %s17
  $region1: #{simple_cnn_forward.1} parent=0
    #allocation5 [shape = 'u8[2048]{0}', space=vmem, size = 0x800, scoped, tag = 'output window, operand 0']
    #allocation6 [shape = 's32[2]{0}', space=sflag, size = 0x8, scoped, tag = 'scoped memory for simple_cnn_forward.1']
    %21 = vsyncpa [#allocation6], 0
    %s22 = scalar_lea.sflag [#allocation6], 1
    %23 = vsyncpa %s22, 0
    loop: start=0, step=1, limit=4
    $region2: #{simple_cnn_forward.1} parent=1 // loop_pre_header
      _
    $region3: #{simple_cnn_forward.1} parent=1 // loop_header
      %s25 = sphi 0, %s29
      %p26 = scmp.ge.s32.totalorder %s25, 4
      %s35 = sphi 0, %s37
      %s38 = sphi 0, %s35
      %s39 = sphi 0, %s38
      %s55 = sphi 0, %s39
      %s59 = sphi 0, %s59
      %s61 = sphi 0, %s59
      %s62 = sphi 0, %s61
      %s76 = sphi 0, %s62
      %s80 = sphi 0, %s80
      %s82 = sphi 0, %s80
      %s83 = sphi 0, %s82
      %s97 = sphi 0, %s83
      %s101 = sphi 0, %s101
      %s103 = sphi 0, %s101
      %s104 = sphi 0, %s103
      %s118 = sphi 0, %s104
      %s122 = sphi 0, %s122
      %s124 = sphi 0, %s122
      %s125 = sphi 0, %s124
      %s139 = sphi 0, %s125
      %s143 = sphi 0, %s143
      %s145 = sphi 0, %s143
      %s146 = sphi 0, %s145
      %s160 = sphi 0, %s146
      %s164 = sphi 0, %s164
      %s166 = sphi 0, %s164
      %s167 = sphi 0, %s166
      %s181 = sphi 0, %s167
      %s185 = sphi 0, %s185
      %s187 = sphi 0, %s185
      %s188 = sphi 0, %s187
      %s202 = sphi 0, %s188
      %s206 = sphi 0, %s206
      %s208 = sphi 0, %s206
      %s209 = sphi 0, %s208
      %s223 = sphi 0, %s209
      %s227 = sphi 0, %s227
      %s229 = sphi 0, %s227
      %s230 = sphi 0, %s229
      %s244 = sphi 0, %s230
      %s248 = sphi 0, %s248
      %s250 = sphi 0, %s248
      %s251 = sphi 0, %s250
      %s265 = sphi 0, %s251
      %s269 = sphi 0, %s269
      %s271 = sphi 0, %s269
      %s272 = sphi 0, %s271
      %s286 = sphi 0, %s272
      %s290 = sphi 0, %s290
      %s292 = sphi 0, %s290
      %s293 = sphi 0, %s292
      %s307 = sphi 0, %s293
      %s311 = sphi 0, %s311
      %s313 = sphi 0, %s311
      %s314 = sphi 0, %s313
      %s328 = sphi 0, %s314
      %s332 = sphi 0, %s332
      %s334 = sphi 0, %s332
      %s335 = sphi 0, %s334
      %s349 = sphi 0, %s335
      %s353 = sphi 0, %s353
      %s355 = sphi 0, %s353
      %s356 = sphi 0, %s355
      %s370 = sphi 0, %s356
      %s376 = sphi 0, %s378
      %s379 = sphi 0, %s376
      %s380 = sphi 0, %s379
      %s396 = sphi 0, %s380
    $region4: #{simple_cnn_forward.1} parent=1 // loop_header_branch
      %28 = sbr.rel (%p26) target = $region8
    $region5: #{simple_cnn_forward.1} parent=1 // loop_body
      %s30 = ssub.s32 %s25, 1
      %s31 = ssub.s32 %s25, 2
      %s32 = sadd.s32 %s25, 1
      %s33 = ssub.s32 %s25, %s32
      %p34 = scmp.eq.s32.totalorder %s33, 0
      %s36 = sadd.s32 %s35, 1
      %s37 = scalar_select %p34, %s35, %s36
      %p40 = pneg %p34
      %p41 = scmp.eq.s32.totalorder %s25, 1
      %p42 = por %p40, %p41
      %p43 = scmp.ne.s32.totalorder %s35, %s38
      %p44 = scmp.eq.s32.totalorder %s25, 0
      %p45 = por %p43, %p44
      %p46 = scmp.ne.s32.totalorder %s35, %s38
      %p47 = scmp.eq.s32.totalorder %s30, 1
      %p48 = por %p46, %p47
      %p49 = scmp.ne.s32.totalorder %s38, %s39
      %p50 = scmp.eq.s32.totalorder %s30, 0
      %p51 = por %p49, %p50
      %p52 = scmp.ne.s32.totalorder %s38, %s39
      %p53 = scmp.eq.s32.totalorder %s31, 1
      %p54 = por %p52, %p53
      %p56 = scmp.ne.s32.totalorder %s39, %s55
      %p57 = scmp.eq.s32.totalorder %s31, 0
      %p58 = por %p56, %p57
      %s60 = sadd.s32 %s59, 1
      %p63 = scmp.eq.s32.totalorder %s25, 1
      %p64 = scmp.ne.s32.totalorder %s59, %s61
      %p65 = scmp.eq.s32.totalorder %s25, 0
      %p66 = por %p64, %p65
      %p67 = scmp.ne.s32.totalorder %s59, %s61
      %p68 = scmp.eq.s32.totalorder %s30, 1
      %p69 = por %p67, %p68
      %p70 = scmp.ne.s32.totalorder %s61, %s62
      %p71 = scmp.eq.s32.totalorder %s30, 0
      %p72 = por %p70, %p71
      %p73 = scmp.ne.s32.totalorder %s61, %s62
      %p74 = scmp.eq.s32.totalorder %s31, 1
      %p75 = por %p73, %p74
      %p77 = scmp.ne.s32.totalorder %s62, %s76
      %p78 = scmp.eq.s32.totalorder %s31, 0
      %p79 = por %p77, %p78
      %s81 = sadd.s32 %s80, 1
      %p84 = scmp.eq.s32.totalorder %s25, 1
      %p85 = scmp.ne.s32.totalorder %s80, %s82
      %p86 = scmp.eq.s32.totalorder %s25, 0
      %p87 = por %p85, %p86
      %p88 = scmp.ne.s32.totalorder %s80, %s82
      %p89 = scmp.eq.s32.totalorder %s30, 1
      %p90 = por %p88, %p89
      %p91 = scmp.ne.s32.totalorder %s82, %s83
      %p92 = scmp.eq.s32.totalorder %s30, 0
      %p93 = por %p91, %p92
      %p94 = scmp.ne.s32.totalorder %s82, %s83
      %p95 = scmp.eq.s32.totalorder %s31, 1
      %p96 = por %p94, %p95
      %p98 = scmp.ne.s32.totalorder %s83, %s97
      %p99 = scmp.eq.s32.totalorder %s31, 0
      %p100 = por %p98, %p99
      %s102 = sadd.s32 %s101, 1
      %p105 = scmp.eq.s32.totalorder %s25, 1
      %p106 = scmp.ne.s32.totalorder %s101, %s103
      %p107 = scmp.eq.s32.totalorder %s25, 0
      %p108 = por %p106, %p107
      %p109 = scmp.ne.s32.totalorder %s101, %s103
      %p110 = scmp.eq.s32.totalorder %s30, 1
      %p111 = por %p109, %p110
      %p112 = scmp.ne.s32.totalorder %s103, %s104
      %p113 = scmp.eq.s32.totalorder %s30, 0
      %p114 = por %p112, %p113
      %p115 = scmp.ne.s32.totalorder %s103, %s104
      %p116 = scmp.eq.s32.totalorder %s31, 1
      %p117 = por %p115, %p116
      %p119 = scmp.ne.s32.totalorder %s104, %s118
      %p120 = scmp.eq.s32.totalorder %s31, 0
      %p121 = por %p119, %p120
      %s123 = sadd.s32 %s122, 1
      %p126 = scmp.eq.s32.totalorder %s25, 1
      %p127 = scmp.ne.s32.totalorder %s122, %s124
      %p128 = scmp.eq.s32.totalorder %s25, 0
      %p129 = por %p127, %p128
      %p130 = scmp.ne.s32.totalorder %s122, %s124
      %p131 = scmp.eq.s32.totalorder %s30, 1
      %p132 = por %p130, %p131
      %p133 = scmp.ne.s32.totalorder %s124, %s125
      %p134 = scmp.eq.s32.totalorder %s30, 0
      %p135 = por %p133, %p134
      %p136 = scmp.ne.s32.totalorder %s124, %s125
      %p137 = scmp.eq.s32.totalorder %s31, 1
      %p138 = por %p136, %p137
      %p140 = scmp.ne.s32.totalorder %s125, %s139
      %p141 = scmp.eq.s32.totalorder %s31, 0
      %p142 = por %p140, %p141
      %s144 = sadd.s32 %s143, 1
      %p147 = scmp.eq.s32.totalorder %s25, 1
      %p148 = scmp.ne.s32.totalorder %s143, %s145
      %p149 = scmp.eq.s32.totalorder %s25, 0
      %p150 = por %p148, %p149
      %p151 = scmp.ne.s32.totalorder %s143, %s145
      %p152 = scmp.eq.s32.totalorder %s30, 1
      %p153 = por %p151, %p152
      %p154 = scmp.ne.s32.totalorder %s145, %s146
      %p155 = scmp.eq.s32.totalorder %s30, 0
      %p156 = por %p154, %p155
      %p157 = scmp.ne.s32.totalorder %s145, %s146
      %p158 = scmp.eq.s32.totalorder %s31, 1
      %p159 = por %p157, %p158
      %p161 = scmp.ne.s32.totalorder %s146, %s160
      %p162 = scmp.eq.s32.totalorder %s31, 0
      %p163 = por %p161, %p162
      %s165 = sadd.s32 %s164, 1
      %p168 = scmp.eq.s32.totalorder %s25, 1
      %p169 = scmp.ne.s32.totalorder %s164, %s166
      %p170 = scmp.eq.s32.totalorder %s25, 0
      %p171 = por %p169, %p170
      %p172 = scmp.ne.s32.totalorder %s164, %s166
      %p173 = scmp.eq.s32.totalorder %s30, 1
      %p174 = por %p172, %p173
      %p175 = scmp.ne.s32.totalorder %s166, %s167
      %p176 = scmp.eq.s32.totalorder %s30, 0
      %p177 = por %p175, %p176
      %p178 = scmp.ne.s32.totalorder %s166, %s167
      %p179 = scmp.eq.s32.totalorder %s31, 1
      %p180 = por %p178, %p179
      %p182 = scmp.ne.s32.totalorder %s167, %s181
      %p183 = scmp.eq.s32.totalorder %s31, 0
      %p184 = por %p182, %p183
      %s186 = sadd.s32 %s185, 1
      %p189 = scmp.eq.s32.totalorder %s25, 1
      %p190 = scmp.ne.s32.totalorder %s185, %s187
      %p191 = scmp.eq.s32.totalorder %s25, 0
      %p192 = por %p190, %p191
      %p193 = scmp.ne.s32.totalorder %s185, %s187
      %p194 = scmp.eq.s32.totalorder %s30, 1
      %p195 = por %p193, %p194
      %p196 = scmp.ne.s32.totalorder %s187, %s188
      %p197 = scmp.eq.s32.totalorder %s30, 0
      %p198 = por %p196, %p197
      %p199 = scmp.ne.s32.totalorder %s187, %s188
      %p200 = scmp.eq.s32.totalorder %s31, 1
      %p201 = por %p199, %p200
      %p203 = scmp.ne.s32.totalorder %s188, %s202
      %p204 = scmp.eq.s32.totalorder %s31, 0
      %p205 = por %p203, %p204
      %s207 = sadd.s32 %s206, 1
      %p210 = scmp.eq.s32.totalorder %s25, 1
      %p211 = scmp.ne.s32.totalorder %s206, %s208
      %p212 = scmp.eq.s32.totalorder %s25, 0
      %p213 = por %p211, %p212
      %p214 = scmp.ne.s32.totalorder %s206, %s208
      %p215 = scmp.eq.s32.totalorder %s30, 1
      %p216 = por %p214, %p215
      %p217 = scmp.ne.s32.totalorder %s208, %s209
      %p218 = scmp.eq.s32.totalorder %s30, 0
      %p219 = por %p217, %p218
      %p220 = scmp.ne.s32.totalorder %s208, %s209
      %p221 = scmp.eq.s32.totalorder %s31, 1
      %p222 = por %p220, %p221
      %p224 = scmp.ne.s32.totalorder %s209, %s223
      %p225 = scmp.eq.s32.totalorder %s31, 0
      %p226 = por %p224, %p225
      %s228 = sadd.s32 %s227, 1
      %p231 = scmp.eq.s32.totalorder %s25, 1
      %p232 = scmp.ne.s32.totalorder %s227, %s229
      %p233 = scmp.eq.s32.totalorder %s25, 0
      %p234 = por %p232, %p233
      %p235 = scmp.ne.s32.totalorder %s227, %s229
      %p236 = scmp.eq.s32.totalorder %s30, 1
      %p237 = por %p235, %p236
      %p238 = scmp.ne.s32.totalorder %s229, %s230
      %p239 = scmp.eq.s32.totalorder %s30, 0
      %p240 = por %p238, %p239
      %p241 = scmp.ne.s32.totalorder %s229, %s230
      %p242 = scmp.eq.s32.totalorder %s31, 1
      %p243 = por %p241, %p242
      %p245 = scmp.ne.s32.totalorder %s230, %s244
      %p246 = scmp.eq.s32.totalorder %s31, 0
      %p247 = por %p245, %p246
      %s249 = sadd.s32 %s248, 1
      %p252 = scmp.eq.s32.totalorder %s25, 1
      %p253 = scmp.ne.s32.totalorder %s248, %s250
      %p254 = scmp.eq.s32.totalorder %s25, 0
      %p255 = por %p253, %p254
      %p256 = scmp.ne.s32.totalorder %s248, %s250
      %p257 = scmp.eq.s32.totalorder %s30, 1
      %p258 = por %p256, %p257
      %p259 = scmp.ne.s32.totalorder %s250, %s251
      %p260 = scmp.eq.s32.totalorder %s30, 0
      %p261 = por %p259, %p260
      %p262 = scmp.ne.s32.totalorder %s250, %s251
      %p263 = scmp.eq.s32.totalorder %s31, 1
      %p264 = por %p262, %p263
      %p266 = scmp.ne.s32.totalorder %s251, %s265
      %p267 = scmp.eq.s32.totalorder %s31, 0
      %p268 = por %p266, %p267
      %s270 = sadd.s32 %s269, 1
      %p273 = scmp.eq.s32.totalorder %s25, 1
      %p274 = scmp.ne.s32.totalorder %s269, %s271
      %p275 = scmp.eq.s32.totalorder %s25, 0
      %p276 = por %p274, %p275
      %p277 = scmp.ne.s32.totalorder %s269, %s271
      %p278 = scmp.eq.s32.totalorder %s30, 1
      %p279 = por %p277, %p278
      %p280 = scmp.ne.s32.totalorder %s271, %s272
      %p281 = scmp.eq.s32.totalorder %s30, 0
      %p282 = por %p280, %p281
      %p283 = scmp.ne.s32.totalorder %s271, %s272
      %p284 = scmp.eq.s32.totalorder %s31, 1
      %p285 = por %p283, %p284
      %p287 = scmp.ne.s32.totalorder %s272, %s286
      %p288 = scmp.eq.s32.totalorder %s31, 0
      %p289 = por %p287, %p288
      %s291 = sadd.s32 %s290, 1
      %p294 = scmp.eq.s32.totalorder %s25, 1
      %p295 = scmp.ne.s32.totalorder %s290, %s292
      %p296 = scmp.eq.s32.totalorder %s25, 0
      %p297 = por %p295, %p296
      %p298 = scmp.ne.s32.totalorder %s290, %s292
      %p299 = scmp.eq.s32.totalorder %s30, 1
      %p300 = por %p298, %p299
      %p301 = scmp.ne.s32.totalorder %s292, %s293
      %p302 = scmp.eq.s32.totalorder %s30, 0
      %p303 = por %p301, %p302
      %p304 = scmp.ne.s32.totalorder %s292, %s293
      %p305 = scmp.eq.s32.totalorder %s31, 1
      %p306 = por %p304, %p305
      %p308 = scmp.ne.s32.totalorder %s293, %s307
      %p309 = scmp.eq.s32.totalorder %s31, 0
      %p310 = por %p308, %p309
      %s312 = sadd.s32 %s311, 1
      %p315 = scmp.eq.s32.totalorder %s25, 1
      %p316 = scmp.ne.s32.totalorder %s311, %s313
      %p317 = scmp.eq.s32.totalorder %s25, 0
      %p318 = por %p316, %p317
      %p319 = scmp.ne.s32.totalorder %s311, %s313
      %p320 = scmp.eq.s32.totalorder %s30, 1
      %p321 = por %p319, %p320
      %p322 = scmp.ne.s32.totalorder %s313, %s314
      %p323 = scmp.eq.s32.totalorder %s30, 0
      %p324 = por %p322, %p323
      %p325 = scmp.ne.s32.totalorder %s313, %s314
      %p326 = scmp.eq.s32.totalorder %s31, 1
      %p327 = por %p325, %p326
      %p329 = scmp.ne.s32.totalorder %s314, %s328
      %p330 = scmp.eq.s32.totalorder %s31, 0
      %p331 = por %p329, %p330
      %s333 = sadd.s32 %s332, 1
      %p336 = scmp.eq.s32.totalorder %s25, 1
      %p337 = scmp.ne.s32.totalorder %s332, %s334
      %p338 = scmp.eq.s32.totalorder %s25, 0
      %p339 = por %p337, %p338
      %p340 = scmp.ne.s32.totalorder %s332, %s334
      %p341 = scmp.eq.s32.totalorder %s30, 1
      %p342 = por %p340, %p341
      %p343 = scmp.ne.s32.totalorder %s334, %s335
      %p344 = scmp.eq.s32.totalorder %s30, 0
      %p345 = por %p343, %p344
      %p346 = scmp.ne.s32.totalorder %s334, %s335
      %p347 = scmp.eq.s32.totalorder %s31, 1
      %p348 = por %p346, %p347
      %p350 = scmp.ne.s32.totalorder %s335, %s349
      %p351 = scmp.eq.s32.totalorder %s31, 0
      %p352 = por %p350, %p351
      %s354 = sadd.s32 %s353, 1
      %p357 = scmp.eq.s32.totalorder %s25, 1
      %p358 = scmp.ne.s32.totalorder %s353, %s355
      %p359 = scmp.eq.s32.totalorder %s25, 0
      %p360 = por %p358, %p359
      %p361 = scmp.ne.s32.totalorder %s353, %s355
      %p362 = scmp.eq.s32.totalorder %s30, 1
      %p363 = por %p361, %p362
      %p364 = scmp.ne.s32.totalorder %s355, %s356
      %p365 = scmp.eq.s32.totalorder %s30, 0
      %p366 = por %p364, %p365
      %p367 = scmp.ne.s32.totalorder %s355, %s356
      %p368 = scmp.eq.s32.totalorder %s31, 1
      %p369 = por %p367, %p368
      %p371 = scmp.ne.s32.totalorder %s356, %s370
      %p372 = scmp.eq.s32.totalorder %s31, 0
      %p373 = por %p371, %p372
      %s374 = ssub.s32 %s25, %s32
      %p375 = scmp.eq.s32.totalorder %s374, 0
      %s377 = sadd.s32 %s376, 1
      %s378 = scalar_select %p375, %s376, %s377
      %p381 = pneg %p375
      %p382 = scmp.eq.s32.totalorder %s25, 1
      %p383 = por %p381, %p382
      %p384 = scmp.ne.s32.totalorder %s376, %s379
      %p385 = scmp.eq.s32.totalorder %s25, 0
      %p386 = por %p384, %p385
      %p387 = scmp.ne.s32.totalorder %s376, %s379
      %p388 = scmp.eq.s32.totalorder %s30, 1
      %p389 = por %p387, %p388
      %p390 = scmp.ne.s32.totalorder %s379, %s380
      %p391 = scmp.eq.s32.totalorder %s30, 0
      %p392 = por %p390, %p391
      %p393 = scmp.ne.s32.totalorder %s379, %s380
      %p394 = scmp.eq.s32.totalorder %s31, 1
      %p395 = por %p393, %p394
      %p397 = scmp.ne.s32.totalorder %s380, %s396
      %p398 = scmp.eq.s32.totalorder %s31, 0
      %p399 = por %p397, %p398
      %p400 = scmp.le.s32.totalorder 1, %s25
      %p401 = scmp.lt.s32.totalorder %s25, 3
      %p402 = pnand %p400, %p401
      %p403 = pneg %p402
      // Predicated region
      $region9: #{simple_cnn_forward.1} parent=5 // pred_check
        _
      $region10: #{simple_cnn_forward.1} parent=5 // pred_check_branch
        %405 = sbr.rel (%p402) target = $region12
      $region11: #{simple_cnn_forward.1} parent=5 // pred_region
        %s406 = ssub.s32 %s25, 1
        // Predicated region
        $region13: #{simple_cnn_forward.1} parent=11 // pred_check
          %p407 = pneg %p72
        $region14: #{simple_cnn_forward.1} parent=11 // pred_check_branch
          %409 = sbr.rel (%p407) target = $region16
        $region15: #{simple_cnn_forward.1} parent=11 // pred_region
          _
        $region16: #{simple_cnn_forward.1} parent=11 // pred_fallthru
          _
        // Predicated region
        $region17: #{simple_cnn_forward.1} parent=11 // pred_check
          %p410 = pneg %p93
        $region18: #{simple_cnn_forward.1} parent=11 // pred_check_branch
          %412 = sbr.rel (%p410) target = $region20
        $region19: #{simple_cnn_forward.1} parent=11 // pred_region
          _
        $region20: #{simple_cnn_forward.1} parent=11 // pred_fallthru
          _
        // Predicated region
        $region21: #{simple_cnn_forward.1} parent=11 // pred_check
          %p413 = pneg %p114
        $region22: #{simple_cnn_forward.1} parent=11 // pred_check_branch
          %415 = sbr.rel (%p413) target = $region24
        $region23: #{simple_cnn_forward.1} parent=11 // pred_region
          _
        $region24: #{simple_cnn_forward.1} parent=11 // pred_fallthru
          _
        // Predicated region
        $region25: #{simple_cnn_forward.1} parent=11 // pred_check
          %p416 = pneg %p135
        $region26: #{simple_cnn_forward.1} parent=11 // pred_check_branch
          %418 = sbr.rel (%p416) target = $region28
        $region27: #{simple_cnn_forward.1} parent=11 // pred_region
          _
        $region28: #{simple_cnn_forward.1} parent=11 // pred_fallthru
          _
        // Predicated region
        $region29: #{simple_cnn_forward.1} parent=11 // pred_check
          %p419 = pneg %p156
        $region30: #{simple_cnn_forward.1} parent=11 // pred_check_branch
          %421 = sbr.rel (%p419) target = $region32
        $region31: #{simple_cnn_forward.1} parent=11 // pred_region
          _
        $region32: #{simple_cnn_forward.1} parent=11 // pred_fallthru
          _
        // Predicated region
        $region33: #{simple_cnn_forward.1} parent=11 // pred_check
          %p422 = pneg %p177
        $region34: #{simple_cnn_forward.1} parent=11 // pred_check_branch
          %424 = sbr.rel (%p422) target = $region36
        $region35: #{simple_cnn_forward.1} parent=11 // pred_region
          _
        $region36: #{simple_cnn_forward.1} parent=11 // pred_fallthru
          _
        // Predicated region
        $region37: #{simple_cnn_forward.1} parent=11 // pred_check
          %p425 = pneg %p198
        $region38: #{simple_cnn_forward.1} parent=11 // pred_check_branch
          %427 = sbr.rel (%p425) target = $region40
        $region39: #{simple_cnn_forward.1} parent=11 // pred_region
          _
        $region40: #{simple_cnn_forward.1} parent=11 // pred_fallthru
          _
        // Predicated region
        $region41: #{simple_cnn_forward.1} parent=11 // pred_check
          %p428 = pneg %p219
        $region42: #{simple_cnn_forward.1} parent=11 // pred_check_branch
          %430 = sbr.rel (%p428) target = $region44
        $region43: #{simple_cnn_forward.1} parent=11 // pred_region
          _
        $region44: #{simple_cnn_forward.1} parent=11 // pred_fallthru
          _
        // Predicated region
        $region45: #{simple_cnn_forward.1} parent=11 // pred_check
          %p431 = pneg %p240
        $region46: #{simple_cnn_forward.1} parent=11 // pred_check_branch
          %433 = sbr.rel (%p431) target = $region48
        $region47: #{simple_cnn_forward.1} parent=11 // pred_region
          _
        $region48: #{simple_cnn_forward.1} parent=11 // pred_fallthru
          _
        // Predicated region
        $region49: #{simple_cnn_forward.1} parent=11 // pred_check
          %p434 = pneg %p261
        $region50: #{simple_cnn_forward.1} parent=11 // pred_check_branch
          %436 = sbr.rel (%p434) target = $region52
        $region51: #{simple_cnn_forward.1} parent=11 // pred_region
          _
        $region52: #{simple_cnn_forward.1} parent=11 // pred_fallthru
          _
        // Predicated region
        $region53: #{simple_cnn_forward.1} parent=11 // pred_check
          %p437 = pneg %p282
        $region54: #{simple_cnn_forward.1} parent=11 // pred_check_branch
          %439 = sbr.rel (%p437) target = $region56
        $region55: #{simple_cnn_forward.1} parent=11 // pred_region
          _
        $region56: #{simple_cnn_forward.1} parent=11 // pred_fallthru
          _
        // Predicated region
        $region57: #{simple_cnn_forward.1} parent=11 // pred_check
          %p440 = pneg %p303
        $region58: #{simple_cnn_forward.1} parent=11 // pred_check_branch
          %442 = sbr.rel (%p440) target = $region60
        $region59: #{simple_cnn_forward.1} parent=11 // pred_region
          _
        $region60: #{simple_cnn_forward.1} parent=11 // pred_fallthru
          _
        // Predicated region
        $region61: #{simple_cnn_forward.1} parent=11 // pred_check
          %p443 = pneg %p324
        $region62: #{simple_cnn_forward.1} parent=11 // pred_check_branch
          %445 = sbr.rel (%p443) target = $region64
        $region63: #{simple_cnn_forward.1} parent=11 // pred_region
          _
        $region64: #{simple_cnn_forward.1} parent=11 // pred_fallthru
          _
        // Predicated region
        $region65: #{simple_cnn_forward.1} parent=11 // pred_check
          %p446 = pneg %p345
        $region66: #{simple_cnn_forward.1} parent=11 // pred_check_branch
          %448 = sbr.rel (%p446) target = $region68
        $region67: #{simple_cnn_forward.1} parent=11 // pred_region
          _
        $region68: #{simple_cnn_forward.1} parent=11 // pred_fallthru
          _
        // Predicated region
        $region69: #{simple_cnn_forward.1} parent=11 // pred_check
          %p449 = pneg %p366
        $region70: #{simple_cnn_forward.1} parent=11 // pred_check_branch
          %451 = sbr.rel (%p449) target = $region72
        $region71: #{simple_cnn_forward.1} parent=11 // pred_region
          _
        $region72: #{simple_cnn_forward.1} parent=11 // pred_fallthru
          _
      $region12: #{simple_cnn_forward.1} parent=5 // pred_fallthru
        _
      %p452 = scmp.lt.s32.totalorder %s25, 2
      // Predicated region
      $region73: #{simple_cnn_forward.1} parent=5 // pred_check
        %p453 = pneg %p452
      $region74: #{simple_cnn_forward.1} parent=5 // pred_check_branch
        %455 = sbr.rel (%p453) target = $region76
      $region75: #{simple_cnn_forward.1} parent=5 // pred_region
        // Predicated region
        $region77: #{simple_cnn_forward.1} parent=75 // pred_check
          %p456 = pneg %p45
        $region78: #{simple_cnn_forward.1} parent=75 // pred_check_branch
          %458 = sbr.rel (%p456) target = $region80
        $region79: #{simple_cnn_forward.1} parent=75 // pred_region
          %s459 = smul.u32 2, %s25
          %p460 = scmp.lt.s32.totalorder %s459, 3
          %s461 = scalar_select %p460, %s459, 3
          %s462 = smul.addr %s461, 2
          %s463 = scalar_lea.vmem %s0, %s462
          %s464 = smul.u32 2, %s25
        $region80: #{simple_cnn_forward.1} parent=75 // pred_fallthru
          _
      $region76: #{simple_cnn_forward.1} parent=5 // pred_fallthru
        _
      %p465 = scmp.le.s32.totalorder 1, %s25
      %p466 = scmp.lt.s32.totalorder %s25, 3
      %p467 = pnand %p465, %p466
      %p468 = pneg %p467
      // Predicated region
      $region81: #{simple_cnn_forward.1} parent=5 // pred_check
        _
      $region82: #{simple_cnn_forward.1} parent=5 // pred_check_branch
        %470 = sbr.rel (%p467) target = $region84
      $region83: #{simple_cnn_forward.1} parent=5 // pred_region
        %s471 = ssub.s32 %s25, 1
        %s472 = smul.u32 2, %s30
        %p473 = scmp.lt.s32.totalorder %s472, 3
        %s474 = scalar_select %p473, %s472, 3
        %s475 = smul.addr %s474, 2
        %s476 = scalar_lea.vmem %s0, %s475
        %p477 = pneg %p51
        %p478 = pneg %p48
        %p479 = pneg %p72
        %p480 = pneg %p69
        %p481 = pneg %p93
        %p482 = pneg %p90
        %p483 = pneg %p114
        %p484 = pneg %p111
        %p485 = pneg %p135
        %p486 = pneg %p132
        %p487 = pneg %p156
        %p488 = pneg %p153
        %p489 = pneg %p177
        %p490 = pneg %p174
        %p491 = pneg %p198
        %p492 = pneg %p195
        %p493 = pneg %p219
        %p494 = pneg %p216
        %p495 = pneg %p240
        %p496 = pneg %p237
        %p497 = pneg %p261
        %p498 = pneg %p258
        %p499 = pneg %p282
        %p500 = pneg %p279
        %p501 = pneg %p303
        %p502 = pneg %p300
        %p503 = pneg %p324
        %p504 = pneg %p321
        %p505 = pneg %p345
        %p506 = pneg %p342
        %p507 = pneg %p366
        %p508 = pneg %p363
        %p509 = pneg %p392
        %p510 = pneg %p389
        %s511 = sand.u32 %s379, 1
        %s512 = scalar_lea.sflag [#allocation6], %s511
        %s513 = sand.u32 %s379, 1
        %s514 = smul.addr %s513, 2
        %s515 = scalar_lea.vmem [#allocation5], %s514
        %s516 = smul.u32 2, %s30
        %p517 = scmp.lt.s32.totalorder %s516, 3
        %s518 = scalar_select %p517, %s516, 3
        %s519 = smul.addr %s518, 2
        %s520 = scalar_lea.vmem %s0, %s519
        %s521 = smul.u32 2, %s30
        %v523 = vld [vmem:[%s3] sm:$0xff]
        %v524 = vld [vmem:[%s3 + $0x8] sm:$0xff]
        %v525 = vld [vmem:[%s3 + $0x10] sm:$0xff]
        %v526 = vld [vmem:[%s3 + $0x18] sm:$0xff]
        %v527 = vld [vmem:[%s3 + $0x20] sm:$0xff]
        %v528 = vld [vmem:[%s3 + $0x28] sm:$0xff]
        %v529 = vld [vmem:[%s3 + $0x30] sm:$0xff]
        %v530 = vld [vmem:[%s3 + $0x38] sm:$0xff]
        %v531 = vld [vmem:[%s3 + $0x40] sm:$0xff]
        %v532 = vld [vmem:[%s3 + $0x48] sm:$0xff]
        %v533 = vld [vmem:[%s3 + $0x50] sm:$0xff]
        %v534 = vld [vmem:[%s3 + $0x58] sm:$0xff]
        %v535 = vld [vmem:[%s3 + $0x60] sm:$0xff]
        %v536 = vld [vmem:[%s3 + $0x68] sm:$0xff]
        %v537 = vld [vmem:[%s3 + $0x70] sm:$0xff]
        %v538 = vld [vmem:[%s3 + $0x78] sm:$0xff]
        %v539 = vld [vmem:[%s3 + $0x80] sm:$0xff]
        %v540 = vld [vmem:[%s3 + $0x88] sm:$0xff]
        %v541 = vld [vmem:[%s3 + $0x90] sm:$0xff]
        %v542 = vld [vmem:[%s3 + $0x98] sm:$0xff]
        %v543 = vld [vmem:[%s3 + $0xa0] sm:$0xff]
        %v544 = vld [vmem:[%s3 + $0xa8] sm:$0xff]
        %v545 = vld [vmem:[%s3 + $0xb0] sm:$0xff]
        %v546 = vld [vmem:[%s3 + $0xb8] sm:$0xff]
        %v547 = vld [vmem:[%s3 + $0xc0] sm:$0xff]
        %v548 = vld [vmem:[%s3 + $0xc8] sm:$0xff]
        %v549 = vld [vmem:[%s3 + $0xd0] sm:$0xff]
        %v550 = vld [vmem:[%s3 + $0xd8] sm:$0xff]
        %v551 = vld [vmem:[%s3 + $0xe0] sm:$0xff]
        %v552 = vld [vmem:[%s3 + $0xe8] sm:$0xff]
        %v553 = vld [vmem:[%s3 + $0xf0] sm:$0xff]
        %v554 = vld [vmem:[%s3 + $0xf8] sm:$0xff]
        %v555 = vld [vmem:[%s3 + $0x100] sm:$0xff]
        %v556 = vld [vmem:[%s3 + $0x108] sm:$0xff]
        %v557 = vld [vmem:[%s3 + $0x110] sm:$0xff]
        %v558 = vld [vmem:[%s3 + $0x118] sm:$0xff]
        %v559 = vld [vmem:[%s3 + $0x120] sm:$0xff]
        %v560 = vld [vmem:[%s3 + $0x128] sm:$0xff]
        %v561 = vld [vmem:[%s3 + $0x130] sm:$0xff]
        %v562 = vld [vmem:[%s3 + $0x138] sm:$0xff]
        %v563 = vld [vmem:[%s3 + $0x140] sm:$0xff]
        %v564 = vld [vmem:[%s3 + $0x148] sm:$0xff]
        %v565 = vld [vmem:[%s3 + $0x150] sm:$0xff]
        %v566 = vld [vmem:[%s3 + $0x158] sm:$0xff]
        %v567 = vld [vmem:[%s3 + $0x160] sm:$0xff]
        %v568 = vld [vmem:[%s3 + $0x168] sm:$0xff]
        %v569 = vld [vmem:[%s3 + $0x170] sm:$0xff]
        %v570 = vld [vmem:[%s3 + $0x178] sm:$0xff]
        %v571 = vld [vmem:[%s3 + $0x180] sm:$0xff]
        %v572 = vld [vmem:[%s3 + $0x188] sm:$0xff]
        %v573 = vld [vmem:[%s3 + $0x190] sm:$0xff]
        %v574 = vld [vmem:[%s3 + $0x198] sm:$0xff]
        %v575 = vld [vmem:[%s3 + $0x1a0] sm:$0xff]
        %v576 = vld [vmem:[%s3 + $0x1a8] sm:$0xff]
        %v577 = vld [vmem:[%s3 + $0x1b0] sm:$0xff]
        %v578 = vld [vmem:[%s3 + $0x1b8] sm:$0xff]
        %v579 = vld [vmem:[%s3 + $0x1c0] sm:$0xff]
        %v580 = vld [vmem:[%s3 + $0x1c8] sm:$0xff]
        %v581 = vld [vmem:[%s3 + $0x1d0] sm:$0xff]
        %v582 = vld [vmem:[%s3 + $0x1d8] sm:$0xff]
        %v583 = vld [vmem:[%s3 + $0x1e0] sm:$0xff]
        %v584 = vld [vmem:[%s3 + $0x1e8] sm:$0xff]
        %v585 = vld [vmem:[%s3 + $0x1f0] sm:$0xff]
        %v586 = vld [vmem:[%s3 + $0x1f8] sm:$0xff]
        %v587 = vld [vmem:[%s3 + $0x200] sm:$0xff]
        %v588 = vld [vmem:[%s3 + $0x208] sm:$0xff]
        %v589 = vld [vmem:[%s3 + $0x210] sm:$0xff]
        %v590 = vld [vmem:[%s3 + $0x218] sm:$0xff]
        %v591 = vld [vmem:[%s3 + $0x220] sm:$0xff]
        %v592 = vld [vmem:[%s3 + $0x228] sm:$0xff]
        %v593 = vld [vmem:[%s3 + $0x230] sm:$0xff]
        %v594 = vld [vmem:[%s3 + $0x238] sm:$0xff]
        %v595 = vld [vmem:[%s1] sm:$0xff]
        %v596 = vld [vmem:[%s1 + $0x8] sm:$0xff]
        %v597 = vld [vmem:[%s1 + $0x10] sm:$0xff]
        %v598 = vld [vmem:[%s1 + $0x18] sm:$0xff]
        %v599 = vld [vmem:[%s1 + $0x20] sm:$0xff]
        %v600 = vld [vmem:[%s1 + $0x28] sm:$0xff]
        %v601 = vld [vmem:[%s1 + $0x30] sm:$0xff]
        %v602 = vld [vmem:[%s1 + $0x38] sm:$0xff]
        %v603 = vld [vmem:[%s2] sm:$0xff]
        %v604 = vld [vmem:[%s2 + $0x8] sm:$0xff]
        %v605 = vld [vmem:[%s2 + $0x10] sm:$0xff]
        %v606 = vld [vmem:[%s2 + $0x18] sm:$0xff]
        %v607 = vld [vmem:[%s2 + $0x20] sm:$0xff]
        %v608 = vld [vmem:[%s2 + $0x28] sm:$0xff]
        %v609 = vld [vmem:[%s2 + $0x30] sm:$0xff]
        %v610 = vld [vmem:[%s2 + $0x38] sm:$0xff]
        %v611 = vld [vmem:[%s520] sm:$0x3]
        %v613 = vlaneseq
        %v614 = vshrl.u32 %v613, 7
        %v615 = vsub.s32 0, %v614
        %v616 = vrot.slane %v611, %v615
        %v617 = vlaneseq
        %v618 = vshrl.u32 %v617, 7
        %v619 = vsub.s32 1, %v618
        %v620 = vrot.slane %v611, %v619
        %624 = vset.pattern.permute.xlu0 0
        %625 = vperm.xlu0 %624, %v595
        %v626 = vpop.permute.xlu0 %625
        %629 = vset.pattern.permute.xlu0 0
        %630 = vperm.xlu0 %629, %v596
        %v631 = vpop.permute.xlu0 %630
        %634 = vset.pattern.permute.xlu0 0
        %635 = vperm.xlu0 %634, %v597
        %v636 = vpop.permute.xlu0 %635
        %639 = vset.pattern.permute.xlu0 0
        %640 = vperm.xlu0 %639, %v598
        %v641 = vpop.permute.xlu0 %640
        %644 = vset.pattern.permute.xlu0 0
        %645 = vperm.xlu0 %644, %v599
        %v646 = vpop.permute.xlu0 %645
        %649 = vset.pattern.permute.xlu0 0
        %650 = vperm.xlu0 %649, %v600
        %v651 = vpop.permute.xlu0 %650
        %654 = vset.pattern.permute.xlu0 0
        %655 = vperm.xlu0 %654, %v601
        %v656 = vpop.permute.xlu0 %655
        %659 = vset.pattern.permute.xlu0 0
        %660 = vperm.xlu0 %659, %v602
        %v661 = vpop.permute.xlu0 %660
        %v663 = vmul.f32 %v616, %v626
        %v664 = vmul.f32 %v620, %v626
        %v665 = vmul.f32 %v616, %v631
        %v666 = vmul.f32 %v620, %v631
        %v667 = vmul.f32 %v616, %v636
        %v668 = vmul.f32 %v620, %v636
        %v669 = vmul.f32 %v616, %v641
        %v670 = vmul.f32 %v620, %v641
        %v671 = vmul.f32 %v616, %v646
        %v672 = vmul.f32 %v620, %v646
        %v673 = vmul.f32 %v616, %v651
        %v674 = vmul.f32 %v620, %v651
        %v675 = vmul.f32 %v616, %v656
        %v676 = vmul.f32 %v620, %v656
        %v677 = vmul.f32 %v616, %v661
        %v678 = vmul.f32 %v620, %v661
        %680 = vset.pattern.permute.xlu0 0
        %681 = vperm.xlu0 %680, %v603
        %v682 = vpop.permute.xlu0 %681
        %685 = vset.pattern.permute.xlu0 0
        %686 = vperm.xlu0 %685, %v604
        %v687 = vpop.permute.xlu0 %686
        %690 = vset.pattern.permute.xlu0 0
        %691 = vperm.xlu0 %690, %v605
        %v692 = vpop.permute.xlu0 %691
        %695 = vset.pattern.permute.xlu0 0
        %696 = vperm.xlu0 %695, %v606
        %v697 = vpop.permute.xlu0 %696
        %700 = vset.pattern.permute.xlu0 0
        %701 = vperm.xlu0 %700, %v607
        %v702 = vpop.permute.xlu0 %701
        %705 = vset.pattern.permute.xlu0 0
        %706 = vperm.xlu0 %705, %v608
        %v707 = vpop.permute.xlu0 %706
        %710 = vset.pattern.permute.xlu0 0
        %711 = vperm.xlu0 %710, %v609
        %v712 = vpop.permute.xlu0 %711
        %715 = vset.pattern.permute.xlu0 0
        %716 = vperm.xlu0 %715, %v610
        %v717 = vpop.permute.xlu0 %716
        %v719 = vadd.f32 %v682, %v663
        %v720 = vadd.f32 %v682, %v664
        %v721 = vadd.f32 %v687, %v665
        %v722 = vadd.f32 %v687, %v666
        %v723 = vadd.f32 %v692, %v667
        %v724 = vadd.f32 %v692, %v668
        %v725 = vadd.f32 %v697, %v669
        %v726 = vadd.f32 %v697, %v670
        %v727 = vadd.f32 %v702, %v671
        %v728 = vadd.f32 %v702, %v672
        %v729 = vadd.f32 %v707, %v673
        %v730 = vadd.f32 %v707, %v674
        %v731 = vadd.f32 %v712, %v675
        %v732 = vadd.f32 %v712, %v676
        %v733 = vadd.f32 %v717, %v677
        %v734 = vadd.f32 %v717, %v678
        %v735 = vmax.f32 %v719, 0.0
        %v736 = vmax.f32 %v720, 0.0
        %v737 = vmax.f32 %v721, 0.0
        %v738 = vmax.f32 %v722, 0.0
        %v739 = vmax.f32 %v723, 0.0
        %v740 = vmax.f32 %v724, 0.0
        %v741 = vmax.f32 %v725, 0.0
        %v742 = vmax.f32 %v726, 0.0
        %v743 = vmax.f32 %v727, 0.0
        %v744 = vmax.f32 %v728, 0.0
        %v745 = vmax.f32 %v729, 0.0
        %v746 = vmax.f32 %v730, 0.0
        %v747 = vmax.f32 %v731, 0.0
        %v748 = vmax.f32 %v732, 0.0
        %v749 = vmax.f32 %v733, 0.0
        %v750 = vmax.f32 %v734, 0.0
        %v751 = vpack.c.bf16 %v737, %v735
        %v752 = vpack.c.bf16 %v738, %v736
        %v753 = vpack.c.bf16 %v741, %v739
        %v754 = vpack.c.bf16 %v742, %v740
        %v755 = vpack.c.bf16 %v745, %v743
        %v756 = vpack.c.bf16 %v746, %v744
        %v757 = vpack.c.bf16 %v749, %v747
        %v758 = vpack.c.bf16 %v750, %v748
        %v831 = vunpack.c.l.b16 %v523
        %v832 = vunpack.c.h.b16 %v523
        %v833 = vunpack.c.l.b16 %v524
        %v834 = vunpack.c.h.b16 %v524
        %v835 = vunpack.c.l.b16 %v525
        %v836 = vunpack.c.h.b16 %v525
        %v837 = vunpack.c.l.b16 %v526
        %v838 = vunpack.c.h.b16 %v526
        %v839 = vunpack.c.l.b16 %v527
        %v840 = vunpack.c.h.b16 %v527
        %v841 = vunpack.c.l.b16 %v528
        %v842 = vunpack.c.h.b16 %v528
        %v843 = vunpack.c.l.b16 %v529
        %v844 = vunpack.c.h.b16 %v529
        %v845 = vunpack.c.l.b16 %v530
        %v846 = vunpack.c.h.b16 %v530
        %v847 = vunpack.c.l.b16 %v531
        %v848 = vunpack.c.h.b16 %v531
        %v849 = vunpack.c.l.b16 %v532
        %v850 = vunpack.c.h.b16 %v532
        %v851 = vunpack.c.l.b16 %v533
        %v852 = vunpack.c.h.b16 %v533
        %v853 = vunpack.c.l.b16 %v534
        %v854 = vunpack.c.h.b16 %v534
        %v855 = vunpack.c.l.b16 %v535
        %v856 = vunpack.c.h.b16 %v535
        %v857 = vunpack.c.l.b16 %v536
        %v858 = vunpack.c.h.b16 %v536
        %v859 = vunpack.c.l.b16 %v537
        %v860 = vunpack.c.h.b16 %v537
        %v861 = vunpack.c.l.b16 %v538
        %v862 = vunpack.c.h.b16 %v538
        %v863 = vunpack.c.l.b16 %v539
        %v864 = vunpack.c.h.b16 %v539
        %v865 = vunpack.c.l.b16 %v540
        %v866 = vunpack.c.h.b16 %v540
        %v867 = vunpack.c.l.b16 %v541
        %v868 = vunpack.c.h.b16 %v541
        %v869 = vunpack.c.l.b16 %v542
        %v870 = vunpack.c.h.b16 %v542
        %v871 = vunpack.c.l.b16 %v543
        %v872 = vunpack.c.h.b16 %v543
        %v873 = vunpack.c.l.b16 %v544
        %v874 = vunpack.c.h.b16 %v544
        %v875 = vunpack.c.l.b16 %v545
        %v876 = vunpack.c.h.b16 %v545
        %v877 = vunpack.c.l.b16 %v546
        %v878 = vunpack.c.h.b16 %v546
        %v879 = vunpack.c.l.b16 %v547
        %v880 = vunpack.c.h.b16 %v547
        %v881 = vunpack.c.l.b16 %v548
        %v882 = vunpack.c.h.b16 %v548
        %v883 = vunpack.c.l.b16 %v549
        %v884 = vunpack.c.h.b16 %v549
        %v885 = vunpack.c.l.b16 %v550
        %v886 = vunpack.c.h.b16 %v550
        %v887 = vunpack.c.l.b16 %v551
        %v888 = vunpack.c.h.b16 %v551
        %v889 = vunpack.c.l.b16 %v552
        %v890 = vunpack.c.h.b16 %v552
        %v891 = vunpack.c.l.b16 %v553
        %v892 = vunpack.c.h.b16 %v553
        %v893 = vunpack.c.l.b16 %v554
        %v894 = vunpack.c.h.b16 %v554
        %v895 = vunpack.c.l.b16 %v555
        %v896 = vunpack.c.h.b16 %v555
        %v897 = vunpack.c.l.b16 %v556
        %v898 = vunpack.c.h.b16 %v556
        %v899 = vunpack.c.l.b16 %v557
        %v900 = vunpack.c.h.b16 %v557
        %v901 = vunpack.c.l.b16 %v558
        %v902 = vunpack.c.h.b16 %v558
        %v903 = vunpack.c.l.b16 %v559
        %v904 = vunpack.c.h.b16 %v559
        %v905 = vunpack.c.l.b16 %v560
        %v906 = vunpack.c.h.b16 %v560
        %v907 = vunpack.c.l.b16 %v561
        %v908 = vunpack.c.h.b16 %v561
        %v909 = vunpack.c.l.b16 %v562
        %v910 = vunpack.c.h.b16 %v562
        %v911 = vunpack.c.l.b16 %v563
        %v912 = vunpack.c.h.b16 %v563
        %v913 = vunpack.c.l.b16 %v564
        %v914 = vunpack.c.h.b16 %v564
        %v915 = vunpack.c.l.b16 %v565
        %v916 = vunpack.c.h.b16 %v565
        %v917 = vunpack.c.l.b16 %v566
        %v918 = vunpack.c.h.b16 %v566
        %v919 = vunpack.c.l.b16 %v567
        %v920 = vunpack.c.h.b16 %v567
        %v921 = vunpack.c.l.b16 %v568
        %v922 = vunpack.c.h.b16 %v568
        %v923 = vunpack.c.l.b16 %v569
        %v924 = vunpack.c.h.b16 %v569
        %v925 = vunpack.c.l.b16 %v570
        %v926 = vunpack.c.h.b16 %v570
        %v927 = vunpack.c.l.b16 %v571
        %v928 = vunpack.c.h.b16 %v571
        %v929 = vunpack.c.l.b16 %v572
        %v930 = vunpack.c.h.b16 %v572
        %v931 = vunpack.c.l.b16 %v573
        %v932 = vunpack.c.h.b16 %v573
        %v933 = vunpack.c.l.b16 %v574
        %v934 = vunpack.c.h.b16 %v574
        %v935 = vunpack.c.l.b16 %v575
        %v936 = vunpack.c.h.b16 %v575
        %v937 = vunpack.c.l.b16 %v576
        %v938 = vunpack.c.h.b16 %v576
        %v939 = vunpack.c.l.b16 %v577
        %v940 = vunpack.c.h.b16 %v577
        %v941 = vunpack.c.l.b16 %v578
        %v942 = vunpack.c.h.b16 %v578
        %v943 = vunpack.c.l.b16 %v579
        %v944 = vunpack.c.h.b16 %v579
        %v945 = vunpack.c.l.b16 %v580
        %v946 = vunpack.c.h.b16 %v580
        %v947 = vunpack.c.l.b16 %v581
        %v948 = vunpack.c.h.b16 %v581
        %v949 = vunpack.c.l.b16 %v582
        %v950 = vunpack.c.h.b16 %v582
        %v951 = vunpack.c.l.b16 %v583
        %v952 = vunpack.c.h.b16 %v583
        %v953 = vunpack.c.l.b16 %v584
        %v954 = vunpack.c.h.b16 %v584
        %v955 = vunpack.c.l.b16 %v585
        %v956 = vunpack.c.h.b16 %v585
        %v957 = vunpack.c.l.b16 %v586
        %v958 = vunpack.c.h.b16 %v586
        %v959 = vunpack.c.l.b16 %v587
        %v960 = vunpack.c.h.b16 %v587
        %v961 = vunpack.c.l.b16 %v588
        %v962 = vunpack.c.h.b16 %v588
        %v963 = vunpack.c.l.b16 %v589
        %v964 = vunpack.c.h.b16 %v589
        %v965 = vunpack.c.l.b16 %v590
        %v966 = vunpack.c.h.b16 %v590
        %v967 = vunpack.c.l.b16 %v591
        %v968 = vunpack.c.h.b16 %v591
        %v969 = vunpack.c.l.b16 %v592
        %v970 = vunpack.c.h.b16 %v592
        %v971 = vunpack.c.l.b16 %v593
        %v972 = vunpack.c.h.b16 %v593
        %v973 = vunpack.c.l.b16 %v594
        %v974 = vunpack.c.h.b16 %v594
        %v975 = vpack.c.b16 %v833, %v831
        %v976 = vpack.c.b16 %v834, %v832
        %v977 = vpack.c.b16 %v837, %v835
        %v978 = vpack.c.b16 %v838, %v836
        %v979 = vpack.c.b16 %v841, %v839
        %v980 = vpack.c.b16 %v842, %v840
        %v981 = vpack.c.b16 %v845, %v843
        %v982 = vpack.c.b16 %v846, %v844
        %v983 = vpack.c.b16 %v849, %v847
        %v984 = vpack.c.b16 %v850, %v848
        %v985 = vpack.c.b16 %v853, %v851
        %v986 = vpack.c.b16 %v854, %v852
        %v987 = vpack.c.b16 %v857, %v855
        %v988 = vpack.c.b16 %v858, %v856
        %v989 = vpack.c.b16 %v861, %v859
        %v990 = vpack.c.b16 %v862, %v860
        %v991 = vpack.c.b16 %v865, %v863
        %v992 = vpack.c.b16 %v866, %v864
        %v993 = vpack.c.b16 %v869, %v867
        %v994 = vpack.c.b16 %v870, %v868
        %v995 = vpack.c.b16 %v873, %v871
        %v996 = vpack.c.b16 %v874, %v872
        %v997 = vpack.c.b16 %v877, %v875
        %v998 = vpack.c.b16 %v878, %v876
        %v999 = vpack.c.b16 %v881, %v879
        %v1000 = vpack.c.b16 %v882, %v880
        %v1001 = vpack.c.b16 %v885, %v883
        %v1002 = vpack.c.b16 %v886, %v884
        %v1003 = vpack.c.b16 %v889, %v887
        %v1004 = vpack.c.b16 %v890, %v888
        %v1005 = vpack.c.b16 %v893, %v891
        %v1006 = vpack.c.b16 %v894, %v892
        %v1007 = vpack.c.b16 %v897, %v895
        %v1008 = vpack.c.b16 %v898, %v896
        %v1009 = vpack.c.b16 %v901, %v899
        %v1010 = vpack.c.b16 %v902, %v900
        %v1011 = vpack.c.b16 %v905, %v903
        %v1012 = vpack.c.b16 %v906, %v904
        %v1013 = vpack.c.b16 %v909, %v907
        %v1014 = vpack.c.b16 %v910, %v908
        %v1015 = vpack.c.b16 %v913, %v911
        %v1016 = vpack.c.b16 %v914, %v912
        %v1017 = vpack.c.b16 %v917, %v915
        %v1018 = vpack.c.b16 %v918, %v916
        %v1019 = vpack.c.b16 %v921, %v919
        %v1020 = vpack.c.b16 %v922, %v920
        %v1021 = vpack.c.b16 %v925, %v923
        %v1022 = vpack.c.b16 %v926, %v924
        %v1023 = vpack.c.b16 %v929, %v927
        %v1024 = vpack.c.b16 %v930, %v928
        %v1025 = vpack.c.b16 %v933, %v931
        %v1026 = vpack.c.b16 %v934, %v932
        %v1027 = vpack.c.b16 %v937, %v935
        %v1028 = vpack.c.b16 %v938, %v936
        %v1029 = vpack.c.b16 %v941, %v939
        %v1030 = vpack.c.b16 %v942, %v940
        %v1031 = vpack.c.b16 %v945, %v943
        %v1032 = vpack.c.b16 %v946, %v944
        %v1033 = vpack.c.b16 %v949, %v947
        %v1034 = vpack.c.b16 %v950, %v948
        %v1035 = vpack.c.b16 %v953, %v951
        %v1036 = vpack.c.b16 %v954, %v952
        %v1037 = vpack.c.b16 %v957, %v955
        %v1038 = vpack.c.b16 %v958, %v956
        %v1039 = vpack.c.b16 %v961, %v959
        %v1040 = vpack.c.b16 %v962, %v960
        %v1041 = vpack.c.b16 %v965, %v963
        %v1042 = vpack.c.b16 %v966, %v964
        %v1043 = vpack.c.b16 %v969, %v967
        %v1044 = vpack.c.b16 %v970, %v968
        %v1045 = vpack.c.b16 %v973, %v971
        %v1046 = vpack.c.b16 %v974, %v972
        %1119 = vmatprep.subr.bf16.mxu0 %v752
        %1120 = vmatpush1.bf16.xpose.msra.mxu0 %v751
        %1121 = vmatprep.subr.bf16.mxu0 %v754
        %1122 = vmatpush1.bf16.xpose.msra.mxu0 %v753
        %1123 = vmatprep.subr.bf16.mxu0 %v756
        %1124 = vmatpush1.bf16.xpose.msra.mxu0 %v755
        %1125 = vmatprep.subr.bf16.mxu0 %v758
        %1126 = vmatpush1.bf16.xpose.msra.mxu0 %v757
        %1127 = vmatprep.subr.bf16.mxu0 0
        %1128 = vmatpush1.bf16.xpose.msra.mxu0 0
        %1129 = vmatprep.subr.bf16.mxu0 0
        %1130 = vmatpush1.bf16.xpose.msra.mxu0 0
        %1131 = vmatprep.subr.bf16.mxu0 0
        %1132 = vmatpush1.bf16.xpose.msra.mxu0 0
        %1133 = vmatprep.subr.bf16.mxu0 0
        %1134 = vmatpush1.bf16.xpose.msra.mxu0 0
        %1135 = vmatprep.subr.bf16.mxu0 0
        %1136 = vmatpush1.bf16.xpose.msra.mxu0 0
        %1137 = vmatprep.subr.bf16.mxu0 0
        %1138 = vmatpush1.bf16.xpose.msra.mxu0 0
        %1139 = vmatprep.subr.bf16.mxu0 0
        %1140 = vmatpush1.bf16.xpose.msra.mxu0 0
        %1141 = vmatprep.subr.bf16.mxu0 0
        %1142 = vmatpush1.bf16.xpose.msra.mxu0 0
        %1143 = vmatprep.subr.bf16.mxu0 0
        %1144 = vmatpush1.bf16.xpose.msra.mxu0 0
        %1145 = vmatprep.subr.bf16.mxu0 0
        %1146 = vmatpush1.bf16.xpose.msra.mxu0 0
        %1147 = vmatprep.subr.bf16.mxu0 0
        %1148 = vmatpush1.bf16.xpose.msra.mxu0 0
        %1149 = vmatprep.subr.bf16.mxu0 0
        %1150 = vmatpush1.bf16.xpose.msra.mxu0 0
        %1151 = vmatprep.mubr.bf16.mxu0 %v976
        %1152 = vmatmul.mubr.bf16.gmra.mrb[0].mxu0 %v975
        %v1153 = vpop.f32.mrb[0].mxu0
        %v1154 = vadd.f32 0.0, %v1153
        %v1155 = vpop.f32.mrb[0].mxu0
        %v1156 = vpop.f32.mrb[0].mxu0
        %v1157 = vadd.f32 0.0, %v1156
        %v1158 = vpop.f32.mrb[0].mxu0
        %1159 = vmatprep.mubr.bf16.mxu0 %v978
        %1160 = vmatmul.mubr.bf16.gmra.mrb[0].mxu0 %v977
        %v1161 = vpop.f32.mrb[0].mxu0
        %v1162 = vadd.f32 0.0, %v1161
        %v1163 = vpop.f32.mrb[0].mxu0
        %v1164 = vpop.f32.mrb[0].mxu0
        %v1165 = vadd.f32 0.0, %v1164
        %v1166 = vpop.f32.mrb[0].mxu0
        %1167 = vmatprep.mubr.bf16.mxu0 %v980
        %1168 = vmatmul.mubr.bf16.gmra.mrb[0].mxu0 %v979
        %v1169 = vpop.f32.mrb[0].mxu0
        %v1170 = vadd.f32 0.0, %v1169
        %v1171 = vpop.f32.mrb[0].mxu0
        %v1172 = vpop.f32.mrb[0].mxu0
        %v1173 = vadd.f32 0.0, %v1172
        %v1174 = vpop.f32.mrb[0].mxu0
        %1175 = vmatprep.mubr.bf16.mxu0 %v982
        %1176 = vmatmul.mubr.bf16.gmra.mrb[0].mxu0 %v981
        %v1177 = vpop.f32.mrb[0].mxu0
        %v1178 = vadd.f32 0.0, %v1177
        %v1179 = vpop.f32.mrb[0].mxu0
        %v1180 = vpop.f32.mrb[0].mxu0
        %v1181 = vadd.f32 0.0, %v1180
        %v1182 = vpop.f32.mrb[0].mxu0
        %1183 = vmatprep.mubr.bf16.mxu0 %v984
        %1184 = vmatmul.mubr.bf16.gmra.mrb[0].mxu0 %v983
        %v1185 = vpop.f32.mrb[0].mxu0
        %v1186 = vadd.f32 0.0, %v1185
        %v1187 = vpop.f32.mrb[0].mxu0
        %v1188 = vpop.f32.mrb[0].mxu0
        %v1189 = vadd.f32 0.0, %v1188
        %v1190 = vpop.f32.mrb[0].mxu0
        %1191 = vmatprep.mubr.bf16.mxu0 %v986
        %1192 = vmatmul.mubr.bf16.gmra.mrb[0].mxu0 %v985
        %v1193 = vpop.f32.mrb[0].mxu0
        %v1194 = vadd.f32 0.0, %v1193
        %v1195 = vpop.f32.mrb[0].mxu0
        %v1196 = vpop.f32.mrb[0].mxu0
        %v1197 = vadd.f32 0.0, %v1196
        %v1198 = vpop.f32.mrb[0].mxu0
        %1199 = vmatprep.mubr.bf16.mxu0 %v988
        %1200 = vmatmul.mubr.bf16.gmra.mrb[0].mxu0 %v987
        %v1201 = vpop.f32.mrb[0].mxu0
        %v1202 = vadd.f32 0.0, %v1201
        %v1203 = vpop.f32.mrb[0].mxu0
        %v1204 = vpop.f32.mrb[0].mxu0
        %v1205 = vadd.f32 0.0, %v1204
        %v1206 = vpop.f32.mrb[0].mxu0
        %1207 = vmatprep.mubr.bf16.mxu0 %v990
        %1208 = vmatmul.mubr.bf16.gmra.mrb[0].mxu0 %v989
        %v1209 = vpop.f32.mrb[0].mxu0
        %v1210 = vadd.f32 0.0, %v1209
        %v1211 = vpop.f32.mrb[0].mxu0
        %v1212 = vpop.f32.mrb[0].mxu0
        %v1213 = vadd.f32 0.0, %v1212
        %v1214 = vpop.f32.mrb[0].mxu0
        %1215 = vmatprep.mubr.bf16.mxu0 %v992
        %1216 = vmatmul.mubr.bf16.gmra.mrb[0].mxu0 %v991
        %v1217 = vpop.f32.mrb[0].mxu0
        %v1218 = vadd.f32 0.0, %v1217
        %v1219 = vpop.f32.mrb[0].mxu0
        %v1220 = vpop.f32.mrb[0].mxu0
        %v1221 = vadd.f32 0.0, %v1220
        %v1222 = vpop.f32.mrb[0].mxu0
        %1223 = vmatprep.mubr.bf16.mxu0 %v994
        %1224 = vmatmul.mubr.bf16.gmra.mrb[0].mxu0 %v993
        %v1225 = vpop.f32.mrb[0].mxu0
        %v1226 = vadd.f32 0.0, %v1225
        %v1227 = vpop.f32.mrb[0].mxu0
        %v1228 = vpop.f32.mrb[0].mxu0
        %v1229 = vadd.f32 0.0, %v1228
        %v1230 = vpop.f32.mrb[0].mxu0
        %1231 = vmatprep.mubr.bf16.mxu0 %v996
        %1232 = vmatmul.mubr.bf16.gmra.mrb[0].mxu0 %v995
        %v1233 = vpop.f32.mrb[0].mxu0
        %v1234 = vadd.f32 0.0, %v1233
        %v1235 = vpop.f32.mrb[0].mxu0
        %v1236 = vpop.f32.mrb[0].mxu0
        %v1237 = vadd.f32 0.0, %v1236
        %v1238 = vpop.f32.mrb[0].mxu0
        %1239 = vmatprep.mubr.bf16.mxu0 %v998
        %1240 = vmatmul.mubr.bf16.gmra.mrb[0].mxu0 %v997
        %v1241 = vpop.f32.mrb[0].mxu0
        %v1242 = vadd.f32 0.0, %v1241
        %v1243 = vpop.f32.mrb[0].mxu0
        %v1244 = vpop.f32.mrb[0].mxu0
        %v1245 = vadd.f32 0.0, %v1244
        %v1246 = vpop.f32.mrb[0].mxu0
        %1247 = vmatprep.mubr.bf16.mxu0 %v1000
        %1248 = vmatmul.mubr.bf16.gmra.mrb[0].mxu0 %v999
        %v1249 = vpop.f32.mrb[0].mxu0
        %v1250 = vadd.f32 0.0, %v1249
        %v1251 = vpop.f32.mrb[0].mxu0
        %v1252 = vpop.f32.mrb[0].mxu0
        %v1253 = vadd.f32 0.0, %v1252
        %v1254 = vpop.f32.mrb[0].mxu0
        %1255 = vmatprep.mubr.bf16.mxu0 %v1002
        %1256 = vmatmul.mubr.bf16.gmra.mrb[0].mxu0 %v1001
        %v1257 = vpop.f32.mrb[0].mxu0
        %v1258 = vadd.f32 0.0, %v1257
        %v1259 = vpop.f32.mrb[0].mxu0
        %v1260 = vpop.f32.mrb[0].mxu0
        %v1261 = vadd.f32 0.0, %v1260
        %v1262 = vpop.f32.mrb[0].mxu0
        %1263 = vmatprep.mubr.bf16.mxu0 %v1004
        %1264 = vmatmul.mubr.bf16.gmra.mrb[0].mxu0 %v1003
        %v1265 = vpop.f32.mrb[0].mxu0
        %v1266 = vadd.f32 0.0, %v1265
        %v1267 = vpop.f32.mrb[0].mxu0
        %v1268 = vpop.f32.mrb[0].mxu0
        %v1269 = vadd.f32 0.0, %v1268
        %v1270 = vpop.f32.mrb[0].mxu0
        %1271 = vmatprep.mubr.bf16.mxu0 %v1006
        %1272 = vmatmul.mubr.bf16.gmra.mrb[0].mxu0 %v1005
        %v1273 = vpop.f32.mrb[0].mxu0
        %v1274 = vadd.f32 0.0, %v1273
        %v1275 = vpop.f32.mrb[0].mxu0
        %v1276 = vpop.f32.mrb[0].mxu0
        %v1277 = vadd.f32 0.0, %v1276
        %v1278 = vpop.f32.mrb[0].mxu0
        %1279 = vmatprep.mubr.bf16.mxu0 %v1008
        %1280 = vmatmul.mubr.bf16.gmra.mrb[0].mxu0 %v1007
        %v1281 = vpop.f32.mrb[0].mxu0
        %v1282 = vadd.f32 0.0, %v1281
        %v1283 = vpop.f32.mrb[0].mxu0
        %v1284 = vpop.f32.mrb[0].mxu0
        %v1285 = vadd.f32 0.0, %v1284
        %v1286 = vpop.f32.mrb[0].mxu0
        %1287 = vmatprep.mubr.bf16.mxu0 %v1010
        %1288 = vmatmul.mubr.bf16.gmra.mrb[0].mxu0 %v1009
        %v1289 = vpop.f32.mrb[0].mxu0
        %v1290 = vadd.f32 0.0, %v1289
        %v1291 = vpop.f32.mrb[0].mxu0
        %v1292 = vpop.f32.mrb[0].mxu0
        %v1293 = vadd.f32 0.0, %v1292
        %v1294 = vpop.f32.mrb[0].mxu0
        %1295 = vmatprep.mubr.bf16.mxu0 %v1012
        %1296 = vmatmul.mubr.bf16.gmra.mrb[0].mxu0 %v1011
        %v1297 = vpop.f32.mrb[0].mxu0
        %v1298 = vadd.f32 0.0, %v1297
        %v1299 = vpop.f32.mrb[0].mxu0
        %v1300 = vpop.f32.mrb[0].mxu0
        %v1301 = vadd.f32 0.0, %v1300
        %v1302 = vpop.f32.mrb[0].mxu0
        %1303 = vmatprep.mubr.bf16.mxu0 %v1014
        %1304 = vmatmul.mubr.bf16.gmra.mrb[0].mxu0 %v1013
        %v1305 = vpop.f32.mrb[0].mxu0
        %v1306 = vadd.f32 0.0, %v1305
        %v1307 = vpop.f32.mrb[0].mxu0
        %v1308 = vpop.f32.mrb[0].mxu0
        %v1309 = vadd.f32 0.0, %v1308
        %v1310 = vpop.f32.mrb[0].mxu0
        %1311 = vmatprep.mubr.bf16.mxu0 %v1016
        %1312 = vmatmul.mubr.bf16.gmra.mrb[0].mxu0 %v1015
        %v1313 = vpop.f32.mrb[0].mxu0
        %v1314 = vadd.f32 0.0, %v1313
        %v1315 = vpop.f32.mrb[0].mxu0
        %v1316 = vpop.f32.mrb[0].mxu0
        %v1317 = vadd.f32 0.0, %v1316
        %v1318 = vpop.f32.mrb[0].mxu0
        %1319 = vmatprep.mubr.bf16.mxu0 %v1018
        %1320 = vmatmul.mubr.bf16.gmra.mrb[0].mxu0 %v1017
        %v1321 = vpop.f32.mrb[0].mxu0
        %v1322 = vadd.f32 0.0, %v1321
        %v1323 = vpop.f32.mrb[0].mxu0
        %v1324 = vpop.f32.mrb[0].mxu0
        %v1325 = vadd.f32 0.0, %v1324
        %v1326 = vpop.f32.mrb[0].mxu0
        %1327 = vmatprep.mubr.bf16.mxu0 %v1020
        %1328 = vmatmul.mubr.bf16.gmra.mrb[0].mxu0 %v1019
        %v1329 = vpop.f32.mrb[0].mxu0
        %v1330 = vadd.f32 0.0, %v1329
        %v1331 = vpop.f32.mrb[0].mxu0
        %v1332 = vpop.f32.mrb[0].mxu0
        %v1333 = vadd.f32 0.0, %v1332
        %v1334 = vpop.f32.mrb[0].mxu0
        %1335 = vmatprep.mubr.bf16.mxu0 %v1022
        %1336 = vmatmul.mubr.bf16.gmra.mrb[0].mxu0 %v1021
        %v1337 = vpop.f32.mrb[0].mxu0
        %v1338 = vadd.f32 0.0, %v1337
        %v1339 = vpop.f32.mrb[0].mxu0
        %v1340 = vpop.f32.mrb[0].mxu0
        %v1341 = vadd.f32 0.0, %v1340
        %v1342 = vpop.f32.mrb[0].mxu0
        %1343 = vmatprep.mubr.bf16.mxu0 %v1024
        %1344 = vmatmul.mubr.bf16.gmra.mrb[0].mxu0 %v1023
        %v1345 = vpop.f32.mrb[0].mxu0
        %v1346 = vadd.f32 0.0, %v1345
        %v1347 = vpop.f32.mrb[0].mxu0
        %v1348 = vpop.f32.mrb[0].mxu0
        %v1349 = vadd.f32 0.0, %v1348
        %v1350 = vpop.f32.mrb[0].mxu0
        %1351 = vmatprep.mubr.bf16.mxu0 %v1026
        %1352 = vmatmul.mubr.bf16.gmra.mrb[0].mxu0 %v1025
        %v1353 = vpop.f32.mrb[0].mxu0
        %v1354 = vadd.f32 0.0, %v1353
        %v1355 = vpop.f32.mrb[0].mxu0
        %v1356 = vpop.f32.mrb[0].mxu0
        %v1357 = vadd.f32 0.0, %v1356
        %v1358 = vpop.f32.mrb[0].mxu0
        %1359 = vmatprep.mubr.bf16.mxu0 %v1028
        %1360 = vmatmul.mubr.bf16.gmra.mrb[0].mxu0 %v1027
        %v1361 = vpop.f32.mrb[0].mxu0
        %v1362 = vadd.f32 0.0, %v1361
        %v1363 = vpop.f32.mrb[0].mxu0
        %v1364 = vpop.f32.mrb[0].mxu0
        %v1365 = vadd.f32 0.0, %v1364
        %v1366 = vpop.f32.mrb[0].mxu0
        %1367 = vmatprep.mubr.bf16.mxu0 %v1030
        %1368 = vmatmul.mubr.bf16.gmra.mrb[0].mxu0 %v1029
        %v1369 = vpop.f32.mrb[0].mxu0
        %v1370 = vadd.f32 0.0, %v1369
        %v1371 = vpop.f32.mrb[0].mxu0
        %v1372 = vpop.f32.mrb[0].mxu0
        %v1373 = vadd.f32 0.0, %v1372
        %v1374 = vpop.f32.mrb[0].mxu0
        %1375 = vmatprep.mubr.bf16.mxu0 %v1032
        %1376 = vmatmul.mubr.bf16.gmra.mrb[0].mxu0 %v1031
        %v1377 = vpop.f32.mrb[0].mxu0
        %v1378 = vadd.f32 0.0, %v1377
        %v1379 = vpop.f32.mrb[0].mxu0
        %v1380 = vpop.f32.mrb[0].mxu0
        %v1381 = vadd.f32 0.0, %v1380
        %v1382 = vpop.f32.mrb[0].mxu0
        %1383 = vmatprep.mubr.bf16.mxu0 %v1034
        %1384 = vmatmul.mubr.bf16.gmra.mrb[0].mxu0 %v1033
        %v1385 = vpop.f32.mrb[0].mxu0
        %v1386 = vadd.f32 0.0, %v1385
        %v1387 = vpop.f32.mrb[0].mxu0
        %v1388 = vpop.f32.mrb[0].mxu0
        %v1389 = vadd.f32 0.0, %v1388
        %v1390 = vpop.f32.mrb[0].mxu0
        %1391 = vmatprep.mubr.bf16.mxu0 %v1036
        %1392 = vmatmul.mubr.bf16.gmra.mrb[0].mxu0 %v1035
        %v1393 = vpop.f32.mrb[0].mxu0
        %v1394 = vadd.f32 0.0, %v1393
        %v1395 = vpop.f32.mrb[0].mxu0
        %v1396 = vpop.f32.mrb[0].mxu0
        %v1397 = vadd.f32 0.0, %v1396
        %v1398 = vpop.f32.mrb[0].mxu0
        %1399 = vmatprep.mubr.bf16.mxu0 %v1038
        %1400 = vmatmul.mubr.bf16.gmra.mrb[0].mxu0 %v1037
        %v1401 = vpop.f32.mrb[0].mxu0
        %v1402 = vadd.f32 0.0, %v1401
        %v1403 = vpop.f32.mrb[0].mxu0
        %v1404 = vpop.f32.mrb[0].mxu0
        %v1405 = vadd.f32 0.0, %v1404
        %v1406 = vpop.f32.mrb[0].mxu0
        %1407 = vmatprep.mubr.bf16.mxu0 %v1040
        %1408 = vmatmul.mubr.bf16.gmra.mrb[0].mxu0 %v1039
        %v1409 = vpop.f32.mrb[0].mxu0
        %v1410 = vadd.f32 0.0, %v1409
        %v1411 = vpop.f32.mrb[0].mxu0
        %v1412 = vpop.f32.mrb[0].mxu0
        %v1413 = vadd.f32 0.0, %v1412
        %v1414 = vpop.f32.mrb[0].mxu0
        %1415 = vmatprep.mubr.bf16.mxu0 %v1042
        %1416 = vmatmul.mubr.bf16.gmra.mrb[0].mxu0 %v1041
        %v1417 = vpop.f32.mrb[0].mxu0
        %v1418 = vadd.f32 0.0, %v1417
        %v1419 = vpop.f32.mrb[0].mxu0
        %v1420 = vpop.f32.mrb[0].mxu0
        %v1421 = vadd.f32 0.0, %v1420
        %v1422 = vpop.f32.mrb[0].mxu0
        %1423 = vmatprep.mubr.bf16.mxu0 %v1044
        %1424 = vmatmul.mubr.bf16.gmra.mrb[0].mxu0 %v1043
        %v1425 = vpop.f32.mrb[0].mxu0
        %v1426 = vadd.f32 0.0, %v1425
        %v1427 = vpop.f32.mrb[0].mxu0
        %v1428 = vpop.f32.mrb[0].mxu0
        %v1429 = vadd.f32 0.0, %v1428
        %v1430 = vpop.f32.mrb[0].mxu0
        %1431 = vmatprep.mubr.bf16.mxu0 %v1046
        %1432 = vmatmul.mubr.bf16.gmra.mrb[0].mxu0 %v1045
        %v1433 = vpop.f32.mrb[0].mxu0
        %v1434 = vadd.f32 0.0, %v1433
        %v1435 = vpop.f32.mrb[0].mxu0
        %v1436 = vpop.f32.mrb[0].mxu0
        %v1437 = vadd.f32 0.0, %v1436
        %v1438 = vpop.f32.mrb[0].mxu0
        %1439 = vdwg.mxu0
        %vm1440 = vcmask 523264
        %1441 = vst.msk [vmem:[#allocation2] sm:$0xff] %vm1440, %v1154
        %1442 = vst.msk [vmem:[#allocation2 + $0x28] sm:$0xff] %vm1440, %v1157
        %1443 = vst.msk [vmem:[#allocation2 + $0x50] sm:$0xff] %vm1440, %v1162
        %1444 = vst.msk [vmem:[#allocation2 + $0x78] sm:$0xff] %vm1440, %v1165
        %1445 = vst.msk [vmem:[#allocation2 + $0xa0] sm:$0xff] %vm1440, %v1170
        %1446 = vst.msk [vmem:[#allocation2 + $0xc8] sm:$0xff] %vm1440, %v1173
        %1447 = vst.msk [vmem:[#allocation2 + $0xf0] sm:$0xff] %vm1440, %v1178
        %1448 = vst.msk [vmem:[#allocation2 + $0x118] sm:$0xff] %vm1440, %v1181
        %1457 = vrot.lane.b32.xlu0 %v1186, 64
        %v1458 = vpop.permute.xlu0 %1457
        %1459 = vrot.lane.b32.xlu0 %v1189, 64
        %v1460 = vpop.permute.xlu0 %1459
        %1461 = vrot.lane.b32.xlu0 %v1194, 64
        %v1462 = vpop.permute.xlu0 %1461
        %1463 = vrot.lane.b32.xlu0 %v1197, 64
        %v1464 = vpop.permute.xlu0 %1463
        %1465 = vrot.lane.b32.xlu0 %v1202, 64
        %v1466 = vpop.permute.xlu0 %1465
        %1467 = vrot.lane.b32.xlu0 %v1205, 64
        %v1468 = vpop.permute.xlu0 %1467
        %1469 = vrot.lane.b32.xlu0 %v1210, 64
        %v1470 = vpop.permute.xlu0 %1469
        %1471 = vrot.lane.b32.xlu0 %v1213, 64
        %v1472 = vpop.permute.xlu0 %1471
        %vm1481 = vcmask 1048064
        %1482 = vst.msk [vmem:[#allocation2] sm:$0xff] %vm1481, %v1458
        %1483 = vst.msk [vmem:[#allocation2 + $0x28] sm:$0xff] %vm1481, %v1460
        %1484 = vst.msk [vmem:[#allocation2 + $0x50] sm:$0xff] %vm1481, %v1462
        %1485 = vst.msk [vmem:[#allocation2 + $0x78] sm:$0xff] %vm1481, %v1464
        %1486 = vst.msk [vmem:[#allocation2 + $0xa0] sm:$0xff] %vm1481, %v1466
        %1487 = vst.msk [vmem:[#allocation2 + $0xc8] sm:$0xff] %vm1481, %v1468
        %1488 = vst.msk [vmem:[#allocation2 + $0xf0] sm:$0xff] %vm1481, %v1470
        %1489 = vst.msk [vmem:[#allocation2 + $0x118] sm:$0xff] %vm1481, %v1472
        %1490 = vst.msk [vmem:[#allocation2 + $0x8] sm:$0xff] %vm1440, %v1218
        %1491 = vst.msk [vmem:[#allocation2 + $0x30] sm:$0xff] %vm1440, %v1221
        %1492 = vst.msk [vmem:[#allocation2 + $0x58] sm:$0xff] %vm1440, %v1226
        %1493 = vst.msk [vmem:[#allocation2 + $0x80] sm:$0xff] %vm1440, %v1229
        %1494 = vst.msk [vmem:[#allocation2 + $0xa8] sm:$0xff] %vm1440, %v1234
        %1495 = vst.msk [vmem:[#allocation2 + $0xd0] sm:$0xff] %vm1440, %v1237
        %1496 = vst.msk [vmem:[#allocation2 + $0xf8] sm:$0xff] %vm1440, %v1242
        %1497 = vst.msk [vmem:[#allocation2 + $0x120] sm:$0xff] %vm1440, %v1245
        %1506 = vrot.lane.b32.xlu0 %v1250, 64
        %v1507 = vpop.permute.xlu0 %1506
        %1508 = vrot.lane.b32.xlu0 %v1253, 64
        %v1509 = vpop.permute.xlu0 %1508
        %1510 = vrot.lane.b32.xlu0 %v1258, 64
        %v1511 = vpop.permute.xlu0 %1510
        %1512 = vrot.lane.b32.xlu0 %v1261, 64
        %v1513 = vpop.permute.xlu0 %1512
        %1514 = vrot.lane.b32.xlu0 %v1266, 64
        %v1515 = vpop.permute.xlu0 %1514
        %1516 = vrot.lane.b32.xlu0 %v1269, 64
        %v1517 = vpop.permute.xlu0 %1516
        %1518 = vrot.lane.b32.xlu0 %v1274, 64
        %v1519 = vpop.permute.xlu0 %1518
        %1520 = vrot.lane.b32.xlu0 %v1277, 64
        %v1521 = vpop.permute.xlu0 %1520
        %1530 = vst.msk [vmem:[#allocation2 + $0x8] sm:$0xff] %vm1481, %v1507
        %1531 = vst.msk [vmem:[#allocation2 + $0x30] sm:$0xff] %vm1481, %v1509
        %1532 = vst.msk [vmem:[#allocation2 + $0x58] sm:$0xff] %vm1481, %v1511
        %1533 = vst.msk [vmem:[#allocation2 + $0x80] sm:$0xff] %vm1481, %v1513
        %1534 = vst.msk [vmem:[#allocation2 + $0xa8] sm:$0xff] %vm1481, %v1515
        %1535 = vst.msk [vmem:[#allocation2 + $0xd0] sm:$0xff] %vm1481, %v1517
        %1536 = vst.msk [vmem:[#allocation2 + $0xf8] sm:$0xff] %vm1481, %v1519
        %1537 = vst.msk [vmem:[#allocation2 + $0x120] sm:$0xff] %vm1481, %v1521
        %1538 = vst.msk [vmem:[#allocation2 + $0x10] sm:$0xff] %vm1440, %v1282
        %1539 = vst.msk [vmem:[#allocation2 + $0x38] sm:$0xff] %vm1440, %v1285
        %1540 = vst.msk [vmem:[#allocation2 + $0x60] sm:$0xff] %vm1440, %v1290
        %1541 = vst.msk [vmem:[#allocation2 + $0x88] sm:$0xff] %vm1440, %v1293
        %1542 = vst.msk [vmem:[#allocation2 + $0xb0] sm:$0xff] %vm1440, %v1298
        %1543 = vst.msk [vmem:[#allocation2 + $0xd8] sm:$0xff] %vm1440, %v1301
        %1544 = vst.msk [vmem:[#allocation2 + $0x100] sm:$0xff] %vm1440, %v1306
        %1545 = vst.msk [vmem:[#allocation2 + $0x128] sm:$0xff] %vm1440, %v1309
        %1554 = vrot.lane.b32.xlu0 %v1314, 64
        %v1555 = vpop.permute.xlu0 %1554
        %1556 = vrot.lane.b32.xlu0 %v1317, 64
        %v1557 = vpop.permute.xlu0 %1556
        %1558 = vrot.lane.b32.xlu0 %v1322, 64
        %v1559 = vpop.permute.xlu0 %1558
        %1560 = vrot.lane.b32.xlu0 %v1325, 64
        %v1561 = vpop.permute.xlu0 %1560
        %1562 = vrot.lane.b32.xlu0 %v1330, 64
        %v1563 = vpop.permute.xlu0 %1562
        %1564 = vrot.lane.b32.xlu0 %v1333, 64
        %v1565 = vpop.permute.xlu0 %1564
        %1566 = vrot.lane.b32.xlu0 %v1338, 64
        %v1567 = vpop.permute.xlu0 %1566
        %1568 = vrot.lane.b32.xlu0 %v1341, 64
        %v1569 = vpop.permute.xlu0 %1568
        %1578 = vst.msk [vmem:[#allocation2 + $0x10] sm:$0xff] %vm1481, %v1555
        %1579 = vst.msk [vmem:[#allocation2 + $0x38] sm:$0xff] %vm1481, %v1557
        %1580 = vst.msk [vmem:[#allocation2 + $0x60] sm:$0xff] %vm1481, %v1559
        %1581 = vst.msk [vmem:[#allocation2 + $0x88] sm:$0xff] %vm1481, %v1561
        %1582 = vst.msk [vmem:[#allocation2 + $0xb0] sm:$0xff] %vm1481, %v1563
        %1583 = vst.msk [vmem:[#allocation2 + $0xd8] sm:$0xff] %vm1481, %v1565
        %1584 = vst.msk [vmem:[#allocation2 + $0x100] sm:$0xff] %vm1481, %v1567
        %1585 = vst.msk [vmem:[#allocation2 + $0x128] sm:$0xff] %vm1481, %v1569
        %1586 = vst.msk [vmem:[#allocation2 + $0x18] sm:$0xff] %vm1440, %v1346
        %1587 = vst.msk [vmem:[#allocation2 + $0x40] sm:$0xff] %vm1440, %v1349
        %1588 = vst.msk [vmem:[#allocation2 + $0x68] sm:$0xff] %vm1440, %v1354
        %1589 = vst.msk [vmem:[#allocation2 + $0x90] sm:$0xff] %vm1440, %v1357
        %1590 = vst.msk [vmem:[#allocation2 + $0xb8] sm:$0xff] %vm1440, %v1362
        %1591 = vst.msk [vmem:[#allocation2 + $0xe0] sm:$0xff] %vm1440, %v1365
        %1592 = vst.msk [vmem:[#allocation2 + $0x108] sm:$0xff] %vm1440, %v1370
        %1593 = vst.msk [vmem:[#allocation2 + $0x130] sm:$0xff] %vm1440, %v1373
        %1602 = vrot.lane.b32.xlu0 %v1378, 64
        %v1603 = vpop.permute.xlu0 %1602
        %1604 = vrot.lane.b32.xlu0 %v1381, 64
        %v1605 = vpop.permute.xlu0 %1604
        %1606 = vrot.lane.b32.xlu0 %v1386, 64
        %v1607 = vpop.permute.xlu0 %1606
        %1608 = vrot.lane.b32.xlu0 %v1389, 64
        %v1609 = vpop.permute.xlu0 %1608
        %1610 = vrot.lane.b32.xlu0 %v1394, 64
        %v1611 = vpop.permute.xlu0 %1610
        %1612 = vrot.lane.b32.xlu0 %v1397, 64
        %v1613 = vpop.permute.xlu0 %1612
        %1614 = vrot.lane.b32.xlu0 %v1402, 64
        %v1615 = vpop.permute.xlu0 %1614
        %1616 = vrot.lane.b32.xlu0 %v1405, 64
        %v1617 = vpop.permute.xlu0 %1616
        %1626 = vst.msk [vmem:[#allocation2 + $0x18] sm:$0xff] %vm1481, %v1603
        %1627 = vst.msk [vmem:[#allocation2 + $0x40] sm:$0xff] %vm1481, %v1605
        %1628 = vst.msk [vmem:[#allocation2 + $0x68] sm:$0xff] %vm1481, %v1607
        %1629 = vst.msk [vmem:[#allocation2 + $0x90] sm:$0xff] %vm1481, %v1609
        %1630 = vst.msk [vmem:[#allocation2 + $0xb8] sm:$0xff] %vm1481, %v1611
        %1631 = vst.msk [vmem:[#allocation2 + $0xe0] sm:$0xff] %vm1481, %v1613
        %1632 = vst.msk [vmem:[#allocation2 + $0x108] sm:$0xff] %vm1481, %v1615
        %1633 = vst.msk [vmem:[#allocation2 + $0x130] sm:$0xff] %vm1481, %v1617
        %1634 = vst.msk [vmem:[#allocation2 + $0x20] sm:$0xff] %vm1440, %v1410
        %1635 = vst.msk [vmem:[#allocation2 + $0x48] sm:$0xff] %vm1440, %v1413
        %1636 = vst.msk [vmem:[#allocation2 + $0x70] sm:$0xff] %vm1440, %v1418
        %1637 = vst.msk [vmem:[#allocation2 + $0x98] sm:$0xff] %vm1440, %v1421
        %1638 = vst.msk [vmem:[#allocation2 + $0xc0] sm:$0xff] %vm1440, %v1426
        %1639 = vst.msk [vmem:[#allocation2 + $0xe8] sm:$0xff] %vm1440, %v1429
        %1640 = vst.msk [vmem:[#allocation2 + $0x110] sm:$0xff] %vm1440, %v1434
        %1641 = vst.msk [vmem:[#allocation2 + $0x138] sm:$0xff] %vm1440, %v1437
        %s1642 = scalar_lea.vmem %s520, 2
        %v1643 = vld [vmem:[%s1642] sm:$0x3]
        %v1645 = vlaneseq
        %v1646 = vshrl.u32 %v1645, 7
        %v1647 = vsub.s32 0, %v1646
        %v1648 = vrot.slane %v1643, %v1647
        %v1649 = vlaneseq
        %v1650 = vshrl.u32 %v1649, 7
        %v1651 = vsub.s32 1, %v1650
        %v1652 = vrot.slane %v1643, %v1651
        %v1655 = vmul.f32 %v1648, %v626
        %v1656 = vmul.f32 %v1652, %v626
        %v1657 = vmul.f32 %v1648, %v631
        %v1658 = vmul.f32 %v1652, %v631
        %v1659 = vmul.f32 %v1648, %v636
        %v1660 = vmul.f32 %v1652, %v636
        %v1661 = vmul.f32 %v1648, %v641
        %v1662 = vmul.f32 %v1652, %v641
        %v1663 = vmul.f32 %v1648, %v646
        %v1664 = vmul.f32 %v1652, %v646
        %v1665 = vmul.f32 %v1648, %v651
        %v1666 = vmul.f32 %v1652, %v651
        %v1667 = vmul.f32 %v1648, %v656
        %v1668 = vmul.f32 %v1652, %v656
        %v1669 = vmul.f32 %v1648, %v661
        %v1670 = vmul.f32 %v1652, %v661
        %v1671 = vadd.f32 %v682, %v1655
        %v1672 = vadd.f32 %v682, %v1656
        %v1673 = vadd.f32 %v687, %v1657
        %v1674 = vadd.f32 %v687, %v1658
        %v1675 = vadd.f32 %v692, %v1659
        %v1676 = vadd.f32 %v692, %v1660
        %v1677 = vadd.f32 %v697, %v1661
        %v1678 = vadd.f32 %v697, %v1662
        %v1679 = vadd.f32 %v702, %v1663
        %v1680 = vadd.f32 %v702, %v1664
        %v1681 = vadd.f32 %v707, %v1665
        %v1682 = vadd.f32 %v707, %v1666
        %v1683 = vadd.f32 %v712, %v1667
        %v1684 = vadd.f32 %v712, %v1668
        %v1685 = vadd.f32 %v717, %v1669
        %v1686 = vadd.f32 %v717, %v1670
        %v1687 = vmax.f32 %v1671, 0.0
        %v1688 = vmax.f32 %v1672, 0.0
        %v1689 = vmax.f32 %v1673, 0.0
        %v1690 = vmax.f32 %v1674, 0.0
        %v1691 = vmax.f32 %v1675, 0.0
        %v1692 = vmax.f32 %v1676, 0.0
        %v1693 = vmax.f32 %v1677, 0.0
        %v1694 = vmax.f32 %v1678, 0.0
        %v1695 = vmax.f32 %v1679, 0.0
        %v1696 = vmax.f32 %v1680, 0.0
        %v1697 = vmax.f32 %v1681, 0.0
        %v1698 = vmax.f32 %v1682, 0.0
        %v1699 = vmax.f32 %v1683, 0.0
        %v1700 = vmax.f32 %v1684, 0.0
        %v1701 = vmax.f32 %v1685, 0.0
        %v1702 = vmax.f32 %v1686, 0.0
        %v1703 = vpack.c.bf16 %v1689, %v1687
        %v1704 = vpack.c.bf16 %v1690, %v1688
        %v1705 = vpack.c.bf16 %v1693, %v1691
        %v1706 = vpack.c.bf16 %v1694, %v1692
        %v1707 = vpack.c.bf16 %v1697, %v1695
        %v1708 = vpack.c.bf16 %v1698, %v1696
        %v1709 = vpack.c.bf16 %v1701, %v1699
        %v1710 = vpack.c.bf16 %v1702, %v1700
        %1711 = vmatprep.subr.bf16.mxu0 %v1704
        %1712 = vmatpush1.bf16.xpose.msra.mxu0 %v1703
        %1713 = vmatprep.subr.bf16.mxu0 %v1706
        %1714 = vmatpush1.bf16.xpose.msra.mxu0 %v1705
        %1715 = vmatprep.subr.bf16.mxu0 %v1708
        %1716 = vmatpush1.bf16.xpose.msra.mxu0 %v1707
        %1717 = vmatprep.subr.bf16.mxu0 %v1710
        %1718 = vmatpush1.bf16.xpose.msra.mxu0 %v1709
        %1719 = vmatprep.subr.bf16.mxu0 0
        %1720 = vmatpush1.bf16.xpose.msra.mxu0 0
        %1721 = vmatprep.subr.bf16.mxu0 0
        %1722 = vmatpush1.bf16.xpose.msra.mxu0 0
        %1723 = vmatprep.subr.bf16.mxu0 0
        %1724 = vmatpush1.bf16.xpose.msra.mxu0 0
        %1725 = vmatprep.subr.bf16.mxu0 0
        %1726 = vmatpush1.bf16.xpose.msra.mxu0 0
        %1727 = vmatprep.subr.bf16.mxu0 0
        %1728 = vmatpush1.bf16.xpose.msra.mxu0 0
        %1729 = vmatprep.subr.bf16.mxu0 0
        %1730 = vmatpush1.bf16.xpose.msra.mxu0 0
        %1731 = vmatprep.subr.bf16.mxu0 0
        %1732 = vmatpush1.bf16.xpose.msra.mxu0 0
        %1733 = vmatprep.subr.bf16.mxu0 0
        %1734 = vmatpush1.bf16.xpose.msra.mxu0 0
        %1735 = vmatprep.subr.bf16.mxu0 0
        %1736 = vmatpush1.bf16.xpose.msra.mxu0 0
        %1737 = vmatprep.subr.bf16.mxu0 0
        %1738 = vmatpush1.bf16.xpose.msra.mxu0 0
        %1739 = vmatprep.subr.bf16.mxu0 0
        %1740 = vmatpush1.bf16.xpose.msra.mxu0 0
        %1741 = vmatprep.subr.bf16.mxu0 0
        %1742 = vmatpush1.bf16.xpose.msra.mxu0 0
        %1743 = vmatprep.mubr.bf16.mxu0 %v976
        %1744 = vmatmul.mubr.bf16.gmra.mrb[0].mxu0 %v975
        %v1745 = vpop.f32.mrb[0].mxu0
        %v1746 = vadd.f32 0.0, %v1745
        %v1747 = vpop.f32.mrb[0].mxu0
        %v1748 = vpop.f32.mrb[0].mxu0
        %v1749 = vadd.f32 0.0, %v1748
        %v1750 = vpop.f32.mrb[0].mxu0
        %1751 = vmatprep.mubr.bf16.mxu0 %v978
        %1752 = vmatmul.mubr.bf16.gmra.mrb[0].mxu0 %v977
        %v1753 = vpop.f32.mrb[0].mxu0
        %v1754 = vadd.f32 0.0, %v1753
        %v1755 = vpop.f32.mrb[0].mxu0
        %v1756 = vpop.f32.mrb[0].mxu0
        %v1757 = vadd.f32 0.0, %v1756
        %v1758 = vpop.f32.mrb[0].mxu0
        %1759 = vmatprep.mubr.bf16.mxu0 %v980
        %1760 = vmatmul.mubr.bf16.gmra.mrb[0].mxu0 %v979
        %v1761 = vpop.f32.mrb[0].mxu0
        %v1762 = vadd.f32 0.0, %v1761
        %v1763 = vpop.f32.mrb[0].mxu0
        %v1764 = vpop.f32.mrb[0].mxu0
        %v1765 = vadd.f32 0.0, %v1764
        %v1766 = vpop.f32.mrb[0].mxu0
        %1767 = vmatprep.mubr.bf16.mxu0 %v982
        %1768 = vmatmul.mubr.bf16.gmra.mrb[0].mxu0 %v981
        %v1769 = vpop.f32.mrb[0].mxu0
        %v1770 = vadd.f32 0.0, %v1769
        %v1771 = vpop.f32.mrb[0].mxu0
        %v1772 = vpop.f32.mrb[0].mxu0
        %v1773 = vadd.f32 0.0, %v1772
        %v1774 = vpop.f32.mrb[0].mxu0
        %1775 = vmatprep.mubr.bf16.mxu0 %v984
        %1776 = vmatmul.mubr.bf16.gmra.mrb[0].mxu0 %v983
        %v1777 = vpop.f32.mrb[0].mxu0
        %v1778 = vadd.f32 0.0, %v1777
        %v1779 = vpop.f32.mrb[0].mxu0
        %v1780 = vpop.f32.mrb[0].mxu0
        %v1781 = vadd.f32 0.0, %v1780
        %v1782 = vpop.f32.mrb[0].mxu0
        %1783 = vmatprep.mubr.bf16.mxu0 %v986
        %1784 = vmatmul.mubr.bf16.gmra.mrb[0].mxu0 %v985
        %v1785 = vpop.f32.mrb[0].mxu0
        %v1786 = vadd.f32 0.0, %v1785
        %v1787 = vpop.f32.mrb[0].mxu0
        %v1788 = vpop.f32.mrb[0].mxu0
        %v1789 = vadd.f32 0.0, %v1788
        %v1790 = vpop.f32.mrb[0].mxu0
        %1791 = vmatprep.mubr.bf16.mxu0 %v988
        %1792 = vmatmul.mubr.bf16.gmra.mrb[0].mxu0 %v987
        %v1793 = vpop.f32.mrb[0].mxu0
        %v1794 = vadd.f32 0.0, %v1793
        %v1795 = vpop.f32.mrb[0].mxu0
        %v1796 = vpop.f32.mrb[0].mxu0
        %v1797 = vadd.f32 0.0, %v1796
        %v1798 = vpop.f32.mrb[0].mxu0
        %1799 = vmatprep.mubr.bf16.mxu0 %v990
        %1800 = vmatmul.mubr.bf16.gmra.mrb[0].mxu0 %v989
        %v1801 = vpop.f32.mrb[0].mxu0
        %v1802 = vadd.f32 0.0, %v1801
        %v1803 = vpop.f32.mrb[0].mxu0
        %v1804 = vpop.f32.mrb[0].mxu0
        %v1805 = vadd.f32 0.0, %v1804
        %v1806 = vpop.f32.mrb[0].mxu0
        %1807 = vmatprep.mubr.bf16.mxu0 %v992
        %1808 = vmatmul.mubr.bf16.gmra.mrb[0].mxu0 %v991
        %v1809 = vpop.f32.mrb[0].mxu0
        %v1810 = vadd.f32 0.0, %v1809
        %v1811 = vpop.f32.mrb[0].mxu0
        %v1812 = vpop.f32.mrb[0].mxu0
        %v1813 = vadd.f32 0.0, %v1812
        %v1814 = vpop.f32.mrb[0].mxu0
        %1815 = vmatprep.mubr.bf16.mxu0 %v994
        %1816 = vmatmul.mubr.bf16.gmra.mrb[0].mxu0 %v993
        %v1817 = vpop.f32.mrb[0].mxu0
        %v1818 = vadd.f32 0.0, %v1817
        %v1819 = vpop.f32.mrb[0].mxu0
        %v1820 = vpop.f32.mrb[0].mxu0
        %v1821 = vadd.f32 0.0, %v1820
        %v1822 = vpop.f32.mrb[0].mxu0
        %1823 = vmatprep.mubr.bf16.mxu0 %v996
        %1824 = vmatmul.mubr.bf16.gmra.mrb[0].mxu0 %v995
        %v1825 = vpop.f32.mrb[0].mxu0
        %v1826 = vadd.f32 0.0, %v1825
        %v1827 = vpop.f32.mrb[0].mxu0
        %v1828 = vpop.f32.mrb[0].mxu0
        %v1829 = vadd.f32 0.0, %v1828
        %v1830 = vpop.f32.mrb[0].mxu0
        %1831 = vmatprep.mubr.bf16.mxu0 %v998
        %1832 = vmatmul.mubr.bf16.gmra.mrb[0].mxu0 %v997
        %v1833 = vpop.f32.mrb[0].mxu0
        %v1834 = vadd.f32 0.0, %v1833
        %v1835 = vpop.f32.mrb[0].mxu0
        %v1836 = vpop.f32.mrb[0].mxu0
        %v1837 = vadd.f32 0.0, %v1836
        %v1838 = vpop.f32.mrb[0].mxu0
        %1839 = vmatprep.mubr.bf16.mxu0 %v1000
        %1840 = vmatmul.mubr.bf16.gmra.mrb[0].mxu0 %v999
        %v1841 = vpop.f32.mrb[0].mxu0
        %v1842 = vadd.f32 0.0, %v1841
        %v1843 = vpop.f32.mrb[0].mxu0
        %v1844 = vpop.f32.mrb[0].mxu0
        %v1845 = vadd.f32 0.0, %v1844
        %v1846 = vpop.f32.mrb[0].mxu0
        %1847 = vmatprep.mubr.bf16.mxu0 %v1002
        %1848 = vmatmul.mubr.bf16.gmra.mrb[0].mxu0 %v1001
        %v1849 = vpop.f32.mrb[0].mxu0
        %v1850 = vadd.f32 0.0, %v1849
        %v1851 = vpop.f32.mrb[0].mxu0
        %v1852 = vpop.f32.mrb[0].mxu0
        %v1853 = vadd.f32 0.0, %v1852
        %v1854 = vpop.f32.mrb[0].mxu0
        %1855 = vmatprep.mubr.bf16.mxu0 %v1004
        %1856 = vmatmul.mubr.bf16.gmra.mrb[0].mxu0 %v1003
        %v1857 = vpop.f32.mrb[0].mxu0
        %v1858 = vadd.f32 0.0, %v1857
        %v1859 = vpop.f32.mrb[0].mxu0
        %v1860 = vpop.f32.mrb[0].mxu0
        %v1861 = vadd.f32 0.0, %v1860
        %v1862 = vpop.f32.mrb[0].mxu0
        %1863 = vmatprep.mubr.bf16.mxu0 %v1006
        %1864 = vmatmul.mubr.bf16.gmra.mrb[0].mxu0 %v1005
        %v1865 = vpop.f32.mrb[0].mxu0
        %v1866 = vadd.f32 0.0, %v1865
        %v1867 = vpop.f32.mrb[0].mxu0
        %v1868 = vpop.f32.mrb[0].mxu0
        %v1869 = vadd.f32 0.0, %v1868
        %v1870 = vpop.f32.mrb[0].mxu0
        %1871 = vmatprep.mubr.bf16.mxu0 %v1008
        %1872 = vmatmul.mubr.bf16.gmra.mrb[0].mxu0 %v1007
        %v1873 = vpop.f32.mrb[0].mxu0
        %v1874 = vadd.f32 0.0, %v1873
        %v1875 = vpop.f32.mrb[0].mxu0
        %v1876 = vpop.f32.mrb[0].mxu0
        %v1877 = vadd.f32 0.0, %v1876
        %v1878 = vpop.f32.mrb[0].mxu0
        %1879 = vmatprep.mubr.bf16.mxu0 %v1010
        %1880 = vmatmul.mubr.bf16.gmra.mrb[0].mxu0 %v1009
        %v1881 = vpop.f32.mrb[0].mxu0
        %v1882 = vadd.f32 0.0, %v1881
        %v1883 = vpop.f32.mrb[0].mxu0
        %v1884 = vpop.f32.mrb[0].mxu0
        %v1885 = vadd.f32 0.0, %v1884
        %v1886 = vpop.f32.mrb[0].mxu0
        %1887 = vmatprep.mubr.bf16.mxu0 %v1012
        %1888 = vmatmul.mubr.bf16.gmra.mrb[0].mxu0 %v1011
        %v1889 = vpop.f32.mrb[0].mxu0
        %v1890 = vadd.f32 0.0, %v1889
        %v1891 = vpop.f32.mrb[0].mxu0
        %v1892 = vpop.f32.mrb[0].mxu0
        %v1893 = vadd.f32 0.0, %v1892
        %v1894 = vpop.f32.mrb[0].mxu0
        %1895 = vmatprep.mubr.bf16.mxu0 %v1014
        %1896 = vmatmul.mubr.bf16.gmra.mrb[0].mxu0 %v1013
        %v1897 = vpop.f32.mrb[0].mxu0
        %v1898 = vadd.f32 0.0, %v1897
        %v1899 = vpop.f32.mrb[0].mxu0
        %v1900 = vpop.f32.mrb[0].mxu0
        %v1901 = vadd.f32 0.0, %v1900
        %v1902 = vpop.f32.mrb[0].mxu0
        %1903 = vmatprep.mubr.bf16.mxu0 %v1016
        %1904 = vmatmul.mubr.bf16.gmra.mrb[0].mxu0 %v1015
        %v1905 = vpop.f32.mrb[0].mxu0
        %v1906 = vadd.f32 0.0, %v1905
        %v1907 = vpop.f32.mrb[0].mxu0
        %v1908 = vpop.f32.mrb[0].mxu0
        %v1909 = vadd.f32 0.0, %v1908
        %v1910 = vpop.f32.mrb[0].mxu0
        %1911 = vmatprep.mubr.bf16.mxu0 %v1018
        %1912 = vmatmul.mubr.bf16.gmra.mrb[0].mxu0 %v1017
        %v1913 = vpop.f32.mrb[0].mxu0
        %v1914 = vadd.f32 0.0, %v1913
        %v1915 = vpop.f32.mrb[0].mxu0
        %v1916 = vpop.f32.mrb[0].mxu0
        %v1917 = vadd.f32 0.0, %v1916
        %v1918 = vpop.f32.mrb[0].mxu0
        %1919 = vmatprep.mubr.bf16.mxu0 %v1020
        %1920 = vmatmul.mubr.bf16.gmra.mrb[0].mxu0 %v1019
        %v1921 = vpop.f32.mrb[0].mxu0
        %v1922 = vadd.f32 0.0, %v1921
        %v1923 = vpop.f32.mrb[0].mxu0
        %v1924 = vpop.f32.mrb[0].mxu0
        %v1925 = vadd.f32 0.0, %v1924
        %v1926 = vpop.f32.mrb[0].mxu0
        %1927 = vmatprep.mubr.bf16.mxu0 %v1022
        %1928 = vmatmul.mubr.bf16.gmra.mrb[0].mxu0 %v1021
        %v1929 = vpop.f32.mrb[0].mxu0
        %v1930 = vadd.f32 0.0, %v1929
        %v1931 = vpop.f32.mrb[0].mxu0
        %v1932 = vpop.f32.mrb[0].mxu0
        %v1933 = vadd.f32 0.0, %v1932
        %v1934 = vpop.f32.mrb[0].mxu0
        %1935 = vmatprep.mubr.bf16.mxu0 %v1024
        %1936 = vmatmul.mubr.bf16.gmra.mrb[0].mxu0 %v1023
        %v1937 = vpop.f32.mrb[0].mxu0
        %v1938 = vadd.f32 0.0, %v1937
        %v1939 = vpop.f32.mrb[0].mxu0
        %v1940 = vpop.f32.mrb[0].mxu0
        %v1941 = vadd.f32 0.0, %v1940
        %v1942 = vpop.f32.mrb[0].mxu0
        %1943 = vmatprep.mubr.bf16.mxu0 %v1026
        %1944 = vmatmul.mubr.bf16.gmra.mrb[0].mxu0 %v1025
        %v1945 = vpop.f32.mrb[0].mxu0
        %v1946 = vadd.f32 0.0, %v1945
        %v1947 = vpop.f32.mrb[0].mxu0
        %v1948 = vpop.f32.mrb[0].mxu0
        %v1949 = vadd.f32 0.0, %v1948
        %v1950 = vpop.f32.mrb[0].mxu0
        %1951 = vmatprep.mubr.bf16.mxu0 %v1028
        %1952 = vmatmul.mubr.bf16.gmra.mrb[0].mxu0 %v1027
        %v1953 = vpop.f32.mrb[0].mxu0
        %v1954 = vadd.f32 0.0, %v1953
        %v1955 = vpop.f32.mrb[0].mxu0
        %v1956 = vpop.f32.mrb[0].mxu0
        %v1957 = vadd.f32 0.0, %v1956
        %v1958 = vpop.f32.mrb[0].mxu0
        %1959 = vmatprep.mubr.bf16.mxu0 %v1030
        %1960 = vmatmul.mubr.bf16.gmra.mrb[0].mxu0 %v1029
        %v1961 = vpop.f32.mrb[0].mxu0
        %v1962 = vadd.f32 0.0, %v1961
        %v1963 = vpop.f32.mrb[0].mxu0
        %v1964 = vpop.f32.mrb[0].mxu0
        %v1965 = vadd.f32 0.0, %v1964
        %v1966 = vpop.f32.mrb[0].mxu0
        %1967 = vmatprep.mubr.bf16.mxu0 %v1032
        %1968 = vmatmul.mubr.bf16.gmra.mrb[0].mxu0 %v1031
        %v1969 = vpop.f32.mrb[0].mxu0
        %v1970 = vadd.f32 0.0, %v1969
        %v1971 = vpop.f32.mrb[0].mxu0
        %v1972 = vpop.f32.mrb[0].mxu0
        %v1973 = vadd.f32 0.0, %v1972
        %v1974 = vpop.f32.mrb[0].mxu0
        %1975 = vmatprep.mubr.bf16.mxu0 %v1034
        %1976 = vmatmul.mubr.bf16.gmra.mrb[0].mxu0 %v1033
        %v1977 = vpop.f32.mrb[0].mxu0
        %v1978 = vadd.f32 0.0, %v1977
        %v1979 = vpop.f32.mrb[0].mxu0
        %v1980 = vpop.f32.mrb[0].mxu0
        %v1981 = vadd.f32 0.0, %v1980
        %v1982 = vpop.f32.mrb[0].mxu0
        %1983 = vmatprep.mubr.bf16.mxu0 %v1036
        %1984 = vmatmul.mubr.bf16.gmra.mrb[0].mxu0 %v1035
        %v1985 = vpop.f32.mrb[0].mxu0
        %v1986 = vadd.f32 0.0, %v1985
        %v1987 = vpop.f32.mrb[0].mxu0
        %v1988 = vpop.f32.mrb[0].mxu0
        %v1989 = vadd.f32 0.0, %v1988
        %v1990 = vpop.f32.mrb[0].mxu0
        %1991 = vmatprep.mubr.bf16.mxu0 %v1038
        %1992 = vmatmul.mubr.bf16.gmra.mrb[0].mxu0 %v1037
        %v1993 = vpop.f32.mrb[0].mxu0
        %v1994 = vadd.f32 0.0, %v1993
        %v1995 = vpop.f32.mrb[0].mxu0
        %v1996 = vpop.f32.mrb[0].mxu0
        %v1997 = vadd.f32 0.0, %v1996
        %v1998 = vpop.f32.mrb[0].mxu0
        %1999 = vmatprep.mubr.bf16.mxu0 %v1040
        %2000 = vmatmul.mubr.bf16.gmra.mrb[0].mxu0 %v1039
        %v2001 = vpop.f32.mrb[0].mxu0
        %v2002 = vadd.f32 0.0, %v2001
        %v2003 = vpop.f32.mrb[0].mxu0
        %v2004 = vpop.f32.mrb[0].mxu0
        %v2005 = vadd.f32 0.0, %v2004
        %v2006 = vpop.f32.mrb[0].mxu0
        %2007 = vmatprep.mubr.bf16.mxu0 %v1042
        %2008 = vmatmul.mubr.bf16.gmra.mrb[0].mxu0 %v1041
        %v2009 = vpop.f32.mrb[0].mxu0
        %v2010 = vadd.f32 0.0, %v2009
        %v2011 = vpop.f32.mrb[0].mxu0
        %v2012 = vpop.f32.mrb[0].mxu0
        %v2013 = vadd.f32 0.0, %v2012
        %v2014 = vpop.f32.mrb[0].mxu0
        %2015 = vmatprep.mubr.bf16.mxu0 %v1044
        %2016 = vmatmul.mubr.bf16.gmra.mrb[0].mxu0 %v1043
        %v2017 = vpop.f32.mrb[0].mxu0
        %v2018 = vadd.f32 0.0, %v2017
        %v2019 = vpop.f32.mrb[0].mxu0
        %v2020 = vpop.f32.mrb[0].mxu0
        %v2021 = vadd.f32 0.0, %v2020
        %v2022 = vpop.f32.mrb[0].mxu0
        %2023 = vmatprep.mubr.bf16.mxu0 %v1046
        %2024 = vmatmul.mubr.bf16.gmra.mrb[0].mxu0 %v1045
        %v2025 = vpop.f32.mrb[0].mxu0
        %v2026 = vadd.f32 0.0, %v2025
        %v2027 = vpop.f32.mrb[0].mxu0
        %v2028 = vpop.f32.mrb[0].mxu0
        %v2029 = vadd.f32 0.0, %v2028
        %v2030 = vpop.f32.mrb[0].mxu0
        %2031 = vdwg.mxu0
        %2032 = vst.msk [vmem:[#allocation2 + $0x140] sm:$0xff] %vm1440, %v1746
        %2033 = vst.msk [vmem:[#allocation2 + $0x168] sm:$0xff] %vm1440, %v1749
        %2034 = vst.msk [vmem:[#allocation2 + $0x190] sm:$0xff] %vm1440, %v1754
        %2035 = vst.msk [vmem:[#allocation2 + $0x1b8] sm:$0xff] %vm1440, %v1757
        %2036 = vst.msk [vmem:[#allocation2 + $0x1e0] sm:$0xff] %vm1440, %v1762
        %2037 = vst.msk [vmem:[#allocation2 + $0x208] sm:$0xff] %vm1440, %v1765
        %2038 = vst.msk [vmem:[#allocation2 + $0x230] sm:$0xff] %vm1440, %v1770
        %2039 = vst.msk [vmem:[#allocation2 + $0x258] sm:$0xff] %vm1440, %v1773
        %2048 = vrot.lane.b32.xlu0 %v1778, 64
        %v2049 = vpop.permute.xlu0 %2048
        %2050 = vrot.lane.b32.xlu0 %v1781, 64
        %v2051 = vpop.permute.xlu0 %2050
        %2052 = vrot.lane.b32.xlu0 %v1786, 64
        %v2053 = vpop.permute.xlu0 %2052
        %2054 = vrot.lane.b32.xlu0 %v1789, 64
        %v2055 = vpop.permute.xlu0 %2054
        %2056 = vrot.lane.b32.xlu0 %v1794, 64
        %v2057 = vpop.permute.xlu0 %2056
        %2058 = vrot.lane.b32.xlu0 %v1797, 64
        %v2059 = vpop.permute.xlu0 %2058
        %2060 = vrot.lane.b32.xlu0 %v1802, 64
        %v2061 = vpop.permute.xlu0 %2060
        %2062 = vrot.lane.b32.xlu0 %v1805, 64
        %v2063 = vpop.permute.xlu0 %2062
        %2072 = vst.msk [vmem:[#allocation2 + $0x140] sm:$0xff] %vm1481, %v2049
        %2073 = vst.msk [vmem:[#allocation2 + $0x168] sm:$0xff] %vm1481, %v2051
        %2074 = vst.msk [vmem:[#allocation2 + $0x190] sm:$0xff] %vm1481, %v2053
        %2075 = vst.msk [vmem:[#allocation2 + $0x1b8] sm:$0xff] %vm1481, %v2055
        %2076 = vst.msk [vmem:[#allocation2 + $0x1e0] sm:$0xff] %vm1481, %v2057
        %2077 = vst.msk [vmem:[#allocation2 + $0x208] sm:$0xff] %vm1481, %v2059
        %2078 = vst.msk [vmem:[#allocation2 + $0x230] sm:$0xff] %vm1481, %v2061
        %2079 = vst.msk [vmem:[#allocation2 + $0x258] sm:$0xff] %vm1481, %v2063
        %2080 = vst.msk [vmem:[#allocation2 + $0x148] sm:$0xff] %vm1440, %v1810
        %2081 = vst.msk [vmem:[#allocation2 + $0x170] sm:$0xff] %vm1440, %v1813
        %2082 = vst.msk [vmem:[#allocation2 + $0x198] sm:$0xff] %vm1440, %v1818
        %2083 = vst.msk [vmem:[#allocation2 + $0x1c0] sm:$0xff] %vm1440, %v1821
        %2084 = vst.msk [vmem:[#allocation2 + $0x1e8] sm:$0xff] %vm1440, %v1826
        %2085 = vst.msk [vmem:[#allocation2 + $0x210] sm:$0xff] %vm1440, %v1829
        %2086 = vst.msk [vmem:[#allocation2 + $0x238] sm:$0xff] %vm1440, %v1834
        %2087 = vst.msk [vmem:[#allocation2 + $0x260] sm:$0xff] %vm1440, %v1837
        %2096 = vrot.lane.b32.xlu0 %v1842, 64
        %v2097 = vpop.permute.xlu0 %2096
        %2098 = vrot.lane.b32.xlu0 %v1845, 64
        %v2099 = vpop.permute.xlu0 %2098
        %2100 = vrot.lane.b32.xlu0 %v1850, 64
        %v2101 = vpop.permute.xlu0 %2100
        %2102 = vrot.lane.b32.xlu0 %v1853, 64
        %v2103 = vpop.permute.xlu0 %2102
        %2104 = vrot.lane.b32.xlu0 %v1858, 64
        %v2105 = vpop.permute.xlu0 %2104
        %2106 = vrot.lane.b32.xlu0 %v1861, 64
        %v2107 = vpop.permute.xlu0 %2106
        %2108 = vrot.lane.b32.xlu0 %v1866, 64
        %v2109 = vpop.permute.xlu0 %2108
        %2110 = vrot.lane.b32.xlu0 %v1869, 64
        %v2111 = vpop.permute.xlu0 %2110
        %2120 = vst.msk [vmem:[#allocation2 + $0x148] sm:$0xff] %vm1481, %v2097
        %2121 = vst.msk [vmem:[#allocation2 + $0x170] sm:$0xff] %vm1481, %v2099
        %2122 = vst.msk [vmem:[#allocation2 + $0x198] sm:$0xff] %vm1481, %v2101
        %2123 = vst.msk [vmem:[#allocation2 + $0x1c0] sm:$0xff] %vm1481, %v2103
        %2124 = vst.msk [vmem:[#allocation2 + $0x1e8] sm:$0xff] %vm1481, %v2105
        %2125 = vst.msk [vmem:[#allocation2 + $0x210] sm:$0xff] %vm1481, %v2107
        %2126 = vst.msk [vmem:[#allocation2 + $0x238] sm:$0xff] %vm1481, %v2109
        %2127 = vst.msk [vmem:[#allocation2 + $0x260] sm:$0xff] %vm1481, %v2111
        %2128 = vst.msk [vmem:[#allocation2 + $0x150] sm:$0xff] %vm1440, %v1874
        %2129 = vst.msk [vmem:[#allocation2 + $0x178] sm:$0xff] %vm1440, %v1877
        %2130 = vst.msk [vmem:[#allocation2 + $0x1a0] sm:$0xff] %vm1440, %v1882
        %2131 = vst.msk [vmem:[#allocation2 + $0x1c8] sm:$0xff] %vm1440, %v1885
        %2132 = vst.msk [vmem:[#allocation2 + $0x1f0] sm:$0xff] %vm1440, %v1890
        %2133 = vst.msk [vmem:[#allocation2 + $0x218] sm:$0xff] %vm1440, %v1893
        %2134 = vst.msk [vmem:[#allocation2 + $0x240] sm:$0xff] %vm1440, %v1898
        %2135 = vst.msk [vmem:[#allocation2 + $0x268] sm:$0xff] %vm1440, %v1901
        %2144 = vrot.lane.b32.xlu0 %v1906, 64
        %v2145 = vpop.permute.xlu0 %2144
        %2146 = vrot.lane.b32.xlu0 %v1909, 64
        %v2147 = vpop.permute.xlu0 %2146
        %2148 = vrot.lane.b32.xlu0 %v1914, 64
        %v2149 = vpop.permute.xlu0 %2148
        %2150 = vrot.lane.b32.xlu0 %v1917, 64
        %v2151 = vpop.permute.xlu0 %2150
        %2152 = vrot.lane.b32.xlu0 %v1922, 64
        %v2153 = vpop.permute.xlu0 %2152
        %2154 = vrot.lane.b32.xlu0 %v1925, 64
        %v2155 = vpop.permute.xlu0 %2154
        %2156 = vrot.lane.b32.xlu0 %v1930, 64
        %v2157 = vpop.permute.xlu0 %2156
        %2158 = vrot.lane.b32.xlu0 %v1933, 64
        %v2159 = vpop.permute.xlu0 %2158
        %2168 = vst.msk [vmem:[#allocation2 + $0x150] sm:$0xff] %vm1481, %v2145
        %2169 = vst.msk [vmem:[#allocation2 + $0x178] sm:$0xff] %vm1481, %v2147
        %2170 = vst.msk [vmem:[#allocation2 + $0x1a0] sm:$0xff] %vm1481, %v2149
        %2171 = vst.msk [vmem:[#allocation2 + $0x1c8] sm:$0xff] %vm1481, %v2151
        %2172 = vst.msk [vmem:[#allocation2 + $0x1f0] sm:$0xff] %vm1481, %v2153
        %2173 = vst.msk [vmem:[#allocation2 + $0x218] sm:$0xff] %vm1481, %v2155
        %2174 = vst.msk [vmem:[#allocation2 + $0x240] sm:$0xff] %vm1481, %v2157
        %2175 = vst.msk [vmem:[#allocation2 + $0x268] sm:$0xff] %vm1481, %v2159
        %2176 = vst.msk [vmem:[#allocation2 + $0x158] sm:$0xff] %vm1440, %v1938
        %2177 = vst.msk [vmem:[#allocation2 + $0x180] sm:$0xff] %vm1440, %v1941
        %2178 = vst.msk [vmem:[#allocation2 + $0x1a8] sm:$0xff] %vm1440, %v1946
        %2179 = vst.msk [vmem:[#allocation2 + $0x1d0] sm:$0xff] %vm1440, %v1949
        %2180 = vst.msk [vmem:[#allocation2 + $0x1f8] sm:$0xff] %vm1440, %v1954
        %2181 = vst.msk [vmem:[#allocation2 + $0x220] sm:$0xff] %vm1440, %v1957
        %2182 = vst.msk [vmem:[#allocation2 + $0x248] sm:$0xff] %vm1440, %v1962
        %2183 = vst.msk [vmem:[#allocation2 + $0x270] sm:$0xff] %vm1440, %v1965
        %2192 = vrot.lane.b32.xlu0 %v1970, 64
        %v2193 = vpop.permute.xlu0 %2192
        %2194 = vrot.lane.b32.xlu0 %v1973, 64
        %v2195 = vpop.permute.xlu0 %2194
        %2196 = vrot.lane.b32.xlu0 %v1978, 64
        %v2197 = vpop.permute.xlu0 %2196
        %2198 = vrot.lane.b32.xlu0 %v1981, 64
        %v2199 = vpop.permute.xlu0 %2198
        %2200 = vrot.lane.b32.xlu0 %v1986, 64
        %v2201 = vpop.permute.xlu0 %2200
        %2202 = vrot.lane.b32.xlu0 %v1989, 64
        %v2203 = vpop.permute.xlu0 %2202
        %2204 = vrot.lane.b32.xlu0 %v1994, 64
        %v2205 = vpop.permute.xlu0 %2204
        %2206 = vrot.lane.b32.xlu0 %v1997, 64
        %v2207 = vpop.permute.xlu0 %2206
        %2216 = vst.msk [vmem:[#allocation2 + $0x158] sm:$0xff] %vm1481, %v2193
        %2217 = vst.msk [vmem:[#allocation2 + $0x180] sm:$0xff] %vm1481, %v2195
        %2218 = vst.msk [vmem:[#allocation2 + $0x1a8] sm:$0xff] %vm1481, %v2197
        %2219 = vst.msk [vmem:[#allocation2 + $0x1d0] sm:$0xff] %vm1481, %v2199
        %2220 = vst.msk [vmem:[#allocation2 + $0x1f8] sm:$0xff] %vm1481, %v2201
        %2221 = vst.msk [vmem:[#allocation2 + $0x220] sm:$0xff] %vm1481, %v2203
        %2222 = vst.msk [vmem:[#allocation2 + $0x248] sm:$0xff] %vm1481, %v2205
        %2223 = vst.msk [vmem:[#allocation2 + $0x270] sm:$0xff] %vm1481, %v2207
        %2224 = vst.msk [vmem:[#allocation2 + $0x160] sm:$0xff] %vm1440, %v2002
        %2225 = vst.msk [vmem:[#allocation2 + $0x188] sm:$0xff] %vm1440, %v2005
        %2226 = vst.msk [vmem:[#allocation2 + $0x1b0] sm:$0xff] %vm1440, %v2010
        %2227 = vst.msk [vmem:[#allocation2 + $0x1d8] sm:$0xff] %vm1440, %v2013
        %2228 = vst.msk [vmem:[#allocation2 + $0x200] sm:$0xff] %vm1440, %v2018
        %2229 = vst.msk [vmem:[#allocation2 + $0x228] sm:$0xff] %vm1440, %v2021
        %2230 = vst.msk [vmem:[#allocation2 + $0x250] sm:$0xff] %vm1440, %v2026
        %2231 = vst.msk [vmem:[#allocation2 + $0x278] sm:$0xff] %vm1440, %v2029
        %v2232 = vld [vmem:[#allocation2] sm:$0xff]
        %v2233 = vld [vmem:[#allocation2 + $0x8] sm:$0xff]
        %v2234 = vld [vmem:[#allocation2 + $0x10] sm:$0xff]
        %v2235 = vld [vmem:[#allocation2 + $0x18] sm:$0xff]
        %v2236 = vld [vmem:[#allocation2 + $0x20] sm:$0xff]
        %v2237 = vld [vmem:[#allocation2 + $0x28] sm:$0xff]
        %v2238 = vld [vmem:[#allocation2 + $0x30] sm:$0xff]
        %v2239 = vld [vmem:[#allocation2 + $0x38] sm:$0xff]
        %v2240 = vld [vmem:[#allocation2 + $0x40] sm:$0xff]
        %v2241 = vld [vmem:[#allocation2 + $0x48] sm:$0xff]
        %v2242 = vld [vmem:[#allocation2 + $0x50] sm:$0xff]
        %v2243 = vld [vmem:[#allocation2 + $0x58] sm:$0xff]
        %v2244 = vld [vmem:[#allocation2 + $0x60] sm:$0xff]
        %v2245 = vld [vmem:[#allocation2 + $0x68] sm:$0xff]
        %v2246 = vld [vmem:[#allocation2 + $0x70] sm:$0xff]
        %v2247 = vld [vmem:[#allocation2 + $0x78] sm:$0xff]
        %v2248 = vld [vmem:[#allocation2 + $0x80] sm:$0xff]
        %v2249 = vld [vmem:[#allocation2 + $0x88] sm:$0xff]
        %v2250 = vld [vmem:[#allocation2 + $0x90] sm:$0xff]
        %v2251 = vld [vmem:[#allocation2 + $0x98] sm:$0xff]
        %v2252 = vld [vmem:[#allocation2 + $0xa0] sm:$0xff]
        %v2253 = vld [vmem:[#allocation2 + $0xa8] sm:$0xff]
        %v2254 = vld [vmem:[#allocation2 + $0xb0] sm:$0xff]
        %v2255 = vld [vmem:[#allocation2 + $0xb8] sm:$0xff]
        %v2256 = vld [vmem:[#allocation2 + $0xc0] sm:$0xff]
        %v2257 = vld [vmem:[#allocation2 + $0xc8] sm:$0xff]
        %v2258 = vld [vmem:[#allocation2 + $0xd0] sm:$0xff]
        %v2259 = vld [vmem:[#allocation2 + $0xd8] sm:$0xff]
        %v2260 = vld [vmem:[#allocation2 + $0xe0] sm:$0xff]
        %v2261 = vld [vmem:[#allocation2 + $0xe8] sm:$0xff]
        %v2262 = vld [vmem:[#allocation2 + $0xf0] sm:$0xff]
        %v2263 = vld [vmem:[#allocation2 + $0xf8] sm:$0xff]
        %v2264 = vld [vmem:[#allocation2 + $0x100] sm:$0xff]
        %v2265 = vld [vmem:[#allocation2 + $0x108] sm:$0xff]
        %v2266 = vld [vmem:[#allocation2 + $0x110] sm:$0xff]
        %v2267 = vld [vmem:[#allocation2 + $0x118] sm:$0xff]
        %v2268 = vld [vmem:[#allocation2 + $0x120] sm:$0xff]
        %v2269 = vld [vmem:[#allocation2 + $0x128] sm:$0xff]
        %v2270 = vld [vmem:[#allocation2 + $0x130] sm:$0xff]
        %v2271 = vld [vmem:[#allocation2 + $0x138] sm:$0xff]
        %v2272 = vld [vmem:[#allocation2 + $0x140] sm:$0xff]
        %v2273 = vld [vmem:[#allocation2 + $0x148] sm:$0xff]
        %v2274 = vld [vmem:[#allocation2 + $0x150] sm:$0xff]
        %v2275 = vld [vmem:[#allocation2 + $0x158] sm:$0xff]
        %v2276 = vld [vmem:[#allocation2 + $0x160] sm:$0xff]
        %v2277 = vld [vmem:[#allocation2 + $0x168] sm:$0xff]
        %v2278 = vld [vmem:[#allocation2 + $0x170] sm:$0xff]
        %v2279 = vld [vmem:[#allocation2 + $0x178] sm:$0xff]
        %v2280 = vld [vmem:[#allocation2 + $0x180] sm:$0xff]
        %v2281 = vld [vmem:[#allocation2 + $0x188] sm:$0xff]
        %v2282 = vld [vmem:[#allocation2 + $0x190] sm:$0xff]
        %v2283 = vld [vmem:[#allocation2 + $0x198] sm:$0xff]
        %v2284 = vld [vmem:[#allocation2 + $0x1a0] sm:$0xff]
        %v2285 = vld [vmem:[#allocation2 + $0x1a8] sm:$0xff]
        %v2286 = vld [vmem:[#allocation2 + $0x1b0] sm:$0xff]
        %v2287 = vld [vmem:[#allocation2 + $0x1b8] sm:$0xff]
        %v2288 = vld [vmem:[#allocation2 + $0x1c0] sm:$0xff]
        %v2289 = vld [vmem:[#allocation2 + $0x1c8] sm:$0xff]
        %v2290 = vld [vmem:[#allocation2 + $0x1d0] sm:$0xff]
        %v2291 = vld [vmem:[#allocation2 + $0x1d8] sm:$0xff]
        %v2292 = vld [vmem:[#allocation2 + $0x1e0] sm:$0xff]
        %v2293 = vld [vmem:[#allocation2 + $0x1e8] sm:$0xff]
        %v2294 = vld [vmem:[#allocation2 + $0x1f0] sm:$0xff]
        %v2295 = vld [vmem:[#allocation2 + $0x1f8] sm:$0xff]
        %v2296 = vld [vmem:[#allocation2 + $0x200] sm:$0xff]
        %v2297 = vld [vmem:[#allocation2 + $0x208] sm:$0xff]
        %v2298 = vld [vmem:[#allocation2 + $0x210] sm:$0xff]
        %v2299 = vld [vmem:[#allocation2 + $0x218] sm:$0xff]
        %v2300 = vld [vmem:[#allocation2 + $0x220] sm:$0xff]
        %v2301 = vld [vmem:[#allocation2 + $0x228] sm:$0xff]
        %v2302 = vld [vmem:[#allocation2 + $0x230] sm:$0xff]
        %v2303 = vld [vmem:[#allocation2 + $0x238] sm:$0xff]
        %v2304 = vld [vmem:[#allocation2 + $0x240] sm:$0xff]
        %v2305 = vld [vmem:[#allocation2 + $0x248] sm:$0xff]
        %v2306 = vld [vmem:[#allocation2 + $0x250] sm:$0xff]
        %v2307 = vld [vmem:[#allocation2 + $0x258] sm:$0xff]
        %v2308 = vld [vmem:[#allocation2 + $0x260] sm:$0xff]
        %v2309 = vld [vmem:[#allocation2 + $0x268] sm:$0xff]
        %v2310 = vld [vmem:[#allocation2 + $0x270] sm:$0xff]
        %v2311 = vld [vmem:[#allocation2 + $0x278] sm:$0xff]
        %v2312 = vpack.c.bf16 %v2237, %v2232
        %v2313 = vpack.c.bf16 %v2238, %v2233
        %v2314 = vpack.c.bf16 %v2239, %v2234
        %v2315 = vpack.c.bf16 %v2240, %v2235
        %v2316 = vpack.c.bf16 %v2241, %v2236
        %v2317 = vpack.c.bf16 %v2247, %v2242
        %v2318 = vpack.c.bf16 %v2248, %v2243
        %v2319 = vpack.c.bf16 %v2249, %v2244
        %v2320 = vpack.c.bf16 %v2250, %v2245
        %v2321 = vpack.c.bf16 %v2251, %v2246
        %v2322 = vpack.c.bf16 %v2257, %v2252
        %v2323 = vpack.c.bf16 %v2258, %v2253
        %v2324 = vpack.c.bf16 %v2259, %v2254
        %v2325 = vpack.c.bf16 %v2260, %v2255
        %v2326 = vpack.c.bf16 %v2261, %v2256
        %v2327 = vpack.c.bf16 %v2267, %v2262
        %v2328 = vpack.c.bf16 %v2268, %v2263
        %v2329 = vpack.c.bf16 %v2269, %v2264
        %v2330 = vpack.c.bf16 %v2270, %v2265
        %v2331 = vpack.c.bf16 %v2271, %v2266
        %v2332 = vpack.c.bf16 %v2277, %v2272
        %v2333 = vpack.c.bf16 %v2278, %v2273
        %v2334 = vpack.c.bf16 %v2279, %v2274
        %v2335 = vpack.c.bf16 %v2280, %v2275
        %v2336 = vpack.c.bf16 %v2281, %v2276
        %v2337 = vpack.c.bf16 %v2287, %v2282
        %v2338 = vpack.c.bf16 %v2288, %v2283
        %v2339 = vpack.c.bf16 %v2289, %v2284
        %v2340 = vpack.c.bf16 %v2290, %v2285
        %v2341 = vpack.c.bf16 %v2291, %v2286
        %v2342 = vpack.c.bf16 %v2297, %v2292
        %v2343 = vpack.c.bf16 %v2298, %v2293
        %v2344 = vpack.c.bf16 %v2299, %v2294
        %v2345 = vpack.c.bf16 %v2300, %v2295
        %v2346 = vpack.c.bf16 %v2301, %v2296
        %v2347 = vpack.c.bf16 %v2307, %v2302
        %v2348 = vpack.c.bf16 %v2308, %v2303
        %v2349 = vpack.c.bf16 %v2309, %v2304
        %v2350 = vpack.c.bf16 %v2310, %v2305
        %v2351 = vpack.c.bf16 %v2311, %v2306
        %v2352 = vld [vmem:[%s4] sm:$0xf]
        %v2353 = vld [vmem:[%s4 + $0x4] sm:$0xf]
        %v2354 = vld [vmem:[%s4 + $0x8] sm:$0xf]
        %v2355 = vld [vmem:[%s4 + $0xc] sm:$0xf]
        %v2356 = vld [vmem:[%s4 + $0x10] sm:$0xf]
        %v2357 = vld [vmem:[%s4 + $0x14] sm:$0xf]
        %v2358 = vld [vmem:[%s4 + $0x18] sm:$0xf]
        %v2359 = vld [vmem:[%s4 + $0x1c] sm:$0xf]
        %v2360 = vld [vmem:[%s4 + $0x20] sm:$0xf]
        %v2361 = vld [vmem:[%s4 + $0x24] sm:$0xf]
        %v2362 = vld [vmem:[%s4 + $0x28] sm:$0xf]
        %v2363 = vld [vmem:[%s4 + $0x2c] sm:$0xf]
        %v2364 = vld [vmem:[%s4 + $0x30] sm:$0xf]
        %v2365 = vld [vmem:[%s4 + $0x34] sm:$0xf]
        %v2366 = vld [vmem:[%s4 + $0x38] sm:$0xf]
        %v2367 = vld [vmem:[%s4 + $0x3c] sm:$0xf]
        %v2368 = vld [vmem:[%s4 + $0x40] sm:$0xf]
        %v2369 = vld [vmem:[%s4 + $0x44] sm:$0xf]
        %v2370 = vld [vmem:[%s4 + $0x48] sm:$0xf]
        %v2371 = vld [vmem:[%s4 + $0x4c] sm:$0xf]
        %v2372 = vld [vmem:[%s4 + $0x50] sm:$0xf]
        %v2373 = vld [vmem:[%s4 + $0x54] sm:$0xf]
        %v2374 = vld [vmem:[%s4 + $0x58] sm:$0xf]
        %v2375 = vld [vmem:[%s4 + $0x5c] sm:$0xf]
        %v2376 = vld [vmem:[%s4 + $0x60] sm:$0xf]
        %v2377 = vld [vmem:[%s4 + $0x64] sm:$0xf]
        %v2378 = vld [vmem:[%s4 + $0x68] sm:$0xf]
        %v2379 = vld [vmem:[%s4 + $0x6c] sm:$0xf]
        %v2380 = vld [vmem:[%s4 + $0x70] sm:$0xf]
        %v2381 = vld [vmem:[%s4 + $0x74] sm:$0xf]
        %v2382 = vld [vmem:[%s4 + $0x78] sm:$0xf]
        %v2383 = vld [vmem:[%s4 + $0x7c] sm:$0xf]
        %v2384 = vld [vmem:[%s4 + $0x80] sm:$0xf]
        %v2385 = vld [vmem:[%s4 + $0x84] sm:$0xf]
        %v2386 = vld [vmem:[%s4 + $0x88] sm:$0xf]
        %v2387 = vld [vmem:[%s4 + $0x8c] sm:$0xf]
        %v2388 = vld [vmem:[%s4 + $0x90] sm:$0xf]
        %v2389 = vld [vmem:[%s4 + $0x94] sm:$0xf]
        %v2390 = vld [vmem:[%s4 + $0x98] sm:$0xf]
        %v2391 = vld [vmem:[%s4 + $0x9c] sm:$0xf]
        %v2392 = vld [vmem:[%s4 + $0xa0] sm:$0xf]
        %v2393 = vld [vmem:[%s4 + $0xa4] sm:$0xf]
        %v2394 = vld [vmem:[%s4 + $0xa8] sm:$0xf]
        %v2395 = vld [vmem:[%s4 + $0xac] sm:$0xf]
        %v2396 = vld [vmem:[%s4 + $0xb0] sm:$0xf]
        %v2397 = vld [vmem:[%s4 + $0xb4] sm:$0xf]
        %v2398 = vld [vmem:[%s4 + $0xb8] sm:$0xf]
        %v2399 = vld [vmem:[%s4 + $0xbc] sm:$0xf]
        %v2400 = vld [vmem:[%s4 + $0xc0] sm:$0xf]
        %v2401 = vld [vmem:[%s4 + $0xc4] sm:$0xf]
        %v2402 = vld [vmem:[%s4 + $0xc8] sm:$0xf]
        %v2403 = vld [vmem:[%s4 + $0xcc] sm:$0xf]
        %v2404 = vld [vmem:[%s4 + $0xd0] sm:$0xf]
        %v2405 = vld [vmem:[%s4 + $0xd4] sm:$0xf]
        %v2406 = vld [vmem:[%s4 + $0xd8] sm:$0xf]
        %v2407 = vld [vmem:[%s4 + $0xdc] sm:$0xf]
        %v2408 = vld [vmem:[%s4 + $0xe0] sm:$0xf]
        %v2409 = vld [vmem:[%s4 + $0xe4] sm:$0xf]
        %v2410 = vld [vmem:[%s4 + $0xe8] sm:$0xf]
        %v2411 = vld [vmem:[%s4 + $0xec] sm:$0xf]
        %v2412 = vld [vmem:[%s4 + $0xf0] sm:$0xf]
        %v2413 = vld [vmem:[%s4 + $0xf4] sm:$0xf]
        %v2414 = vld [vmem:[%s4 + $0xf8] sm:$0xf]
        %v2415 = vld [vmem:[%s4 + $0xfc] sm:$0xf]
        %v2416 = vld [vmem:[%s4 + $0x100] sm:$0xf]
        %v2417 = vld [vmem:[%s4 + $0x104] sm:$0xf]
        %v2418 = vld [vmem:[%s4 + $0x108] sm:$0xf]
        %v2419 = vld [vmem:[%s4 + $0x10c] sm:$0xf]
        %v2420 = vld [vmem:[%s4 + $0x110] sm:$0xf]
        %v2421 = vld [vmem:[%s4 + $0x114] sm:$0xf]
        %v2422 = vld [vmem:[%s4 + $0x118] sm:$0xf]
        %v2423 = vld [vmem:[%s4 + $0x11c] sm:$0xf]
        %v2424 = vld [vmem:[%s5] sm:$0x1]
        %v2426 = vlaneseq
        %v2427 = vshrl.u32 %v2426, 7
        %v2428 = vsub.s32 0, %v2427
        %v2429 = vrot.slane %v2424, %v2428
        %v2503 = vunpack.c.l.b16 %v2352
        %v2504 = vunpack.c.l.b16 %v2353
        %v2505 = vunpack.c.l.b16 %v2354
        %v2506 = vunpack.c.l.b16 %v2355
        %v2507 = vunpack.c.l.b16 %v2356
        %v2508 = vunpack.c.l.b16 %v2357
        %v2509 = vunpack.c.l.b16 %v2358
        %v2510 = vunpack.c.l.b16 %v2359
        %v2511 = vunpack.c.l.b16 %v2360
        %v2512 = vunpack.c.l.b16 %v2361
        %v2513 = vunpack.c.l.b16 %v2362
        %v2514 = vunpack.c.l.b16 %v2363
        %v2515 = vunpack.c.l.b16 %v2364
        %v2516 = vunpack.c.l.b16 %v2365
        %v2517 = vunpack.c.l.b16 %v2366
        %v2518 = vunpack.c.l.b16 %v2367
        %v2519 = vunpack.c.l.b16 %v2368
        %v2520 = vunpack.c.l.b16 %v2369
        %v2521 = vunpack.c.l.b16 %v2370
        %v2522 = vunpack.c.l.b16 %v2371
        %v2523 = vunpack.c.l.b16 %v2372
        %v2524 = vunpack.c.l.b16 %v2373
        %v2525 = vunpack.c.l.b16 %v2374
        %v2526 = vunpack.c.l.b16 %v2375
        %v2527 = vunpack.c.l.b16 %v2376
        %v2528 = vunpack.c.l.b16 %v2377
        %v2529 = vunpack.c.l.b16 %v2378
        %v2530 = vunpack.c.l.b16 %v2379
        %v2531 = vunpack.c.l.b16 %v2380
        %v2532 = vunpack.c.l.b16 %v2381
        %v2533 = vunpack.c.l.b16 %v2382
        %v2534 = vunpack.c.l.b16 %v2383
        %v2535 = vunpack.c.l.b16 %v2384
        %v2536 = vunpack.c.l.b16 %v2385
        %v2537 = vunpack.c.l.b16 %v2386
        %v2538 = vunpack.c.l.b16 %v2387
        %v2539 = vunpack.c.l.b16 %v2388
        %v2540 = vunpack.c.l.b16 %v2389
        %v2541 = vunpack.c.l.b16 %v2390
        %v2542 = vunpack.c.l.b16 %v2391
        %v2543 = vunpack.c.l.b16 %v2392
        %v2544 = vunpack.c.l.b16 %v2393
        %v2545 = vunpack.c.l.b16 %v2394
        %v2546 = vunpack.c.l.b16 %v2395
        %v2547 = vunpack.c.l.b16 %v2396
        %v2548 = vunpack.c.l.b16 %v2397
        %v2549 = vunpack.c.l.b16 %v2398
        %v2550 = vunpack.c.l.b16 %v2399
        %v2551 = vunpack.c.l.b16 %v2400
        %v2552 = vunpack.c.l.b16 %v2401
        %v2553 = vunpack.c.l.b16 %v2402
        %v2554 = vunpack.c.l.b16 %v2403
        %v2555 = vunpack.c.l.b16 %v2404
        %v2556 = vunpack.c.l.b16 %v2405
        %v2557 = vunpack.c.l.b16 %v2406
        %v2558 = vunpack.c.l.b16 %v2407
        %v2559 = vunpack.c.l.b16 %v2408
        %v2560 = vunpack.c.l.b16 %v2409
        %v2561 = vunpack.c.l.b16 %v2410
        %v2562 = vunpack.c.l.b16 %v2411
        %v2563 = vunpack.c.l.b16 %v2412
        %v2564 = vunpack.c.l.b16 %v2413
        %v2565 = vunpack.c.l.b16 %v2414
        %v2566 = vunpack.c.l.b16 %v2415
        %v2567 = vunpack.c.l.b16 %v2416
        %v2568 = vunpack.c.l.b16 %v2417
        %v2569 = vunpack.c.l.b16 %v2418
        %v2570 = vunpack.c.l.b16 %v2419
        %v2571 = vunpack.c.l.b16 %v2420
        %v2572 = vunpack.c.l.b16 %v2421
        %v2573 = vunpack.c.l.b16 %v2422
        %v2574 = vunpack.c.l.b16 %v2423
        %v2575 = vpack.c.b16 %v2504, %v2503
        %v2576 = vpack.c.b16 %v2506, %v2505
        %v2577 = vpack.c.b16 %v2508, %v2507
        %v2578 = vpack.c.b16 %v2510, %v2509
        %v2579 = vpack.c.b16 %v2512, %v2511
        %v2580 = vpack.c.b16 %v2514, %v2513
        %v2581 = vpack.c.b16 %v2516, %v2515
        %v2582 = vpack.c.b16 %v2518, %v2517
        %v2583 = vpack.c.b16 %v2520, %v2519
        %v2584 = vpack.c.b16 %v2522, %v2521
        %v2585 = vpack.c.b16 %v2524, %v2523
        %v2586 = vpack.c.b16 %v2526, %v2525
        %v2587 = vpack.c.b16 %v2528, %v2527
        %v2588 = vpack.c.b16 %v2530, %v2529
        %v2589 = vpack.c.b16 %v2532, %v2531
        %v2590 = vpack.c.b16 %v2534, %v2533
        %v2591 = vpack.c.b16 %v2536, %v2535
        %v2592 = vpack.c.b16 %v2538, %v2537
        %v2593 = vpack.c.b16 %v2540, %v2539
        %v2594 = vpack.c.b16 %v2542, %v2541
        %v2595 = vpack.c.b16 %v2544, %v2543
        %v2596 = vpack.c.b16 %v2546, %v2545
        %v2597 = vpack.c.b16 %v2548, %v2547
        %v2598 = vpack.c.b16 %v2550, %v2549
        %v2599 = vpack.c.b16 %v2552, %v2551
        %v2600 = vpack.c.b16 %v2554, %v2553
        %v2601 = vpack.c.b16 %v2556, %v2555
        %v2602 = vpack.c.b16 %v2558, %v2557
        %v2603 = vpack.c.b16 %v2560, %v2559
        %v2604 = vpack.c.b16 %v2562, %v2561
        %v2605 = vpack.c.b16 %v2564, %v2563
        %v2606 = vpack.c.b16 %v2566, %v2565
        %v2607 = vpack.c.b16 %v2568, %v2567
        %v2608 = vpack.c.b16 %v2570, %v2569
        %v2609 = vpack.c.b16 %v2572, %v2571
        %v2610 = vpack.c.b16 %v2574, %v2573
        %v2648 = vsel %vm1440, %v2316, 0
        %v2651 = vsel %vm1440, %v2321, 0
        %v2654 = vsel %vm1440, %v2326, 0
        %v2657 = vsel %vm1440, %v2331, 0
        %v2660 = vsel %vm1440, %v2336, 0
        %v2663 = vsel %vm1440, %v2341, 0
        %v2666 = vsel %vm1440, %v2346, 0
        %v2669 = vsel %vm1440, %v2351, 0
        %2671 = vmatprep.subr.bf16.mxu0 0
        %2672 = vmatpush1.bf16.msra.mxu0 %v2575
        %2673 = vmatprep.subr.bf16.mxu0 0
        %2674 = vmatpush1.bf16.msra.mxu0 %v2576
        %2675 = vmatprep.subr.bf16.mxu0 0
        %2676 = vmatpush1.bf16.msra.mxu0 %v2577
        %2677 = vmatprep.subr.bf16.mxu0 0
        %2678 = vmatpush1.bf16.msra.mxu0 %v2578
        %2679 = vmatprep.subr.bf16.mxu0 0
        %2680 = vmatpush1.bf16.msra.mxu0 %v2579
        %2681 = vmatprep.subr.bf16.mxu0 0
        %2682 = vmatpush1.bf16.msra.mxu0 %v2580
        %2683 = vmatprep.subr.bf16.mxu0 0
        %2684 = vmatpush1.bf16.msra.mxu0 %v2581
        %2685 = vmatprep.subr.bf16.mxu0 0
        %2686 = vmatpush1.bf16.msra.mxu0 %v2582
        %2687 = vmatprep.subr.bf16.mxu0 0
        %2688 = vmatpush1.bf16.msra.mxu0 %v2583
        %2689 = vmatprep.subr.bf16.mxu0 0
        %2690 = vmatpush1.bf16.msra.mxu0 %v2584
        %2691 = vmatprep.subr.bf16.mxu0 0
        %2692 = vmatpush1.bf16.msra.mxu0 %v2585
        %2693 = vmatprep.subr.bf16.mxu0 0
        %2694 = vmatpush1.bf16.msra.mxu0 %v2586
        %2695 = vmatprep.subr.bf16.mxu0 0
        %2696 = vmatpush1.bf16.msra.mxu0 %v2587
        %2697 = vmatprep.subr.bf16.mxu0 0
        %2698 = vmatpush1.bf16.msra.mxu0 %v2588
        %2699 = vmatprep.subr.bf16.mxu0 0
        %2700 = vmatpush1.bf16.msra.mxu0 %v2589
        %2701 = vmatprep.subr.bf16.mxu0 0
        %2702 = vmatpush1.bf16.msra.mxu0 %v2590
        %2703 = vmatprep.mubr.bf16.mxu0 %v2313
        %2704 = vmatmul.mubr.bf16.gmra.mrb[0].mxu0 %v2312
        %v2705 = vpop.f32.mrb[0].mxu0
        %v2706 = vadd.f32 %v2429, %v2705
        %v2707 = vpop.f32.mrb[0].mxu0
        %v2708 = vpop.f32.mrb[0].mxu0
        %v2709 = vadd.f32 %v2429, %v2708
        %v2710 = vpop.f32.mrb[0].mxu0
        %2711 = vmatprep.mubr.bf16.mxu0 %v2318
        %2712 = vmatmul.mubr.bf16.gmra.mrb[0].mxu0 %v2317
        %v2713 = vpop.f32.mrb[0].mxu0
        %v2714 = vadd.f32 %v2429, %v2713
        %v2715 = vpop.f32.mrb[0].mxu0
        %v2716 = vpop.f32.mrb[0].mxu0
        %v2717 = vadd.f32 %v2429, %v2716
        %v2718 = vpop.f32.mrb[0].mxu0
        %2719 = vmatprep.mubr.bf16.mxu0 %v2323
        %2720 = vmatmul.mubr.bf16.gmra.mrb[0].mxu0 %v2322
        %v2721 = vpop.f32.mrb[0].mxu0
        %v2722 = vadd.f32 %v2429, %v2721
        %v2723 = vpop.f32.mrb[0].mxu0
        %v2724 = vpop.f32.mrb[0].mxu0
        %v2725 = vadd.f32 %v2429, %v2724
        %v2726 = vpop.f32.mrb[0].mxu0
        %2727 = vmatprep.mubr.bf16.mxu0 %v2328
        %2728 = vmatmul.mubr.bf16.gmra.mrb[0].mxu0 %v2327
        %v2729 = vpop.f32.mrb[0].mxu0
        %v2730 = vadd.f32 %v2429, %v2729
        %v2731 = vpop.f32.mrb[0].mxu0
        %v2732 = vpop.f32.mrb[0].mxu0
        %v2733 = vadd.f32 %v2429, %v2732
        %v2734 = vpop.f32.mrb[0].mxu0
        %2735 = vmatprep.mubr.bf16.mxu0 %v2333
        %2736 = vmatmul.mubr.bf16.gmra.mrb[0].mxu0 %v2332
        %v2737 = vpop.f32.mrb[0].mxu0
        %v2738 = vadd.f32 %v2429, %v2737
        %v2739 = vpop.f32.mrb[0].mxu0
        %v2740 = vpop.f32.mrb[0].mxu0
        %v2741 = vadd.f32 %v2429, %v2740
        %v2742 = vpop.f32.mrb[0].mxu0
        %2743 = vmatprep.mubr.bf16.mxu0 %v2338
        %2744 = vmatmul.mubr.bf16.gmra.mrb[0].mxu0 %v2337
        %v2745 = vpop.f32.mrb[0].mxu0
        %v2746 = vadd.f32 %v2429, %v2745
        %v2747 = vpop.f32.mrb[0].mxu0
        %v2748 = vpop.f32.mrb[0].mxu0
        %v2749 = vadd.f32 %v2429, %v2748
        %v2750 = vpop.f32.mrb[0].mxu0
        %2751 = vmatprep.mubr.bf16.mxu0 %v2343
        %2752 = vmatmul.mubr.bf16.gmra.mrb[0].mxu0 %v2342
        %v2753 = vpop.f32.mrb[0].mxu0
        %v2754 = vadd.f32 %v2429, %v2753
        %v2755 = vpop.f32.mrb[0].mxu0
        %v2756 = vpop.f32.mrb[0].mxu0
        %v2757 = vadd.f32 %v2429, %v2756
        %v2758 = vpop.f32.mrb[0].mxu0
        %2759 = vmatprep.mubr.bf16.mxu0 %v2348
        %2760 = vmatmul.mubr.bf16.gmra.mrb[0].mxu0 %v2347
        %v2761 = vpop.f32.mrb[0].mxu0
        %v2762 = vadd.f32 %v2429, %v2761
        %v2763 = vpop.f32.mrb[0].mxu0
        %v2764 = vpop.f32.mrb[0].mxu0
        %v2765 = vadd.f32 %v2429, %v2764
        %v2766 = vpop.f32.mrb[0].mxu0
        %2767 = vdwg.mxu0
        %2768 = vmatprep.subr.bf16.mxu0 0
        %2769 = vmatpush1.bf16.msra.mxu0 %v2591
        %2770 = vmatprep.subr.bf16.mxu0 0
        %2771 = vmatpush1.bf16.msra.mxu0 %v2592
        %2772 = vmatprep.subr.bf16.mxu0 0
        %2773 = vmatpush1.bf16.msra.mxu0 %v2593
        %2774 = vmatprep.subr.bf16.mxu0 0
        %2775 = vmatpush1.bf16.msra.mxu0 %v2594
        %2776 = vmatprep.subr.bf16.mxu0 0
        %2777 = vmatpush1.bf16.msra.mxu0 %v2595
        %2778 = vmatprep.subr.bf16.mxu0 0
        %2779 = vmatpush1.bf16.msra.mxu0 %v2596
        %2780 = vmatprep.subr.bf16.mxu0 0
        %2781 = vmatpush1.bf16.msra.mxu0 %v2597
        %2782 = vmatprep.subr.bf16.mxu0 0
        %2783 = vmatpush1.bf16.msra.mxu0 %v2598
        %2784 = vmatprep.subr.bf16.mxu0 0
        %2785 = vmatpush1.bf16.msra.mxu0 %v2599
        %2786 = vmatprep.subr.bf16.mxu0 0
        %2787 = vmatpush1.bf16.msra.mxu0 %v2600
        %2788 = vmatprep.subr.bf16.mxu0 0
        %2789 = vmatpush1.bf16.msra.mxu0 %v2601
        %2790 = vmatprep.subr.bf16.mxu0 0
        %2791 = vmatpush1.bf16.msra.mxu0 %v2602
        %2792 = vmatprep.subr.bf16.mxu0 0
        %2793 = vmatpush1.bf16.msra.mxu0 %v2603
        %2794 = vmatprep.subr.bf16.mxu0 0
        %2795 = vmatpush1.bf16.msra.mxu0 %v2604
        %2796 = vmatprep.subr.bf16.mxu0 0
        %2797 = vmatpush1.bf16.msra.mxu0 %v2605
        %2798 = vmatprep.subr.bf16.mxu0 0
        %2799 = vmatpush1.bf16.msra.mxu0 %v2606
        %2800 = vmatprep.mubr.bf16.mxu0 %v2315
        %2801 = vmatmul.mubr.bf16.gmra.mrb[0].mxu0 %v2314
        %v2802 = vpop.f32.mrb[0].mxu0
        %v2803 = vadd.f32 %v2706, %v2802
        %v2804 = vpop.f32.mrb[0].mxu0
        %v2805 = vpop.f32.mrb[0].mxu0
        %v2806 = vadd.f32 %v2709, %v2805
        %v2807 = vpop.f32.mrb[0].mxu0
        %2808 = vmatprep.mubr.bf16.mxu0 %v2320
        %2809 = vmatmul.mubr.bf16.gmra.mrb[0].mxu0 %v2319
        %v2810 = vpop.f32.mrb[0].mxu0
        %v2811 = vadd.f32 %v2714, %v2810
        %v2812 = vpop.f32.mrb[0].mxu0
        %v2813 = vpop.f32.mrb[0].mxu0
        %v2814 = vadd.f32 %v2717, %v2813
        %v2815 = vpop.f32.mrb[0].mxu0
        %2816 = vmatprep.mubr.bf16.mxu0 %v2325
        %2817 = vmatmul.mubr.bf16.gmra.mrb[0].mxu0 %v2324
        %v2818 = vpop.f32.mrb[0].mxu0
        %v2819 = vadd.f32 %v2722, %v2818
        %v2820 = vpop.f32.mrb[0].mxu0
        %v2821 = vpop.f32.mrb[0].mxu0
        %v2822 = vadd.f32 %v2725, %v2821
        %v2823 = vpop.f32.mrb[0].mxu0
        %2824 = vmatprep.mubr.bf16.mxu0 %v2330
        %2825 = vmatmul.mubr.bf16.gmra.mrb[0].mxu0 %v2329
        %v2826 = vpop.f32.mrb[0].mxu0
        %v2827 = vadd.f32 %v2730, %v2826
        %v2828 = vpop.f32.mrb[0].mxu0
        %v2829 = vpop.f32.mrb[0].mxu0
        %v2830 = vadd.f32 %v2733, %v2829
        %v2831 = vpop.f32.mrb[0].mxu0
        %2832 = vmatprep.mubr.bf16.mxu0 %v2335
        %2833 = vmatmul.mubr.bf16.gmra.mrb[0].mxu0 %v2334
        %v2834 = vpop.f32.mrb[0].mxu0
        %v2835 = vadd.f32 %v2738, %v2834
        %v2836 = vpop.f32.mrb[0].mxu0
        %v2837 = vpop.f32.mrb[0].mxu0
        %v2838 = vadd.f32 %v2741, %v2837
        %v2839 = vpop.f32.mrb[0].mxu0
        %2840 = vmatprep.mubr.bf16.mxu0 %v2340
        %2841 = vmatmul.mubr.bf16.gmra.mrb[0].mxu0 %v2339
        %v2842 = vpop.f32.mrb[0].mxu0
        %v2843 = vadd.f32 %v2746, %v2842
        %v2844 = vpop.f32.mrb[0].mxu0
        %v2845 = vpop.f32.mrb[0].mxu0
        %v2846 = vadd.f32 %v2749, %v2845
        %v2847 = vpop.f32.mrb[0].mxu0
        %2848 = vmatprep.mubr.bf16.mxu0 %v2345
        %2849 = vmatmul.mubr.bf16.gmra.mrb[0].mxu0 %v2344
        %v2850 = vpop.f32.mrb[0].mxu0
        %v2851 = vadd.f32 %v2754, %v2850
        %v2852 = vpop.f32.mrb[0].mxu0
        %v2853 = vpop.f32.mrb[0].mxu0
        %v2854 = vadd.f32 %v2757, %v2853
        %v2855 = vpop.f32.mrb[0].mxu0
        %2856 = vmatprep.mubr.bf16.mxu0 %v2350
        %2857 = vmatmul.mubr.bf16.gmra.mrb[0].mxu0 %v2349
        %v2858 = vpop.f32.mrb[0].mxu0
        %v2859 = vadd.f32 %v2762, %v2858
        %v2860 = vpop.f32.mrb[0].mxu0
        %v2861 = vpop.f32.mrb[0].mxu0
        %v2862 = vadd.f32 %v2765, %v2861
        %v2863 = vpop.f32.mrb[0].mxu0
        %2864 = vdwg.mxu0
        %2865 = vmatprep.subr.bf16.mxu0 0
        %2866 = vmatpush1.bf16.msra.mxu0 %v2607
        %2867 = vmatprep.subr.bf16.mxu0 0
        %2868 = vmatpush1.bf16.msra.mxu0 %v2608
        %2869 = vmatprep.subr.bf16.mxu0 0
        %2870 = vmatpush1.bf16.msra.mxu0 %v2609
        %2871 = vmatprep.subr.bf16.mxu0 0
        %2872 = vmatpush1.bf16.msra.mxu0 %v2610
        %2873 = vmatprep.subr.bf16.mxu0 0
        %2874 = vmatpush1.bf16.msra.mxu0 0
        %2875 = vmatprep.subr.bf16.mxu0 0
        %2876 = vmatpush1.bf16.msra.mxu0 0
        %2877 = vmatprep.subr.bf16.mxu0 0
        %2878 = vmatpush1.bf16.msra.mxu0 0
        %2879 = vmatprep.subr.bf16.mxu0 0
        %2880 = vmatpush1.bf16.msra.mxu0 0
        %2881 = vmatprep.subr.bf16.mxu0 0
        %2882 = vmatpush1.bf16.msra.mxu0 0
        %2883 = vmatprep.subr.bf16.mxu0 0
        %2884 = vmatpush1.bf16.msra.mxu0 0
        %2885 = vmatprep.subr.bf16.mxu0 0
        %2886 = vmatpush1.bf16.msra.mxu0 0
        %2887 = vmatprep.subr.bf16.mxu0 0
        %2888 = vmatpush1.bf16.msra.mxu0 0
        %2889 = vmatprep.subr.bf16.mxu0 0
        %2890 = vmatpush1.bf16.msra.mxu0 0
        %2891 = vmatprep.subr.bf16.mxu0 0
        %2892 = vmatpush1.bf16.msra.mxu0 0
        %2893 = vmatprep.subr.bf16.mxu0 0
        %2894 = vmatpush1.bf16.msra.mxu0 0
        %2895 = vmatprep.subr.bf16.mxu0 0
        %2896 = vmatpush1.bf16.msra.mxu0 0
        %2897 = vmatprep.mubr.bf16.mxu0 0
        %2898 = vmatmul.mubr.bf16.gmra.mrb[0].mxu0 %v2648
        %v2899 = vpop.f32.mrb[0].mxu0
        %v2900 = vadd.f32 %v2803, %v2899
        %v2901 = vpop.f32.mrb[0].mxu0
        %v2902 = vpop.f32.mrb[0].mxu0
        %v2903 = vadd.f32 %v2806, %v2902
        %v2904 = vpop.f32.mrb[0].mxu0
        %2905 = vmatprep.mubr.bf16.mxu0 0
        %2906 = vmatmul.mubr.bf16.gmra.mrb[0].mxu0 %v2651
        %v2907 = vpop.f32.mrb[0].mxu0
        %v2908 = vadd.f32 %v2811, %v2907
        %v2909 = vpop.f32.mrb[0].mxu0
        %v2910 = vpop.f32.mrb[0].mxu0
        %v2911 = vadd.f32 %v2814, %v2910
        %v2912 = vpop.f32.mrb[0].mxu0
        %2913 = vmatprep.mubr.bf16.mxu0 0
        %2914 = vmatmul.mubr.bf16.gmra.mrb[0].mxu0 %v2654
        %v2915 = vpop.f32.mrb[0].mxu0
        %v2916 = vadd.f32 %v2819, %v2915
        %v2917 = vpop.f32.mrb[0].mxu0
        %v2918 = vpop.f32.mrb[0].mxu0
        %v2919 = vadd.f32 %v2822, %v2918
        %v2920 = vpop.f32.mrb[0].mxu0
        %2921 = vmatprep.mubr.bf16.mxu0 0
        %2922 = vmatmul.mubr.bf16.gmra.mrb[0].mxu0 %v2657
        %v2923 = vpop.f32.mrb[0].mxu0
        %v2924 = vadd.f32 %v2827, %v2923
        %v2925 = vpop.f32.mrb[0].mxu0
        %v2926 = vpop.f32.mrb[0].mxu0
        %v2927 = vadd.f32 %v2830, %v2926
        %v2928 = vpop.f32.mrb[0].mxu0
        %2929 = vmatprep.mubr.bf16.mxu0 0
        %2930 = vmatmul.mubr.bf16.gmra.mrb[0].mxu0 %v2660
        %v2931 = vpop.f32.mrb[0].mxu0
        %v2932 = vadd.f32 %v2835, %v2931
        %v2933 = vpop.f32.mrb[0].mxu0
        %v2934 = vpop.f32.mrb[0].mxu0
        %v2935 = vadd.f32 %v2838, %v2934
        %v2936 = vpop.f32.mrb[0].mxu0
        %2937 = vmatprep.mubr.bf16.mxu0 0
        %2938 = vmatmul.mubr.bf16.gmra.mrb[0].mxu0 %v2663
        %v2939 = vpop.f32.mrb[0].mxu0
        %v2940 = vadd.f32 %v2843, %v2939
        %v2941 = vpop.f32.mrb[0].mxu0
        %v2942 = vpop.f32.mrb[0].mxu0
        %v2943 = vadd.f32 %v2846, %v2942
        %v2944 = vpop.f32.mrb[0].mxu0
        %2945 = vmatprep.mubr.bf16.mxu0 0
        %2946 = vmatmul.mubr.bf16.gmra.mrb[0].mxu0 %v2666
        %v2947 = vpop.f32.mrb[0].mxu0
        %v2948 = vadd.f32 %v2851, %v2947
        %v2949 = vpop.f32.mrb[0].mxu0
        %v2950 = vpop.f32.mrb[0].mxu0
        %v2951 = vadd.f32 %v2854, %v2950
        %v2952 = vpop.f32.mrb[0].mxu0
        %2953 = vmatprep.mubr.bf16.mxu0 0
        %2954 = vmatmul.mubr.bf16.gmra.mrb[0].mxu0 %v2669
        %v2955 = vpop.f32.mrb[0].mxu0
        %v2956 = vadd.f32 %v2859, %v2955
        %v2957 = vpop.f32.mrb[0].mxu0
        %v2958 = vpop.f32.mrb[0].mxu0
        %v2959 = vadd.f32 %v2862, %v2958
        %v2960 = vpop.f32.mrb[0].mxu0
        %2961 = vdwg.mxu0
        %v2962 = vmax.f32 %v2900, 0.0
        %v2963 = vmax.f32 %v2903, 0.0
        %v2964 = vmax.f32 %v2908, 0.0
        %v2965 = vmax.f32 %v2911, 0.0
        %v2966 = vmax.f32 %v2916, 0.0
        %v2967 = vmax.f32 %v2919, 0.0
        %v2968 = vmax.f32 %v2924, 0.0
        %v2969 = vmax.f32 %v2927, 0.0
        %v2970 = vmax.f32 %v2932, 0.0
        %v2971 = vmax.f32 %v2935, 0.0
        %v2972 = vmax.f32 %v2940, 0.0
        %v2973 = vmax.f32 %v2943, 0.0
        %v2974 = vmax.f32 %v2948, 0.0
        %v2975 = vmax.f32 %v2951, 0.0
        %v2976 = vmax.f32 %v2956, 0.0
        %v2977 = vmax.f32 %v2959, 0.0
        %v2978 = vpack.c.bf16 %v2963, %v2962
        %v2979 = vpack.c.bf16 %v2965, %v2964
        %v2980 = vpack.c.bf16 %v2967, %v2966
        %v2981 = vpack.c.bf16 %v2969, %v2968
        %v2982 = vpack.c.bf16 %v2971, %v2970
        %v2983 = vpack.c.bf16 %v2973, %v2972
        %v2984 = vpack.c.bf16 %v2975, %v2974
        %v2985 = vpack.c.bf16 %v2977, %v2976
        %v2986 = vld [vmem:[%s6] sm:$0xf]
        %v2987 = vld [vmem:[%s6 + $0x4] sm:$0xf]
        %v2988 = vld [vmem:[%s6 + $0x8] sm:$0xf]
        %v2989 = vld [vmem:[%s6 + $0xc] sm:$0xf]
        %v2990 = vld [vmem:[%s6 + $0x10] sm:$0xf]
        %v2991 = vld [vmem:[%s6 + $0x14] sm:$0xf]
        %v2992 = vld [vmem:[%s6 + $0x18] sm:$0xf]
        %v2993 = vld [vmem:[%s6 + $0x1c] sm:$0xf]
        %v2994 = vld [vmem:[%s7] sm:$0x1]
        %v2996 = vlaneseq
        %v2997 = vshrl.u32 %v2996, 7
        %v2998 = vsub.s32 0, %v2997
        %v2999 = vrot.slane %v2994, %v2998
        %v3009 = vunpack.c.l.b16 %v2986
        %v3010 = vunpack.c.l.b16 %v2987
        %v3011 = vunpack.c.l.b16 %v2988
        %v3012 = vunpack.c.l.b16 %v2989
        %v3013 = vunpack.c.l.b16 %v2990
        %v3014 = vunpack.c.l.b16 %v2991
        %v3015 = vunpack.c.l.b16 %v2992
        %v3016 = vunpack.c.l.b16 %v2993
        %v3017 = vpack.c.b16 %v3010, %v3009
        %v3018 = vpack.c.b16 %v3012, %v3011
        %v3019 = vpack.c.b16 %v3014, %v3013
        %v3020 = vpack.c.b16 %v3016, %v3015
        %v3026 = vsel %vm1440, %v2978, 0
        %v3029 = vsel %vm1440, %v2979, 0
        %v3032 = vsel %vm1440, %v2980, 0
        %v3035 = vsel %vm1440, %v2981, 0
        %v3038 = vsel %vm1440, %v2982, 0
        %v3041 = vsel %vm1440, %v2983, 0
        %v3044 = vsel %vm1440, %v2984, 0
        %v3047 = vsel %vm1440, %v2985, 0
        %3049 = vmatprep.subr.bf16.mxu0 0
        %3050 = vmatpush1.bf16.msra.mxu0 %v3017
        %3051 = vmatprep.subr.bf16.mxu0 0
        %3052 = vmatpush1.bf16.msra.mxu0 %v3018
        %3053 = vmatprep.subr.bf16.mxu0 0
        %3054 = vmatpush1.bf16.msra.mxu0 %v3019
        %3055 = vmatprep.subr.bf16.mxu0 0
        %3056 = vmatpush1.bf16.msra.mxu0 %v3020
        %3057 = vmatprep.subr.bf16.mxu0 0
        %3058 = vmatpush1.bf16.msra.mxu0 0
        %3059 = vmatprep.subr.bf16.mxu0 0
        %3060 = vmatpush1.bf16.msra.mxu0 0
        %3061 = vmatprep.subr.bf16.mxu0 0
        %3062 = vmatpush1.bf16.msra.mxu0 0
        %3063 = vmatprep.subr.bf16.mxu0 0
        %3064 = vmatpush1.bf16.msra.mxu0 0
        %3065 = vmatprep.subr.bf16.mxu0 0
        %3066 = vmatpush1.bf16.msra.mxu0 0
        %3067 = vmatprep.subr.bf16.mxu0 0
        %3068 = vmatpush1.bf16.msra.mxu0 0
        %3069 = vmatprep.subr.bf16.mxu0 0
        %3070 = vmatpush1.bf16.msra.mxu0 0
        %3071 = vmatprep.subr.bf16.mxu0 0
        %3072 = vmatpush1.bf16.msra.mxu0 0
        %3073 = vmatprep.subr.bf16.mxu0 0
        %3074 = vmatpush1.bf16.msra.mxu0 0
        %3075 = vmatprep.subr.bf16.mxu0 0
        %3076 = vmatpush1.bf16.msra.mxu0 0
        %3077 = vmatprep.subr.bf16.mxu0 0
        %3078 = vmatpush1.bf16.msra.mxu0 0
        %3079 = vmatprep.subr.bf16.mxu0 0
        %3080 = vmatpush1.bf16.msra.mxu0 0
        %3081 = vmatprep.mubr.bf16.mxu0 0
        %3082 = vmatmul.mubr.bf16.gmra.mrb[0].mxu0 %v3026
        %v3083 = vpop.f32.mrb[0].mxu0
        %v3084 = vadd.f32 %v2999, %v3083
        %v3085 = vpop.f32.mrb[0].mxu0
        %v3086 = vpop.f32.mrb[0].mxu0
        %v3087 = vadd.f32 %v2999, %v3086
        %v3088 = vpop.f32.mrb[0].mxu0
        %3089 = vmatprep.mubr.bf16.mxu0 0
        %3090 = vmatmul.mubr.bf16.gmra.mrb[0].mxu0 %v3029
        %v3091 = vpop.f32.mrb[0].mxu0
        %v3092 = vadd.f32 %v2999, %v3091
        %v3093 = vpop.f32.mrb[0].mxu0
        %v3094 = vpop.f32.mrb[0].mxu0
        %v3095 = vadd.f32 %v2999, %v3094
        %v3096 = vpop.f32.mrb[0].mxu0
        %3097 = vmatprep.mubr.bf16.mxu0 0
        %3098 = vmatmul.mubr.bf16.gmra.mrb[0].mxu0 %v3032
        %v3099 = vpop.f32.mrb[0].mxu0
        %v3100 = vadd.f32 %v2999, %v3099
        %v3101 = vpop.f32.mrb[0].mxu0
        %v3102 = vpop.f32.mrb[0].mxu0
        %v3103 = vadd.f32 %v2999, %v3102
        %v3104 = vpop.f32.mrb[0].mxu0
        %3105 = vmatprep.mubr.bf16.mxu0 0
        %3106 = vmatmul.mubr.bf16.gmra.mrb[0].mxu0 %v3035
        %v3107 = vpop.f32.mrb[0].mxu0
        %v3108 = vadd.f32 %v2999, %v3107
        %v3109 = vpop.f32.mrb[0].mxu0
        %v3110 = vpop.f32.mrb[0].mxu0
        %v3111 = vadd.f32 %v2999, %v3110
        %v3112 = vpop.f32.mrb[0].mxu0
        %3113 = vmatprep.mubr.bf16.mxu0 0
        %3114 = vmatmul.mubr.bf16.gmra.mrb[0].mxu0 %v3038
        %v3115 = vpop.f32.mrb[0].mxu0
        %v3116 = vadd.f32 %v2999, %v3115
        %v3117 = vpop.f32.mrb[0].mxu0
        %v3118 = vpop.f32.mrb[0].mxu0
        %v3119 = vadd.f32 %v2999, %v3118
        %v3120 = vpop.f32.mrb[0].mxu0
        %3121 = vmatprep.mubr.bf16.mxu0 0
        %3122 = vmatmul.mubr.bf16.gmra.mrb[0].mxu0 %v3041
        %v3123 = vpop.f32.mrb[0].mxu0
        %v3124 = vadd.f32 %v2999, %v3123
        %v3125 = vpop.f32.mrb[0].mxu0
        %v3126 = vpop.f32.mrb[0].mxu0
        %v3127 = vadd.f32 %v2999, %v3126
        %v3128 = vpop.f32.mrb[0].mxu0
        %3129 = vmatprep.mubr.bf16.mxu0 0
        %3130 = vmatmul.mubr.bf16.gmra.mrb[0].mxu0 %v3044
        %v3131 = vpop.f32.mrb[0].mxu0
        %v3132 = vadd.f32 %v2999, %v3131
        %v3133 = vpop.f32.mrb[0].mxu0
        %v3134 = vpop.f32.mrb[0].mxu0
        %v3135 = vadd.f32 %v2999, %v3134
        %v3136 = vpop.f32.mrb[0].mxu0
        %3137 = vmatprep.mubr.bf16.mxu0 0
        %3138 = vmatmul.mubr.bf16.gmra.mrb[0].mxu0 %v3047
        %v3139 = vpop.f32.mrb[0].mxu0
        %v3140 = vadd.f32 %v2999, %v3139
        %v3141 = vpop.f32.mrb[0].mxu0
        %v3142 = vpop.f32.mrb[0].mxu0
        %v3143 = vadd.f32 %v2999, %v3142
        %v3144 = vpop.f32.mrb[0].mxu0
        %3145 = vdwg.mxu0
        %v3146 = vmax.f32 %v3084, 0.0
        %v3147 = vmax.f32 %v3087, 0.0
        %v3148 = vmax.f32 %v3092, 0.0
        %v3149 = vmax.f32 %v3095, 0.0
        %v3150 = vmax.f32 %v3100, 0.0
        %v3151 = vmax.f32 %v3103, 0.0
        %v3152 = vmax.f32 %v3108, 0.0
        %v3153 = vmax.f32 %v3111, 0.0
        %v3154 = vmax.f32 %v3116, 0.0
        %v3155 = vmax.f32 %v3119, 0.0
        %v3156 = vmax.f32 %v3124, 0.0
        %v3157 = vmax.f32 %v3127, 0.0
        %v3158 = vmax.f32 %v3132, 0.0
        %v3159 = vmax.f32 %v3135, 0.0
        %v3160 = vmax.f32 %v3140, 0.0
        %v3161 = vmax.f32 %v3143, 0.0
        %v3162 = vpack.c.bf16 %v3147, %v3146
        %v3163 = vpack.c.bf16 %v3149, %v3148
        %v3164 = vpack.c.bf16 %v3151, %v3150
        %v3165 = vpack.c.bf16 %v3153, %v3152
        %v3166 = vpack.c.bf16 %v3155, %v3154
        %v3167 = vpack.c.bf16 %v3157, %v3156
        %v3168 = vpack.c.bf16 %v3159, %v3158
        %v3169 = vpack.c.bf16 %v3161, %v3160
        %v3170 = vld [vmem:[%s8] sm:$0xf]
        %v3171 = vld [vmem:[%s8 + $0x4] sm:$0xf]
        %v3172 = vld [vmem:[%s8 + $0x8] sm:$0xf]
        %v3173 = vld [vmem:[%s8 + $0xc] sm:$0xf]
        %v3174 = vld [vmem:[%s8 + $0x10] sm:$0xf]
        %v3175 = vld [vmem:[%s8 + $0x14] sm:$0xf]
        %v3176 = vld [vmem:[%s8 + $0x18] sm:$0xf]
        %v3177 = vld [vmem:[%s8 + $0x1c] sm:$0xf]
        %v3178 = vld [vmem:[%s8 + $0x20] sm:$0xf]
        %v3179 = vld [vmem:[%s8 + $0x24] sm:$0xf]
        %v3180 = vld [vmem:[%s8 + $0x28] sm:$0xf]
        %v3181 = vld [vmem:[%s8 + $0x2c] sm:$0xf]
        %v3182 = vld [vmem:[%s8 + $0x30] sm:$0xf]
        %v3183 = vld [vmem:[%s8 + $0x34] sm:$0xf]
        %v3184 = vld [vmem:[%s8 + $0x38] sm:$0xf]
        %v3185 = vld [vmem:[%s8 + $0x3c] sm:$0xf]
        %v3186 = vld [vmem:[%s8 + $0x40] sm:$0xf]
        %v3187 = vld [vmem:[%s8 + $0x44] sm:$0xf]
        %v3206 = vunpack.c.l.b16 %v3170
        %v3207 = vunpack.c.l.b16 %v3171
        %v3208 = vunpack.c.l.b16 %v3172
        %v3209 = vunpack.c.l.b16 %v3173
        %v3210 = vunpack.c.l.b16 %v3174
        %v3211 = vunpack.c.l.b16 %v3175
        %v3212 = vunpack.c.l.b16 %v3176
        %v3213 = vunpack.c.l.b16 %v3177
        %v3214 = vunpack.c.l.b16 %v3178
        %v3215 = vunpack.c.l.b16 %v3179
        %v3216 = vunpack.c.l.b16 %v3180
        %v3217 = vunpack.c.l.b16 %v3181
        %v3218 = vunpack.c.l.b16 %v3182
        %v3219 = vunpack.c.l.b16 %v3183
        %v3220 = vunpack.c.l.b16 %v3184
        %v3221 = vunpack.c.l.b16 %v3185
        %v3222 = vunpack.c.l.b16 %v3186
        %v3223 = vunpack.c.l.b16 %v3187
        %v3224 = vpack.c.b16 %v3207, %v3206
        %v3225 = vpack.c.b16 %v3209, %v3208
        %v3226 = vpack.c.b16 %v3211, %v3210
        %v3227 = vpack.c.b16 %v3213, %v3212
        %v3228 = vpack.c.b16 %v3215, %v3214
        %v3229 = vpack.c.b16 %v3217, %v3216
        %v3230 = vpack.c.b16 %v3219, %v3218
        %v3231 = vpack.c.b16 %v3221, %v3220
        %v3232 = vpack.c.b16 %v3223, %v3222
        %v3234 = vsel %vm1440, %v3224, 0
        %v3237 = vsel %vm1440, %v3225, 0
        %v3240 = vsel %vm1440, %v3226, 0
        %v3243 = vsel %vm1440, %v3227, 0
        %v3246 = vsel %vm1440, %v3228, 0
        %v3249 = vsel %vm1440, %v3229, 0
        %v3252 = vsel %vm1440, %v3230, 0
        %v3255 = vsel %vm1440, %v3231, 0
        %v3258 = vsel %vm1440, %v3232, 0
        %3260 = vmatprep.subr.bf16.mxu0 0
        %3261 = vmatpush1.bf16.msra.mxu0 %v3162
        %3262 = vmatprep.subr.bf16.mxu0 0
        %3263 = vmatpush1.bf16.msra.mxu0 %v3163
        %3264 = vmatprep.subr.bf16.mxu0 0
        %3265 = vmatpush1.bf16.msra.mxu0 %v3164
        %3266 = vmatprep.subr.bf16.mxu0 0
        %3267 = vmatpush1.bf16.msra.mxu0 %v3165
        %3268 = vmatprep.subr.bf16.mxu0 0
        %3269 = vmatpush1.bf16.msra.mxu0 0
        %3270 = vmatprep.subr.bf16.mxu0 0
        %3271 = vmatpush1.bf16.msra.mxu0 0
        %3272 = vmatprep.subr.bf16.mxu0 0
        %3273 = vmatpush1.bf16.msra.mxu0 0
        %3274 = vmatprep.subr.bf16.mxu0 0
        %3275 = vmatpush1.bf16.msra.mxu0 0
        %3276 = vmatprep.subr.bf16.mxu0 0
        %3277 = vmatpush1.bf16.msra.mxu0 0
        %3278 = vmatprep.subr.bf16.mxu0 0
        %3279 = vmatpush1.bf16.msra.mxu0 0
        %3280 = vmatprep.subr.bf16.mxu0 0
        %3281 = vmatpush1.bf16.msra.mxu0 0
        %3282 = vmatprep.subr.bf16.mxu0 0
        %3283 = vmatpush1.bf16.msra.mxu0 0
        %3284 = vmatprep.subr.bf16.mxu0 0
        %3285 = vmatpush1.bf16.msra.mxu0 0
        %3286 = vmatprep.subr.bf16.mxu0 0
        %3287 = vmatpush1.bf16.msra.mxu0 0
        %3288 = vmatprep.subr.bf16.mxu0 0
        %3289 = vmatpush1.bf16.msra.mxu0 0
        %3290 = vmatprep.subr.bf16.mxu0 0
        %3291 = vmatpush1.bf16.msra.mxu0 0
        %3292 = vmatprep.mubr.bf16.mxu0 0
        %3293 = vmatmul.mubr.bf16.gmra.mrb[0].mxu0 %v3234
        %v3294 = vpop.f32.mrb[0].mxu0
        %v3295 = vadd.f32 0.0, %v3294
        %v3296 = vpop.f32.mrb[0].mxu0
        %v3297 = vpop.f32.mrb[0].mxu0
        %v3298 = vadd.f32 0.0, %v3297
        %v3299 = vpop.f32.mrb[0].mxu0
        %3300 = vmatprep.mubr.bf16.mxu0 0
        %3301 = vmatmul.mubr.bf16.gmra.mrb[0].mxu0 %v3237
        %v3302 = vpop.f32.mrb[0].mxu0
        %v3303 = vadd.f32 0.0, %v3302
        %v3304 = vpop.f32.mrb[0].mxu0
        %v3305 = vpop.f32.mrb[0].mxu0
        %v3306 = vadd.f32 0.0, %v3305
        %v3307 = vpop.f32.mrb[0].mxu0
        %3308 = vmatprep.mubr.bf16.mxu0 0
        %3309 = vmatmul.mubr.bf16.gmra.mrb[0].mxu0 %v3240
        %v3310 = vpop.f32.mrb[0].mxu0
        %v3311 = vadd.f32 0.0, %v3310
        %v3312 = vpop.f32.mrb[0].mxu0
        %v3313 = vpop.f32.mrb[0].mxu0
        %v3314 = vadd.f32 0.0, %v3313
        %v3315 = vpop.f32.mrb[0].mxu0
        %3316 = vmatprep.mubr.bf16.mxu0 0
        %3317 = vmatmul.mubr.bf16.gmra.mrb[0].mxu0 %v3243
        %v3318 = vpop.f32.mrb[0].mxu0
        %v3319 = vadd.f32 0.0, %v3318
        %v3320 = vpop.f32.mrb[0].mxu0
        %v3321 = vpop.f32.mrb[0].mxu0
        %v3322 = vadd.f32 0.0, %v3321
        %v3323 = vpop.f32.mrb[0].mxu0
        %3324 = vmatprep.mubr.bf16.mxu0 0
        %3325 = vmatmul.mubr.bf16.gmra.mrb[0].mxu0 %v3246
        %v3326 = vpop.f32.mrb[0].mxu0
        %v3327 = vadd.f32 0.0, %v3326
        %v3328 = vpop.f32.mrb[0].mxu0
        %v3329 = vpop.f32.mrb[0].mxu0
        %v3330 = vadd.f32 0.0, %v3329
        %v3331 = vpop.f32.mrb[0].mxu0
        %3332 = vmatprep.mubr.bf16.mxu0 0
        %3333 = vmatmul.mubr.bf16.gmra.mrb[0].mxu0 %v3249
        %v3334 = vpop.f32.mrb[0].mxu0
        %v3335 = vadd.f32 0.0, %v3334
        %v3336 = vpop.f32.mrb[0].mxu0
        %v3337 = vpop.f32.mrb[0].mxu0
        %v3338 = vadd.f32 0.0, %v3337
        %v3339 = vpop.f32.mrb[0].mxu0
        %3340 = vmatprep.mubr.bf16.mxu0 0
        %3341 = vmatmul.mubr.bf16.gmra.mrb[0].mxu0 %v3252
        %v3342 = vpop.f32.mrb[0].mxu0
        %v3343 = vadd.f32 0.0, %v3342
        %v3344 = vpop.f32.mrb[0].mxu0
        %v3345 = vpop.f32.mrb[0].mxu0
        %v3346 = vadd.f32 0.0, %v3345
        %v3347 = vpop.f32.mrb[0].mxu0
        %3348 = vmatprep.mubr.bf16.mxu0 0
        %3349 = vmatmul.mubr.bf16.gmra.mrb[0].mxu0 %v3255
        %v3350 = vpop.f32.mrb[0].mxu0
        %v3351 = vadd.f32 0.0, %v3350
        %v3352 = vpop.f32.mrb[0].mxu0
        %v3353 = vpop.f32.mrb[0].mxu0
        %v3354 = vadd.f32 0.0, %v3353
        %v3355 = vpop.f32.mrb[0].mxu0
        %3356 = vmatprep.mubr.bf16.mxu0 0
        %3357 = vmatmul.mubr.bf16.gmra.mrb[0].mxu0 %v3258
        %v3358 = vpop.f32.mrb[0].mxu0
        %v3359 = vadd.f32 0.0, %v3358
        %v3360 = vpop.f32.mrb[0].mxu0
        %v3361 = vpop.f32.mrb[0].mxu0
        %v3362 = vadd.f32 0.0, %v3361
        %v3363 = vpop.f32.mrb[0].mxu0
        %3364 = vdwg.mxu0
        %vm3365 = vcmask 261120
        %3366 = vst.msk [vmem:[#allocation3] sm:$0xff] %vm3365, %v3295
        %3367 = vst.msk [vmem:[#allocation3 + $0x18] sm:$0xff] %vm3365, %v3298
        %3370 = vrot.lane.b32.xlu0 %v3303, 32
        %v3371 = vpop.permute.xlu0 %3370
        %3372 = vrot.lane.b32.xlu0 %v3306, 32
        %v3373 = vpop.permute.xlu0 %3372
        %vm3376 = vcmask 523520
        %3377 = vst.msk [vmem:[#allocation3] sm:$0xff] %vm3376, %v3371
        %3378 = vst.msk [vmem:[#allocation3 + $0x18] sm:$0xff] %vm3376, %v3373
        %3381 = vrot.lane.b32.xlu0 %v3311, 64
        %v3382 = vpop.permute.xlu0 %3381
        %3383 = vrot.lane.b32.xlu0 %v3314, 64
        %v3384 = vpop.permute.xlu0 %3383
        %vm3387 = vcmask 785920
        %3388 = vst.msk [vmem:[#allocation3] sm:$0xff] %vm3387, %v3382
        %3389 = vst.msk [vmem:[#allocation3 + $0x18] sm:$0xff] %vm3387, %v3384
        %3392 = vrot.lane.b32.xlu0 %v3319, 96
        %v3393 = vpop.permute.xlu0 %3392
        %3394 = vrot.lane.b32.xlu0 %v3322, 96
        %v3395 = vpop.permute.xlu0 %3394
        %vm3398 = vcmask 1048320
        %3399 = vst.msk [vmem:[#allocation3] sm:$0xff] %vm3398, %v3393
        %3400 = vst.msk [vmem:[#allocation3 + $0x18] sm:$0xff] %vm3398, %v3395
        %3401 = vst.msk [vmem:[#allocation3 + $0x8] sm:$0xff] %vm3365, %v3327
        %3402 = vst.msk [vmem:[#allocation3 + $0x20] sm:$0xff] %vm3365, %v3330
        %3405 = vrot.lane.b32.xlu0 %v3335, 32
        %v3406 = vpop.permute.xlu0 %3405
        %3407 = vrot.lane.b32.xlu0 %v3338, 32
        %v3408 = vpop.permute.xlu0 %3407
        %3411 = vst.msk [vmem:[#allocation3 + $0x8] sm:$0xff] %vm3376, %v3406
        %3412 = vst.msk [vmem:[#allocation3 + $0x20] sm:$0xff] %vm3376, %v3408
        %3415 = vrot.lane.b32.xlu0 %v3343, 64
        %v3416 = vpop.permute.xlu0 %3415
        %3417 = vrot.lane.b32.xlu0 %v3346, 64
        %v3418 = vpop.permute.xlu0 %3417
        %3421 = vst.msk [vmem:[#allocation3 + $0x8] sm:$0xff] %vm3387, %v3416
        %3422 = vst.msk [vmem:[#allocation3 + $0x20] sm:$0xff] %vm3387, %v3418
        %3425 = vrot.lane.b32.xlu0 %v3351, 96
        %v3426 = vpop.permute.xlu0 %3425
        %3427 = vrot.lane.b32.xlu0 %v3354, 96
        %v3428 = vpop.permute.xlu0 %3427
        %3431 = vst.msk [vmem:[#allocation3 + $0x8] sm:$0xff] %vm3398, %v3426
        %3432 = vst.msk [vmem:[#allocation3 + $0x20] sm:$0xff] %vm3398, %v3428
        %3433 = vst.msk [vmem:[#allocation3 + $0x10] sm:$0xff] %vm3365, %v3359
        %3434 = vst.msk [vmem:[#allocation3 + $0x28] sm:$0xff] %vm3365, %v3362
        %3435 = vmatprep.subr.bf16.mxu0 0
        %3436 = vmatpush1.bf16.msra.mxu0 %v3166
        %3437 = vmatprep.subr.bf16.mxu0 0
        %3438 = vmatpush1.bf16.msra.mxu0 %v3167
        %3439 = vmatprep.subr.bf16.mxu0 0
        %3440 = vmatpush1.bf16.msra.mxu0 %v3168
        %3441 = vmatprep.subr.bf16.mxu0 0
        %3442 = vmatpush1.bf16.msra.mxu0 %v3169
        %3443 = vmatprep.subr.bf16.mxu0 0
        %3444 = vmatpush1.bf16.msra.mxu0 0
        %3445 = vmatprep.subr.bf16.mxu0 0
        %3446 = vmatpush1.bf16.msra.mxu0 0
        %3447 = vmatprep.subr.bf16.mxu0 0
        %3448 = vmatpush1.bf16.msra.mxu0 0
        %3449 = vmatprep.subr.bf16.mxu0 0
        %3450 = vmatpush1.bf16.msra.mxu0 0
        %3451 = vmatprep.subr.bf16.mxu0 0
        %3452 = vmatpush1.bf16.msra.mxu0 0
        %3453 = vmatprep.subr.bf16.mxu0 0
        %3454 = vmatpush1.bf16.msra.mxu0 0
        %3455 = vmatprep.subr.bf16.mxu0 0
        %3456 = vmatpush1.bf16.msra.mxu0 0
        %3457 = vmatprep.subr.bf16.mxu0 0
        %3458 = vmatpush1.bf16.msra.mxu0 0
        %3459 = vmatprep.subr.bf16.mxu0 0
        %3460 = vmatpush1.bf16.msra.mxu0 0
        %3461 = vmatprep.subr.bf16.mxu0 0
        %3462 = vmatpush1.bf16.msra.mxu0 0
        %3463 = vmatprep.subr.bf16.mxu0 0
        %3464 = vmatpush1.bf16.msra.mxu0 0
        %3465 = vmatprep.subr.bf16.mxu0 0
        %3466 = vmatpush1.bf16.msra.mxu0 0
        %3467 = vmatprep.mubr.bf16.mxu0 0
        %3468 = vmatmul.mubr.bf16.gmra.mrb[0].mxu0 %v3234
        %v3469 = vpop.f32.mrb[0].mxu0
        %v3470 = vadd.f32 0.0, %v3469
        %v3471 = vpop.f32.mrb[0].mxu0
        %v3472 = vpop.f32.mrb[0].mxu0
        %v3473 = vadd.f32 0.0, %v3472
        %v3474 = vpop.f32.mrb[0].mxu0
        %3475 = vmatprep.mubr.bf16.mxu0 0
        %3476 = vmatmul.mubr.bf16.gmra.mrb[0].mxu0 %v3237
        %v3477 = vpop.f32.mrb[0].mxu0
        %v3478 = vadd.f32 0.0, %v3477
        %v3479 = vpop.f32.mrb[0].mxu0
        %v3480 = vpop.f32.mrb[0].mxu0
        %v3481 = vadd.f32 0.0, %v3480
        %v3482 = vpop.f32.mrb[0].mxu0
        %3483 = vmatprep.mubr.bf16.mxu0 0
        %3484 = vmatmul.mubr.bf16.gmra.mrb[0].mxu0 %v3240
        %v3485 = vpop.f32.mrb[0].mxu0
        %v3486 = vadd.f32 0.0, %v3485
        %v3487 = vpop.f32.mrb[0].mxu0
        %v3488 = vpop.f32.mrb[0].mxu0
        %v3489 = vadd.f32 0.0, %v3488
        %v3490 = vpop.f32.mrb[0].mxu0
        %3491 = vmatprep.mubr.bf16.mxu0 0
        %3492 = vmatmul.mubr.bf16.gmra.mrb[0].mxu0 %v3243
        %v3493 = vpop.f32.mrb[0].mxu0
        %v3494 = vadd.f32 0.0, %v3493
        %v3495 = vpop.f32.mrb[0].mxu0
        %v3496 = vpop.f32.mrb[0].mxu0
        %v3497 = vadd.f32 0.0, %v3496
        %v3498 = vpop.f32.mrb[0].mxu0
        %3499 = vmatprep.mubr.bf16.mxu0 0
        %3500 = vmatmul.mubr.bf16.gmra.mrb[0].mxu0 %v3246
        %v3501 = vpop.f32.mrb[0].mxu0
        %v3502 = vadd.f32 0.0, %v3501
        %v3503 = vpop.f32.mrb[0].mxu0
        %v3504 = vpop.f32.mrb[0].mxu0
        %v3505 = vadd.f32 0.0, %v3504
        %v3506 = vpop.f32.mrb[0].mxu0
        %3507 = vmatprep.mubr.bf16.mxu0 0
        %3508 = vmatmul.mubr.bf16.gmra.mrb[0].mxu0 %v3249
        %v3509 = vpop.f32.mrb[0].mxu0
        %v3510 = vadd.f32 0.0, %v3509
        %v3511 = vpop.f32.mrb[0].mxu0
        %v3512 = vpop.f32.mrb[0].mxu0
        %v3513 = vadd.f32 0.0, %v3512
        %v3514 = vpop.f32.mrb[0].mxu0
        %3515 = vmatprep.mubr.bf16.mxu0 0
        %3516 = vmatmul.mubr.bf16.gmra.mrb[0].mxu0 %v3252
        %v3517 = vpop.f32.mrb[0].mxu0
        %v3518 = vadd.f32 0.0, %v3517
        %v3519 = vpop.f32.mrb[0].mxu0
        %v3520 = vpop.f32.mrb[0].mxu0
        %v3521 = vadd.f32 0.0, %v3520
        %v3522 = vpop.f32.mrb[0].mxu0
        %3523 = vmatprep.mubr.bf16.mxu0 0
        %3524 = vmatmul.mubr.bf16.gmra.mrb[0].mxu0 %v3255
        %v3525 = vpop.f32.mrb[0].mxu0
        %v3526 = vadd.f32 0.0, %v3525
        %v3527 = vpop.f32.mrb[0].mxu0
        %v3528 = vpop.f32.mrb[0].mxu0
        %v3529 = vadd.f32 0.0, %v3528
        %v3530 = vpop.f32.mrb[0].mxu0
        %3531 = vmatprep.mubr.bf16.mxu0 0
        %3532 = vmatmul.mubr.bf16.gmra.mrb[0].mxu0 %v3258
        %v3533 = vpop.f32.mrb[0].mxu0
        %v3534 = vadd.f32 0.0, %v3533
        %v3535 = vpop.f32.mrb[0].mxu0
        %v3536 = vpop.f32.mrb[0].mxu0
        %v3537 = vadd.f32 0.0, %v3536
        %v3538 = vpop.f32.mrb[0].mxu0
        %3539 = vdwg.mxu0
        %3540 = vst.msk [vmem:[#allocation3 + $0x30] sm:$0xff] %vm3365, %v3470
        %3541 = vst.msk [vmem:[#allocation3 + $0x48] sm:$0xff] %vm3365, %v3473
        %3544 = vrot.lane.b32.xlu0 %v3478, 32
        %v3545 = vpop.permute.xlu0 %3544
        %3546 = vrot.lane.b32.xlu0 %v3481, 32
        %v3547 = vpop.permute.xlu0 %3546
        %3550 = vst.msk [vmem:[#allocation3 + $0x30] sm:$0xff] %vm3376, %v3545
        %3551 = vst.msk [vmem:[#allocation3 + $0x48] sm:$0xff] %vm3376, %v3547
        %3554 = vrot.lane.b32.xlu0 %v3486, 64
        %v3555 = vpop.permute.xlu0 %3554
        %3556 = vrot.lane.b32.xlu0 %v3489, 64
        %v3557 = vpop.permute.xlu0 %3556
        %3560 = vst.msk [vmem:[#allocation3 + $0x30] sm:$0xff] %vm3387, %v3555
        %3561 = vst.msk [vmem:[#allocation3 + $0x48] sm:$0xff] %vm3387, %v3557
        %3564 = vrot.lane.b32.xlu0 %v3494, 96
        %v3565 = vpop.permute.xlu0 %3564
        %3566 = vrot.lane.b32.xlu0 %v3497, 96
        %v3567 = vpop.permute.xlu0 %3566
        %3570 = vst.msk [vmem:[#allocation3 + $0x30] sm:$0xff] %vm3398, %v3565
        %3571 = vst.msk [vmem:[#allocation3 + $0x48] sm:$0xff] %vm3398, %v3567
        %3572 = vst.msk [vmem:[#allocation3 + $0x38] sm:$0xff] %vm3365, %v3502
        %3573 = vst.msk [vmem:[#allocation3 + $0x50] sm:$0xff] %vm3365, %v3505
        %3576 = vrot.lane.b32.xlu0 %v3510, 32
        %v3577 = vpop.permute.xlu0 %3576
        %3578 = vrot.lane.b32.xlu0 %v3513, 32
        %v3579 = vpop.permute.xlu0 %3578
        %3582 = vst.msk [vmem:[#allocation3 + $0x38] sm:$0xff] %vm3376, %v3577
        %3583 = vst.msk [vmem:[#allocation3 + $0x50] sm:$0xff] %vm3376, %v3579
        %3586 = vrot.lane.b32.xlu0 %v3518, 64
        %v3587 = vpop.permute.xlu0 %3586
        %3588 = vrot.lane.b32.xlu0 %v3521, 64
        %v3589 = vpop.permute.xlu0 %3588
        %3592 = vst.msk [vmem:[#allocation3 + $0x38] sm:$0xff] %vm3387, %v3587
        %3593 = vst.msk [vmem:[#allocation3 + $0x50] sm:$0xff] %vm3387, %v3589
        %3596 = vrot.lane.b32.xlu0 %v3526, 96
        %v3597 = vpop.permute.xlu0 %3596
        %3598 = vrot.lane.b32.xlu0 %v3529, 96
        %v3599 = vpop.permute.xlu0 %3598
        %3602 = vst.msk [vmem:[#allocation3 + $0x38] sm:$0xff] %vm3398, %v3597
        %3603 = vst.msk [vmem:[#allocation3 + $0x50] sm:$0xff] %vm3398, %v3599
        %3604 = vst.msk [vmem:[#allocation3 + $0x40] sm:$0xff] %vm3365, %v3534
        %3605 = vst.msk [vmem:[#allocation3 + $0x58] sm:$0xff] %vm3365, %v3537
        %v3606 = vld [vmem:[#allocation3] sm:$0xff]
        %v3607 = vld [vmem:[#allocation3 + $0x8] sm:$0xff]
        %v3608 = vld [vmem:[#allocation3 + $0x10] sm:$0xff]
        %v3609 = vld [vmem:[#allocation3 + $0x18] sm:$0xff]
        %v3610 = vld [vmem:[#allocation3 + $0x20] sm:$0xff]
        %v3611 = vld [vmem:[#allocation3 + $0x28] sm:$0xff]
        %v3612 = vld [vmem:[#allocation3 + $0x30] sm:$0xff]
        %v3613 = vld [vmem:[#allocation3 + $0x38] sm:$0xff]
        %v3614 = vld [vmem:[#allocation3 + $0x40] sm:$0xff]
        %v3615 = vld [vmem:[#allocation3 + $0x48] sm:$0xff]
        %v3616 = vld [vmem:[#allocation3 + $0x50] sm:$0xff]
        %v3617 = vld [vmem:[#allocation3 + $0x58] sm:$0xff]
        %v3618 = vpack.c.bf16 %v3609, %v3606
        %v3619 = vpack.c.bf16 %v3610, %v3607
        %v3620 = vpack.c.bf16 %v3611, %v3608
        %v3621 = vpack.c.bf16 %v3615, %v3612
        %v3622 = vpack.c.bf16 %v3616, %v3613
        %v3623 = vpack.c.bf16 %v3617, %v3614
        %v3624 = vld [vmem:[%s9] sm:$0xf]
        %v3625 = vld [vmem:[%s9 + $0x4] sm:$0xf]
        %v3626 = vld [vmem:[%s9 + $0x8] sm:$0xf]
        %v3627 = vld [vmem:[%s9 + $0xc] sm:$0xf]
        %v3628 = vld [vmem:[%s9 + $0x10] sm:$0xf]
        %v3629 = vld [vmem:[%s9 + $0x14] sm:$0xf]
        %v3630 = vld [vmem:[%s9 + $0x18] sm:$0xf]
        %v3631 = vld [vmem:[%s9 + $0x1c] sm:$0xf]
        %v3632 = vld [vmem:[%s9 + $0x20] sm:$0xf]
        %v3633 = vld [vmem:[%s9 + $0x24] sm:$0xf]
        %v3634 = vld [vmem:[%s9 + $0x28] sm:$0xf]
        %v3635 = vld [vmem:[%s9 + $0x2c] sm:$0xf]
        %v3636 = vld [vmem:[%s9 + $0x30] sm:$0xf]
        %v3637 = vld [vmem:[%s9 + $0x34] sm:$0xf]
        %v3638 = vld [vmem:[%s9 + $0x38] sm:$0xf]
        %v3639 = vld [vmem:[%s9 + $0x3c] sm:$0xf]
        %v3640 = vld [vmem:[%s9 + $0x40] sm:$0xf]
        %v3641 = vld [vmem:[%s9 + $0x44] sm:$0xf]
        %v3642 = vld [vmem:[%s9 + $0x48] sm:$0xf]
        %v3643 = vld [vmem:[%s9 + $0x4c] sm:$0xf]
        %v3644 = vld [vmem:[%s9 + $0x50] sm:$0xf]
        %v3645 = vld [vmem:[%s9 + $0x54] sm:$0xf]
        %v3646 = vld [vmem:[%s9 + $0x58] sm:$0xf]
        %v3647 = vld [vmem:[%s9 + $0x5c] sm:$0xf]
        %v3648 = vld [vmem:[%s9 + $0x60] sm:$0xf]
        %v3649 = vld [vmem:[%s9 + $0x64] sm:$0xf]
        %v3650 = vld [vmem:[%s9 + $0x68] sm:$0xf]
        %v3651 = vld [vmem:[%s9 + $0x6c] sm:$0xf]
        %v3652 = vld [vmem:[%s9 + $0x70] sm:$0xf]
        %v3653 = vld [vmem:[%s9 + $0x74] sm:$0xf]
        %v3654 = vld [vmem:[%s9 + $0x78] sm:$0xf]
        %v3655 = vld [vmem:[%s9 + $0x7c] sm:$0xf]
        %v3656 = vld [vmem:[%s9 + $0x80] sm:$0xf]
        %v3657 = vld [vmem:[%s9 + $0x84] sm:$0xf]
        %v3658 = vld [vmem:[%s9 + $0x88] sm:$0xf]
        %v3659 = vld [vmem:[%s9 + $0x8c] sm:$0xf]
        %v3660 = vld [vmem:[%s10] sm:$0x1]
        %v3662 = vlaneseq
        %v3663 = vshrl.u32 %v3662, 7
        %v3664 = vsub.s32 0, %v3663
        %v3665 = vrot.slane %v3660, %v3664
        %v3703 = vunpack.c.l.b16 %v3624
        %v3704 = vunpack.c.l.b16 %v3625
        %v3705 = vunpack.c.l.b16 %v3626
        %v3706 = vunpack.c.l.b16 %v3627
        %v3707 = vunpack.c.l.b16 %v3628
        %v3708 = vunpack.c.l.b16 %v3629
        %v3709 = vunpack.c.l.b16 %v3630
        %v3710 = vunpack.c.l.b16 %v3631
        %v3711 = vunpack.c.l.b16 %v3632
        %v3712 = vunpack.c.l.b16 %v3633
        %v3713 = vunpack.c.l.b16 %v3634
        %v3714 = vunpack.c.l.b16 %v3635
        %v3715 = vunpack.c.l.b16 %v3636
        %v3716 = vunpack.c.l.b16 %v3637
        %v3717 = vunpack.c.l.b16 %v3638
        %v3718 = vunpack.c.l.b16 %v3639
        %v3719 = vunpack.c.l.b16 %v3640
        %v3720 = vunpack.c.l.b16 %v3641
        %v3721 = vunpack.c.l.b16 %v3642
        %v3722 = vunpack.c.l.b16 %v3643
        %v3723 = vunpack.c.l.b16 %v3644
        %v3724 = vunpack.c.l.b16 %v3645
        %v3725 = vunpack.c.l.b16 %v3646
        %v3726 = vunpack.c.l.b16 %v3647
        %v3727 = vunpack.c.l.b16 %v3648
        %v3728 = vunpack.c.l.b16 %v3649
        %v3729 = vunpack.c.l.b16 %v3650
        %v3730 = vunpack.c.l.b16 %v3651
        %v3731 = vunpack.c.l.b16 %v3652
        %v3732 = vunpack.c.l.b16 %v3653
        %v3733 = vunpack.c.l.b16 %v3654
        %v3734 = vunpack.c.l.b16 %v3655
        %v3735 = vunpack.c.l.b16 %v3656
        %v3736 = vunpack.c.l.b16 %v3657
        %v3737 = vunpack.c.l.b16 %v3658
        %v3738 = vunpack.c.l.b16 %v3659
        %v3739 = vpack.c.b16 %v3704, %v3703
        %v3740 = vpack.c.b16 %v3706, %v3705
        %v3741 = vpack.c.b16 %v3708, %v3707
        %v3742 = vpack.c.b16 %v3710, %v3709
        %v3743 = vpack.c.b16 %v3712, %v3711
        %v3744 = vpack.c.b16 %v3714, %v3713
        %v3745 = vpack.c.b16 %v3716, %v3715
        %v3746 = vpack.c.b16 %v3718, %v3717
        %v3747 = vpack.c.b16 %v3720, %v3719
        %v3748 = vpack.c.b16 %v3722, %v3721
        %v3749 = vpack.c.b16 %v3724, %v3723
        %v3750 = vpack.c.b16 %v3726, %v3725
        %v3751 = vpack.c.b16 %v3728, %v3727
        %v3752 = vpack.c.b16 %v3730, %v3729
        %v3753 = vpack.c.b16 %v3732, %v3731
        %v3754 = vpack.c.b16 %v3734, %v3733
        %v3755 = vpack.c.b16 %v3736, %v3735
        %v3756 = vpack.c.b16 %v3738, %v3737
        %v3776 = vsel %vm3365, %v3620, 0
        %v3779 = vsel %vm3365, %v3623, 0
        %3781 = vmatprep.subr.bf16.mxu0 0
        %3782 = vmatpush1.bf16.msra.mxu0 %v3739
        %3783 = vmatprep.subr.bf16.mxu0 0
        %3784 = vmatpush1.bf16.msra.mxu0 %v3740
        %3785 = vmatprep.subr.bf16.mxu0 0
        %3786 = vmatpush1.bf16.msra.mxu0 %v3741
        %3787 = vmatprep.subr.bf16.mxu0 0
        %3788 = vmatpush1.bf16.msra.mxu0 %v3742
        %3789 = vmatprep.subr.bf16.mxu0 0
        %3790 = vmatpush1.bf16.msra.mxu0 %v3743
        %3791 = vmatprep.subr.bf16.mxu0 0
        %3792 = vmatpush1.bf16.msra.mxu0 %v3744
        %3793 = vmatprep.subr.bf16.mxu0 0
        %3794 = vmatpush1.bf16.msra.mxu0 %v3745
        %3795 = vmatprep.subr.bf16.mxu0 0
        %3796 = vmatpush1.bf16.msra.mxu0 %v3746
        %3797 = vmatprep.subr.bf16.mxu0 0
        %3798 = vmatpush1.bf16.msra.mxu0 %v3747
        %3799 = vmatprep.subr.bf16.mxu0 0
        %3800 = vmatpush1.bf16.msra.mxu0 %v3748
        %3801 = vmatprep.subr.bf16.mxu0 0
        %3802 = vmatpush1.bf16.msra.mxu0 %v3749
        %3803 = vmatprep.subr.bf16.mxu0 0
        %3804 = vmatpush1.bf16.msra.mxu0 %v3750
        %3805 = vmatprep.subr.bf16.mxu0 0
        %3806 = vmatpush1.bf16.msra.mxu0 %v3751
        %3807 = vmatprep.subr.bf16.mxu0 0
        %3808 = vmatpush1.bf16.msra.mxu0 %v3752
        %3809 = vmatprep.subr.bf16.mxu0 0
        %3810 = vmatpush1.bf16.msra.mxu0 %v3753
        %3811 = vmatprep.subr.bf16.mxu0 0
        %3812 = vmatpush1.bf16.msra.mxu0 %v3754
        %3813 = vmatprep.mubr.bf16.mxu0 %v3619
        %3814 = vmatmul.mubr.bf16.gmra.mrb[0].mxu0 %v3618
        %v3815 = vpop.f32.mrb[0].mxu0
        %v3816 = vadd.f32 %v3665, %v3815
        %v3817 = vpop.f32.mrb[0].mxu0
        %v3818 = vpop.f32.mrb[0].mxu0
        %v3819 = vadd.f32 %v3665, %v3818
        %v3820 = vpop.f32.mrb[0].mxu0
        %3821 = vmatprep.mubr.bf16.mxu0 %v3622
        %3822 = vmatmul.mubr.bf16.gmra.mrb[0].mxu0 %v3621
        %v3823 = vpop.f32.mrb[0].mxu0
        %v3824 = vadd.f32 %v3665, %v3823
        %v3825 = vpop.f32.mrb[0].mxu0
        %v3826 = vpop.f32.mrb[0].mxu0
        %v3827 = vadd.f32 %v3665, %v3826
        %v3828 = vpop.f32.mrb[0].mxu0
        %3829 = vdwg.mxu0
        %3830 = vmatprep.subr.bf16.mxu0 0
        %3831 = vmatpush1.bf16.msra.mxu0 %v3755
        %3832 = vmatprep.subr.bf16.mxu0 0
        %3833 = vmatpush1.bf16.msra.mxu0 %v3756
        %3834 = vmatprep.subr.bf16.mxu0 0
        %3835 = vmatpush1.bf16.msra.mxu0 0
        %3836 = vmatprep.subr.bf16.mxu0 0
        %3837 = vmatpush1.bf16.msra.mxu0 0
        %3838 = vmatprep.subr.bf16.mxu0 0
        %3839 = vmatpush1.bf16.msra.mxu0 0
        %3840 = vmatprep.subr.bf16.mxu0 0
        %3841 = vmatpush1.bf16.msra.mxu0 0
        %3842 = vmatprep.subr.bf16.mxu0 0
        %3843 = vmatpush1.bf16.msra.mxu0 0
        %3844 = vmatprep.subr.bf16.mxu0 0
        %3845 = vmatpush1.bf16.msra.mxu0 0
        %3846 = vmatprep.subr.bf16.mxu0 0
        %3847 = vmatpush1.bf16.msra.mxu0 0
        %3848 = vmatprep.subr.bf16.mxu0 0
        %3849 = vmatpush1.bf16.msra.mxu0 0
        %3850 = vmatprep.subr.bf16.mxu0 0
        %3851 = vmatpush1.bf16.msra.mxu0 0
        %3852 = vmatprep.subr.bf16.mxu0 0
        %3853 = vmatpush1.bf16.msra.mxu0 0
        %3854 = vmatprep.subr.bf16.mxu0 0
        %3855 = vmatpush1.bf16.msra.mxu0 0
        %3856 = vmatprep.subr.bf16.mxu0 0
        %3857 = vmatpush1.bf16.msra.mxu0 0
        %3858 = vmatprep.subr.bf16.mxu0 0
        %3859 = vmatpush1.bf16.msra.mxu0 0
        %3860 = vmatprep.subr.bf16.mxu0 0
        %3861 = vmatpush1.bf16.msra.mxu0 0
        %3862 = vmatprep.mubr.bf16.mxu0 0
        %3863 = vmatmul.mubr.bf16.gmra.mrb[0].mxu0 %v3776
        %v3864 = vpop.f32.mrb[0].mxu0
        %v3865 = vadd.f32 %v3816, %v3864
        %v3866 = vpop.f32.mrb[0].mxu0
        %v3867 = vpop.f32.mrb[0].mxu0
        %v3868 = vadd.f32 %v3819, %v3867
        %v3869 = vpop.f32.mrb[0].mxu0
        %3870 = vmatprep.mubr.bf16.mxu0 0
        %3871 = vmatmul.mubr.bf16.gmra.mrb[0].mxu0 %v3779
        %v3872 = vpop.f32.mrb[0].mxu0
        %v3873 = vadd.f32 %v3824, %v3872
        %v3874 = vpop.f32.mrb[0].mxu0
        %v3875 = vpop.f32.mrb[0].mxu0
        %v3876 = vadd.f32 %v3827, %v3875
        %v3877 = vpop.f32.mrb[0].mxu0
        %3878 = vdwg.mxu0
        %v3879 = vmax.f32 %v3865, 0.0
        %v3880 = vmax.f32 %v3868, 0.0
        %v3881 = vmax.f32 %v3873, 0.0
        %v3882 = vmax.f32 %v3876, 0.0
        %v3883 = vld [vmem:[%s11] sm:$0xff]
        %v3884 = vld [vmem:[%s11 + $0x8] sm:$0x1]
        %vm3885 = vcmask 130048
        %v3887 = vsel %vm3885, %v3883, 0
        %v3890 = vsel %vm3885, %v3884, 0
        %3892 = vmatprep.subr.mxu0 0.0
        %3893 = vmatpush1.msra.mxu0 %v3879
        %3894 = vmatprep.subr.mxu0 0.0
        %3895 = vmatpush1.msra.mxu0 %v3880
        %3896 = vmatprep.subr.mxu0 0.0
        %3897 = vmatpush1.msra.mxu0 0.0
        %3898 = vmatprep.subr.mxu0 0.0
        %3899 = vmatpush1.msra.mxu0 0.0
        %3900 = vmatprep.subr.mxu0 0.0
        %3901 = vmatpush1.msra.mxu0 0.0
        %3902 = vmatprep.subr.mxu0 0.0
        %3903 = vmatpush1.msra.mxu0 0.0
        %3904 = vmatprep.subr.mxu0 0.0
        %3905 = vmatpush1.msra.mxu0 0.0
        %3906 = vmatprep.subr.mxu0 0.0
        %3907 = vmatpush1.msra.mxu0 0.0
        %3908 = vmatprep.subr.mxu0 0.0
        %3909 = vmatpush1.msra.mxu0 0.0
        %3910 = vmatprep.subr.mxu0 0.0
        %3911 = vmatpush1.msra.mxu0 0.0
        %3912 = vmatprep.subr.mxu0 0.0
        %3913 = vmatpush1.msra.mxu0 0.0
        %3914 = vmatprep.subr.mxu0 0.0
        %3915 = vmatpush1.msra.mxu0 0.0
        %3916 = vmatprep.subr.mxu0 0.0
        %3917 = vmatpush1.msra.mxu0 0.0
        %3918 = vmatprep.subr.mxu0 0.0
        %3919 = vmatpush1.msra.mxu0 0.0
        %3920 = vmatprep.subr.mxu0 0.0
        %3921 = vmatpush1.msra.mxu0 0.0
        %3922 = vmatprep.subr.mxu0 0.0
        %3923 = vmatpush1.msra.mxu0 0.0
        %3924 = vmatprep.subr.mxu0 0.0
        %3925 = vmatpush1.msra.mxu0 0.0
        %3926 = vmatprep.subr.mxu0 0.0
        %3927 = vmatpush1.msra.mxu0 0.0
        %3928 = vmatprep.subr.mxu0 0.0
        %3929 = vmatpush1.msra.mxu0 0.0
        %3930 = vmatprep.subr.mxu0 0.0
        %3931 = vmatpush1.msra.mxu0 0.0
        %3932 = vmatprep.subr.mxu0 0.0
        %3933 = vmatpush1.msra.mxu0 0.0
        %3934 = vmatprep.subr.mxu0 0.0
        %3935 = vmatpush1.msra.mxu0 0.0
        %3936 = vmatprep.subr.mxu0 0.0
        %3937 = vmatpush1.msra.mxu0 0.0
        %3938 = vmatprep.subr.mxu0 0.0
        %3939 = vmatpush1.msra.mxu0 0.0
        %3940 = vmatprep.subr.mxu0 0.0
        %3941 = vmatpush1.msra.mxu0 0.0
        %3942 = vmatprep.subr.mxu0 0.0
        %3943 = vmatpush1.msra.mxu0 0.0
        %3944 = vmatprep.subr.mxu0 0.0
        %3945 = vmatpush1.msra.mxu0 0.0
        %3946 = vmatprep.subr.mxu0 0.0
        %3947 = vmatpush1.msra.mxu0 0.0
        %3948 = vmatprep.subr.mxu0 0.0
        %3949 = vmatpush1.msra.mxu0 0.0
        %3950 = vmatprep.subr.mxu0 0.0
        %3951 = vmatpush1.msra.mxu0 0.0
        %3952 = vmatprep.subr.mxu0 0.0
        %3953 = vmatpush1.msra.mxu0 0.0
        %3954 = vmatprep.subr.mxu0 0.0
        %3955 = vmatpush1.msra.mxu0 0.0
        %3956 = vmatprep.mubr.f32.mxu0 0.0
        %3957 = vmatmul.mubr.f32.gmra.mrb[0].mxu0 %v3887
        %v3958 = vpop.f32.mrb[0].mxu0
        %v3959 = vadd.f32 0.0, %v3958
        %v3960 = vpop.f32.mrb[0].mxu0
        %3961 = vmatprep.mubr.f32.mxu0 0.0
        %3962 = vmatmul.mubr.f32.gmra.mrb[0].mxu0 %v3890
        %v3963 = vpop.f32.mrb[0].mxu0
        %v3964 = vadd.f32 0.0, %v3963
        %v3965 = vpop.f32.mrb[0].mxu0
        %3966 = vdwg.mxu0
        %vm3967 = vcmask 253952
        %3968 = vst.msk [vmem:[#allocation4] sm:$0x1] %vm3967, %v3959
        %v3971 = vunpack.c.l.s4 1983009808
        %v3972 = vunpack.c.0.s8 %v3971
        %v3973 = vlaneseq
        %v3974 = vshrl.u32 %v3973, 7
        %v3975 = vsub.s32 %v3972, %v3974
        %v3976 = vrot.slane %v3959, %v3975
        %v3977 = vrot.slane %v3976, 7
        %v3978 = vrot.slane %v3977, 2
        %3979 = vrot.lane.b32.xlu0 %v3978, 32
        %v3980 = vpop.permute.xlu0 %3979
        %vm3982 = vcmask 516352
        %3983 = vst.msk [vmem:[#allocation4] sm:$0x1] %vm3982, %v3980
        %v3984 = vcombine.high %v3976, %v3976
        %3985 = vrot.lane.b32.xlu0 %v3984, 64
        %v3986 = vpop.permute.xlu0 %3985
        %vm3988 = vcmask 778752
        %3989 = vst.msk [vmem:[#allocation4] sm:$0x1] %vm3988, %v3986
        %v3990 = vrot.slane %v3984, 7
        %v3991 = vrot.slane %v3990, 2
        %3992 = vrot.lane.b32.xlu0 %v3991, 96
        %v3993 = vpop.permute.xlu0 %3992
        %vm3995 = vcmask 1041152
        %3996 = vst.msk [vmem:[#allocation4] sm:$0x1] %vm3995, %v3993
        %v3997 = vcombine.high %v3959, %v3959
        %v3999 = vunpack.c.l.s4 1983009808
        %v4000 = vunpack.c.0.s8 %v3999
        %v4001 = vlaneseq
        %v4002 = vshrl.u32 %v4001, 7
        %v4003 = vsub.s32 %v4000, %v4002
        %v4004 = vrot.slane %v3997, %v4003
        %4006 = vst.msk [vmem:[#allocation4 + $0x2] sm:$0x1] %vm3967, %v4004
        %v4007 = vrot.slane %v4004, 7
        %v4008 = vrot.slane %v4007, 2
        %4009 = vrot.lane.b32.xlu0 %v4008, 32
        %v4010 = vpop.permute.xlu0 %4009
        %4012 = vst.msk [vmem:[#allocation4 + $0x2] sm:$0x1] %vm3982, %v4010
        %v4013 = vcombine.high %v4004, %v4004
        %4014 = vrot.lane.b32.xlu0 %v4013, 64
        %v4015 = vpop.permute.xlu0 %4014
        %4017 = vst.msk [vmem:[#allocation4 + $0x2] sm:$0x1] %vm3988, %v4015
        %v4018 = vrot.slane %v4013, 7
        %v4019 = vrot.slane %v4018, 2
        %4020 = vrot.lane.b32.xlu0 %v4019, 96
        %v4021 = vpop.permute.xlu0 %4020
        %4023 = vst.msk [vmem:[#allocation4 + $0x2] sm:$0x1] %vm3995, %v4021
        %4024 = vst.msk [vmem:[#allocation4 + $0x4] sm:$0x1] %vm3967, %v3964
        %4025 = vmatprep.subr.mxu0 0.0
        %4026 = vmatpush1.msra.mxu0 %v3881
        %4027 = vmatprep.subr.mxu0 0.0
        %4028 = vmatpush1.msra.mxu0 %v3882
        %4029 = vmatprep.subr.mxu0 0.0
        %4030 = vmatpush1.msra.mxu0 0.0
        %4031 = vmatprep.subr.mxu0 0.0
        %4032 = vmatpush1.msra.mxu0 0.0
        %4033 = vmatprep.subr.mxu0 0.0
        %4034 = vmatpush1.msra.mxu0 0.0
        %4035 = vmatprep.subr.mxu0 0.0
        %4036 = vmatpush1.msra.mxu0 0.0
        %4037 = vmatprep.subr.mxu0 0.0
        %4038 = vmatpush1.msra.mxu0 0.0
        %4039 = vmatprep.subr.mxu0 0.0
        %4040 = vmatpush1.msra.mxu0 0.0
        %4041 = vmatprep.subr.mxu0 0.0
        %4042 = vmatpush1.msra.mxu0 0.0
        %4043 = vmatprep.subr.mxu0 0.0
        %4044 = vmatpush1.msra.mxu0 0.0
        %4045 = vmatprep.subr.mxu0 0.0
        %4046 = vmatpush1.msra.mxu0 0.0
        %4047 = vmatprep.subr.mxu0 0.0
        %4048 = vmatpush1.msra.mxu0 0.0
        %4049 = vmatprep.subr.mxu0 0.0
        %4050 = vmatpush1.msra.mxu0 0.0
        %4051 = vmatprep.subr.mxu0 0.0
        %4052 = vmatpush1.msra.mxu0 0.0
        %4053 = vmatprep.subr.mxu0 0.0
        %4054 = vmatpush1.msra.mxu0 0.0
        %4055 = vmatprep.subr.mxu0 0.0
        %4056 = vmatpush1.msra.mxu0 0.0
        %4057 = vmatprep.subr.mxu0 0.0
        %4058 = vmatpush1.msra.mxu0 0.0
        %4059 = vmatprep.subr.mxu0 0.0
        %4060 = vmatpush1.msra.mxu0 0.0
        %4061 = vmatprep.subr.mxu0 0.0
        %4062 = vmatpush1.msra.mxu0 0.0
        %4063 = vmatprep.subr.mxu0 0.0
        %4064 = vmatpush1.msra.mxu0 0.0
        %4065 = vmatprep.subr.mxu0 0.0
        %4066 = vmatpush1.msra.mxu0 0.0
        %4067 = vmatprep.subr.mxu0 0.0
        %4068 = vmatpush1.msra.mxu0 0.0
        %4069 = vmatprep.subr.mxu0 0.0
        %4070 = vmatpush1.msra.mxu0 0.0
        %4071 = vmatprep.subr.mxu0 0.0
        %4072 = vmatpush1.msra.mxu0 0.0
        %4073 = vmatprep.subr.mxu0 0.0
        %4074 = vmatpush1.msra.mxu0 0.0
        %4075 = vmatprep.subr.mxu0 0.0
        %4076 = vmatpush1.msra.mxu0 0.0
        %4077 = vmatprep.subr.mxu0 0.0
        %4078 = vmatpush1.msra.mxu0 0.0
        %4079 = vmatprep.subr.mxu0 0.0
        %4080 = vmatpush1.msra.mxu0 0.0
        %4081 = vmatprep.subr.mxu0 0.0
        %4082 = vmatpush1.msra.mxu0 0.0
        %4083 = vmatprep.subr.mxu0 0.0
        %4084 = vmatpush1.msra.mxu0 0.0
        %4085 = vmatprep.subr.mxu0 0.0
        %4086 = vmatpush1.msra.mxu0 0.0
        %4087 = vmatprep.subr.mxu0 0.0
        %4088 = vmatpush1.msra.mxu0 0.0
        %4089 = vmatprep.mubr.f32.mxu0 0.0
        %4090 = vmatmul.mubr.f32.gmra.mrb[0].mxu0 %v3887
        %v4091 = vpop.f32.mrb[0].mxu0
        %v4092 = vadd.f32 0.0, %v4091
        %v4093 = vpop.f32.mrb[0].mxu0
        %4094 = vmatprep.mubr.f32.mxu0 0.0
        %4095 = vmatmul.mubr.f32.gmra.mrb[0].mxu0 %v3890
        %v4096 = vpop.f32.mrb[0].mxu0
        %v4097 = vadd.f32 0.0, %v4096
        %v4098 = vpop.f32.mrb[0].mxu0
        %4099 = vdwg.mxu0
        %4100 = vst.msk [vmem:[#allocation4 + $0x1] sm:$0x1] %vm3967, %v4092
        %v4103 = vunpack.c.l.s4 1983009808
        %v4104 = vunpack.c.0.s8 %v4103
        %v4105 = vlaneseq
        %v4106 = vshrl.u32 %v4105, 7
        %v4107 = vsub.s32 %v4104, %v4106
        %v4108 = vrot.slane %v4092, %v4107
        %v4109 = vrot.slane %v4108, 7
        %v4110 = vrot.slane %v4109, 2
        %4111 = vrot.lane.b32.xlu0 %v4110, 32
        %v4112 = vpop.permute.xlu0 %4111
        %4114 = vst.msk [vmem:[#allocation4 + $0x1] sm:$0x1] %vm3982, %v4112
        %v4115 = vcombine.high %v4108, %v4108
        %4116 = vrot.lane.b32.xlu0 %v4115, 64
        %v4117 = vpop.permute.xlu0 %4116
        %4119 = vst.msk [vmem:[#allocation4 + $0x1] sm:$0x1] %vm3988, %v4117
        %v4120 = vrot.slane %v4115, 7
        %v4121 = vrot.slane %v4120, 2
        %4122 = vrot.lane.b32.xlu0 %v4121, 96
        %v4123 = vpop.permute.xlu0 %4122
        %4125 = vst.msk [vmem:[#allocation4 + $0x1] sm:$0x1] %vm3995, %v4123
        %v4126 = vcombine.high %v4092, %v4092
        %v4128 = vunpack.c.l.s4 1983009808
        %v4129 = vunpack.c.0.s8 %v4128
        %v4130 = vlaneseq
        %v4131 = vshrl.u32 %v4130, 7
        %v4132 = vsub.s32 %v4129, %v4131
        %v4133 = vrot.slane %v4126, %v4132
        %4135 = vst.msk [vmem:[#allocation4 + $0x3] sm:$0x1] %vm3967, %v4133
        %v4136 = vrot.slane %v4133, 7
        %v4137 = vrot.slane %v4136, 2
        %4138 = vrot.lane.b32.xlu0 %v4137, 32
        %v4139 = vpop.permute.xlu0 %4138
        %4141 = vst.msk [vmem:[#allocation4 + $0x3] sm:$0x1] %vm3982, %v4139
        %v4142 = vcombine.high %v4133, %v4133
        %4143 = vrot.lane.b32.xlu0 %v4142, 64
        %v4144 = vpop.permute.xlu0 %4143
        %4146 = vst.msk [vmem:[#allocation4 + $0x3] sm:$0x1] %vm3988, %v4144
        %v4147 = vrot.slane %v4142, 7
        %v4148 = vrot.slane %v4147, 2
        %4149 = vrot.lane.b32.xlu0 %v4148, 96
        %v4150 = vpop.permute.xlu0 %4149
        %4152 = vst.msk [vmem:[#allocation4 + $0x3] sm:$0x1] %vm3995, %v4150
        %4153 = vst.msk [vmem:[#allocation4 + $0x5] sm:$0x1] %vm3967, %v4097
        %v4154 = vld [vmem:[#allocation4] sm:$0x3f]
        %v4156 = vcombine.high %v4154, %v4154
        %v4158 = vunpack.c.l.s4 1983009808
        %v4159 = vunpack.c.0.s8 %v4158
        %v4160 = vlaneseq
        %v4161 = vshrl.u32 %v4160, 7
        %v4162 = vsub.s32 %v4159, %v4161
        %v4163 = vrot.slane %v4154, %v4162
        %v4165 = vunpack.c.l.s4 1983009808
        %v4166 = vunpack.c.0.s8 %v4165
        %v4167 = vlaneseq
        %v4168 = vshrl.u32 %v4167, 7
        %v4169 = vsub.s32 %v4166, %v4168
        %v4170 = vrot.slane %v4156, %v4169
        %v4171 = vcombine.high %v4163, %v4163
        %v4175 = vpack.c.bf16 %v4163, %v4163
        %v4176 = vpack.c.bf16 %v4171, %v4171
        %v4177 = vpack.c.bf16 %v4170, %v4170
        %v4178 = vld [vmem:[%s12] sm:$0xff]
        %v4179 = vld [vmem:[%s12 + $0x8] sm:$0xff]
        %v4180 = vld [vmem:[%s12 + $0x10] sm:$0xff]
        %v4181 = vld [vmem:[%s12 + $0x18] sm:$0xff]
        %v4182 = vld [vmem:[%s12 + $0x20] sm:$0xff]
        %v4183 = vld [vmem:[%s12 + $0x28] sm:$0xff]
        %v4184 = vld [vmem:[%s12 + $0x30] sm:$0xff]
        %v4185 = vld [vmem:[%s12 + $0x38] sm:$0xff]
        %v4186 = vld [vmem:[%s12 + $0x40] sm:$0xff]
        %v4187 = vld [vmem:[%s12 + $0x48] sm:$0xff]
        %v4188 = vld [vmem:[%s12 + $0x50] sm:$0xff]
        %v4189 = vld [vmem:[%s12 + $0x58] sm:$0xff]
        %v4190 = vld [vmem:[%s12 + $0x60] sm:$0xff]
        %v4191 = vld [vmem:[%s12 + $0x68] sm:$0xff]
        %v4192 = vld [vmem:[%s12 + $0x70] sm:$0xff]
        %v4193 = vld [vmem:[%s12 + $0x78] sm:$0xff]
        %v4194 = vld [vmem:[%s12 + $0x80] sm:$0xff]
        %v4195 = vld [vmem:[%s12 + $0x88] sm:$0xff]
        %v4196 = vld [vmem:[%s12 + $0x90] sm:$0xff]
        %v4197 = vld [vmem:[%s12 + $0x98] sm:$0xff]
        %v4198 = vld [vmem:[%s12 + $0xa0] sm:$0xff]
        %v4199 = vld [vmem:[%s12 + $0xa8] sm:$0xff]
        %v4200 = vld [vmem:[%s12 + $0xb0] sm:$0xff]
        %v4201 = vld [vmem:[%s12 + $0xb8] sm:$0xff]
        %v4202 = vld [vmem:[%s12 + $0xc0] sm:$0xff]
        %v4203 = vld [vmem:[%s12 + $0xc8] sm:$0xff]
        %v4204 = vld [vmem:[%s12 + $0xd0] sm:$0xff]
        %v4205 = vld [vmem:[%s12 + $0xd8] sm:$0xff]
        %v4206 = vld [vmem:[%s12 + $0xe0] sm:$0xff]
        %v4207 = vld [vmem:[%s12 + $0xe8] sm:$0xff]
        %v4208 = vld [vmem:[%s12 + $0xf0] sm:$0xff]
        %v4209 = vld [vmem:[%s12 + $0xf8] sm:$0xff]
        %v4210 = vld [vmem:[%s12 + $0x100] sm:$0xff]
        %v4211 = vld [vmem:[%s12 + $0x108] sm:$0xff]
        %v4212 = vld [vmem:[%s12 + $0x110] sm:$0xff]
        %v4213 = vld [vmem:[%s12 + $0x118] sm:$0xff]
        %v4214 = vld [vmem:[%s13] sm:$0x3]
        %v4216 = vlaneseq
        %v4217 = vshrl.u32 %v4216, 7
        %v4218 = vsub.s32 0, %v4217
        %v4219 = vrot.slane %v4214, %v4218
        %v4220 = vlaneseq
        %v4221 = vshrl.u32 %v4220, 7
        %v4222 = vsub.s32 1, %v4221
        %v4223 = vrot.slane %v4214, %v4222
        %v4262 = vunpack.c.l.b16 %v4178
        %v4263 = vunpack.c.h.b16 %v4178
        %v4264 = vunpack.c.l.b16 %v4179
        %v4265 = vunpack.c.h.b16 %v4179
        %v4266 = vunpack.c.l.b16 %v4180
        %v4267 = vunpack.c.h.b16 %v4180
        %v4268 = vunpack.c.l.b16 %v4181
        %v4269 = vunpack.c.h.b16 %v4181
        %v4270 = vunpack.c.l.b16 %v4182
        %v4271 = vunpack.c.h.b16 %v4182
        %v4272 = vunpack.c.l.b16 %v4183
        %v4273 = vunpack.c.h.b16 %v4183
        %v4274 = vunpack.c.l.b16 %v4184
        %v4275 = vunpack.c.h.b16 %v4184
        %v4276 = vunpack.c.l.b16 %v4185
        %v4277 = vunpack.c.h.b16 %v4185
        %v4278 = vunpack.c.l.b16 %v4186
        %v4279 = vunpack.c.h.b16 %v4186
        %v4280 = vunpack.c.l.b16 %v4187
        %v4281 = vunpack.c.h.b16 %v4187
        %v4282 = vunpack.c.l.b16 %v4188
        %v4283 = vunpack.c.h.b16 %v4188
        %v4284 = vunpack.c.l.b16 %v4189
        %v4285 = vunpack.c.h.b16 %v4189
        %v4286 = vunpack.c.l.b16 %v4190
        %v4287 = vunpack.c.h.b16 %v4190
        %v4288 = vunpack.c.l.b16 %v4191
        %v4289 = vunpack.c.h.b16 %v4191
        %v4290 = vunpack.c.l.b16 %v4192
        %v4291 = vunpack.c.h.b16 %v4192
        %v4292 = vunpack.c.l.b16 %v4193
        %v4293 = vunpack.c.h.b16 %v4193
        %v4294 = vunpack.c.l.b16 %v4194
        %v4295 = vunpack.c.h.b16 %v4194
        %v4296 = vunpack.c.l.b16 %v4195
        %v4297 = vunpack.c.h.b16 %v4195
        %v4298 = vunpack.c.l.b16 %v4196
        %v4299 = vunpack.c.h.b16 %v4196
        %v4300 = vunpack.c.l.b16 %v4197
        %v4301 = vunpack.c.h.b16 %v4197
        %v4302 = vunpack.c.l.b16 %v4198
        %v4303 = vunpack.c.h.b16 %v4198
        %v4304 = vunpack.c.l.b16 %v4199
        %v4305 = vunpack.c.h.b16 %v4199
        %v4306 = vunpack.c.l.b16 %v4200
        %v4307 = vunpack.c.h.b16 %v4200
        %v4308 = vunpack.c.l.b16 %v4201
        %v4309 = vunpack.c.h.b16 %v4201
        %v4310 = vunpack.c.l.b16 %v4202
        %v4311 = vunpack.c.h.b16 %v4202
        %v4312 = vunpack.c.l.b16 %v4203
        %v4313 = vunpack.c.h.b16 %v4203
        %v4314 = vunpack.c.l.b16 %v4204
        %v4315 = vunpack.c.h.b16 %v4204
        %v4316 = vunpack.c.l.b16 %v4205
        %v4317 = vunpack.c.h.b16 %v4205
        %v4318 = vunpack.c.l.b16 %v4206
        %v4319 = vunpack.c.h.b16 %v4206
        %v4320 = vunpack.c.l.b16 %v4207
        %v4321 = vunpack.c.h.b16 %v4207
        %v4322 = vunpack.c.l.b16 %v4208
        %v4323 = vunpack.c.h.b16 %v4208
        %v4324 = vunpack.c.l.b16 %v4209
        %v4325 = vunpack.c.h.b16 %v4209
        %v4326 = vunpack.c.l.b16 %v4210
        %v4327 = vunpack.c.h.b16 %v4210
        %v4328 = vunpack.c.l.b16 %v4211
        %v4329 = vunpack.c.h.b16 %v4211
        %v4330 = vunpack.c.l.b16 %v4212
        %v4331 = vunpack.c.h.b16 %v4212
        %v4332 = vunpack.c.l.b16 %v4213
        %v4333 = vunpack.c.h.b16 %v4213
        %v4334 = vpack.c.b16 %v4264, %v4262
        %v4335 = vpack.c.b16 %v4265, %v4263
        %v4336 = vpack.c.b16 %v4268, %v4266
        %v4337 = vpack.c.b16 %v4269, %v4267
        %v4338 = vpack.c.b16 %v4272, %v4270
        %v4339 = vpack.c.b16 %v4273, %v4271
        %v4340 = vpack.c.b16 %v4276, %v4274
        %v4341 = vpack.c.b16 %v4277, %v4275
        %v4342 = vpack.c.b16 %v4280, %v4278
        %v4343 = vpack.c.b16 %v4281, %v4279
        %v4344 = vpack.c.b16 %v4284, %v4282
        %v4345 = vpack.c.b16 %v4285, %v4283
        %v4346 = vpack.c.b16 %v4288, %v4286
        %v4347 = vpack.c.b16 %v4289, %v4287
        %v4348 = vpack.c.b16 %v4292, %v4290
        %v4349 = vpack.c.b16 %v4293, %v4291
        %v4350 = vpack.c.b16 %v4296, %v4294
        %v4351 = vpack.c.b16 %v4297, %v4295
        %v4352 = vpack.c.b16 %v4300, %v4298
        %v4353 = vpack.c.b16 %v4301, %v4299
        %v4354 = vpack.c.b16 %v4304, %v4302
        %v4355 = vpack.c.b16 %v4305, %v4303
        %v4356 = vpack.c.b16 %v4308, %v4306
        %v4357 = vpack.c.b16 %v4309, %v4307
        %v4358 = vpack.c.b16 %v4312, %v4310
        %v4359 = vpack.c.b16 %v4313, %v4311
        %v4360 = vpack.c.b16 %v4316, %v4314
        %v4361 = vpack.c.b16 %v4317, %v4315
        %v4362 = vpack.c.b16 %v4320, %v4318
        %v4363 = vpack.c.b16 %v4321, %v4319
        %v4364 = vpack.c.b16 %v4324, %v4322
        %v4365 = vpack.c.b16 %v4325, %v4323
        %v4366 = vpack.c.b16 %v4328, %v4326
        %v4367 = vpack.c.b16 %v4329, %v4327
        %v4368 = vpack.c.b16 %v4332, %v4330
        %v4369 = vpack.c.b16 %v4333, %v4331
        %v4407 = vsel %vm3365, %v4177, 0
        %4409 = vmatprep.subr.bf16.mxu0 %v4335
        %4410 = vmatpush1.bf16.msra.mxu0 %v4334
        %4411 = vmatprep.subr.bf16.mxu0 %v4337
        %4412 = vmatpush1.bf16.msra.mxu0 %v4336
        %4413 = vmatprep.subr.bf16.mxu0 %v4339
        %4414 = vmatpush1.bf16.msra.mxu0 %v4338
        %4415 = vmatprep.subr.bf16.mxu0 %v4341
        %4416 = vmatpush1.bf16.msra.mxu0 %v4340
        %4417 = vmatprep.subr.bf16.mxu0 %v4343
        %4418 = vmatpush1.bf16.msra.mxu0 %v4342
        %4419 = vmatprep.subr.bf16.mxu0 %v4345
        %4420 = vmatpush1.bf16.msra.mxu0 %v4344
        %4421 = vmatprep.subr.bf16.mxu0 %v4347
        %4422 = vmatpush1.bf16.msra.mxu0 %v4346
        %4423 = vmatprep.subr.bf16.mxu0 %v4349
        %4424 = vmatpush1.bf16.msra.mxu0 %v4348
        %4425 = vmatprep.subr.bf16.mxu0 %v4351
        %4426 = vmatpush1.bf16.msra.mxu0 %v4350
        %4427 = vmatprep.subr.bf16.mxu0 %v4353
        %4428 = vmatpush1.bf16.msra.mxu0 %v4352
        %4429 = vmatprep.subr.bf16.mxu0 %v4355
        %4430 = vmatpush1.bf16.msra.mxu0 %v4354
        %4431 = vmatprep.subr.bf16.mxu0 %v4357
        %4432 = vmatpush1.bf16.msra.mxu0 %v4356
        %4433 = vmatprep.subr.bf16.mxu0 %v4359
        %4434 = vmatpush1.bf16.msra.mxu0 %v4358
        %4435 = vmatprep.subr.bf16.mxu0 %v4361
        %4436 = vmatpush1.bf16.msra.mxu0 %v4360
        %4437 = vmatprep.subr.bf16.mxu0 %v4363
        %4438 = vmatpush1.bf16.msra.mxu0 %v4362
        %4439 = vmatprep.subr.bf16.mxu0 %v4365
        %4440 = vmatpush1.bf16.msra.mxu0 %v4364
        %4441 = vmatprep.mubr.bf16.mxu0 %v4176
        %4442 = vmatmul.mubr.bf16.gmra.mrb[0].mxu0 %v4175
        %v4443 = vpop.f32.mrb[0].mxu0
        %v4444 = vadd.f32 %v4219, %v4443
        %v4445 = vpop.f32.mrb[0].mxu0
        %v4446 = vadd.f32 %v4223, %v4445
        %v4447 = vpop.f32.mrb[0].mxu0
        %v4448 = vpop.f32.mrb[0].mxu0
        %4449 = vdwg.mxu0
        %4450 = vmatprep.subr.bf16.mxu0 %v4367
        %4451 = vmatpush1.bf16.msra.mxu0 %v4366
        %4452 = vmatprep.subr.bf16.mxu0 %v4369
        %4453 = vmatpush1.bf16.msra.mxu0 %v4368
        %4454 = vmatprep.subr.bf16.mxu0 0
        %4455 = vmatpush1.bf16.msra.mxu0 0
        %4456 = vmatprep.subr.bf16.mxu0 0
        %4457 = vmatpush1.bf16.msra.mxu0 0
        %4458 = vmatprep.subr.bf16.mxu0 0
        %4459 = vmatpush1.bf16.msra.mxu0 0
        %4460 = vmatprep.subr.bf16.mxu0 0
        %4461 = vmatpush1.bf16.msra.mxu0 0
        %4462 = vmatprep.subr.bf16.mxu0 0
        %4463 = vmatpush1.bf16.msra.mxu0 0
        %4464 = vmatprep.subr.bf16.mxu0 0
        %4465 = vmatpush1.bf16.msra.mxu0 0
        %4466 = vmatprep.subr.bf16.mxu0 0
        %4467 = vmatpush1.bf16.msra.mxu0 0
        %4468 = vmatprep.subr.bf16.mxu0 0
        %4469 = vmatpush1.bf16.msra.mxu0 0
        %4470 = vmatprep.subr.bf16.mxu0 0
        %4471 = vmatpush1.bf16.msra.mxu0 0
        %4472 = vmatprep.subr.bf16.mxu0 0
        %4473 = vmatpush1.bf16.msra.mxu0 0
        %4474 = vmatprep.subr.bf16.mxu0 0
        %4475 = vmatpush1.bf16.msra.mxu0 0
        %4476 = vmatprep.subr.bf16.mxu0 0
        %4477 = vmatpush1.bf16.msra.mxu0 0
        %4478 = vmatprep.subr.bf16.mxu0 0
        %4479 = vmatpush1.bf16.msra.mxu0 0
        %4480 = vmatprep.subr.bf16.mxu0 0
        %4481 = vmatpush1.bf16.msra.mxu0 0
        %4482 = vmatprep.mubr.bf16.mxu0 0
        %4483 = vmatmul.mubr.bf16.gmra.mrb[0].mxu0 %v4407
        %v4484 = vpop.f32.mrb[0].mxu0
        %v4485 = vadd.f32 %v4444, %v4484
        %v4486 = vpop.f32.mrb[0].mxu0
        %v4487 = vadd.f32 %v4446, %v4486
        %v4488 = vpop.f32.mrb[0].mxu0
        %v4489 = vpop.f32.mrb[0].mxu0
        %4490 = vdwg.mxu0
        %v4491 = vmax.f32 %v4485, 0.0
        %v4492 = vmax.f32 %v4487, 0.0
        %v4493 = vpack.c.bf16 %v4491, %v4491
        %v4494 = vpack.c.bf16 %v4492, %v4492
        %v4495 = vld [vmem:[%s14] sm:$0xf]
        %v4496 = vld [vmem:[%s14 + $0x4] sm:$0xf]
        %v4497 = vld [vmem:[%s14 + $0x8] sm:$0xf]
        %v4498 = vld [vmem:[%s14 + $0xc] sm:$0xf]
        %v4499 = vld [vmem:[%s14 + $0x10] sm:$0xf]
        %v4500 = vld [vmem:[%s14 + $0x14] sm:$0xf]
        %v4501 = vld [vmem:[%s14 + $0x18] sm:$0xf]
        %v4502 = vld [vmem:[%s14 + $0x1c] sm:$0xf]
        %v4503 = vld [vmem:[%s14 + $0x20] sm:$0xf]
        %v4504 = vld [vmem:[%s14 + $0x24] sm:$0xf]
        %v4505 = vld [vmem:[%s14 + $0x28] sm:$0xf]
        %v4506 = vld [vmem:[%s14 + $0x2c] sm:$0xf]
        %v4507 = vld [vmem:[%s14 + $0x30] sm:$0xf]
        %v4508 = vld [vmem:[%s14 + $0x34] sm:$0xf]
        %v4509 = vld [vmem:[%s14 + $0x38] sm:$0xf]
        %v4510 = vld [vmem:[%s14 + $0x3c] sm:$0xf]
        %v4511 = vld [vmem:[%s14 + $0x40] sm:$0xf]
        %v4512 = vld [vmem:[%s14 + $0x44] sm:$0xf]
        %v4513 = vld [vmem:[%s14 + $0x48] sm:$0xf]
        %v4514 = vld [vmem:[%s14 + $0x4c] sm:$0xf]
        %v4515 = vld [vmem:[%s14 + $0x50] sm:$0xf]
        %v4516 = vld [vmem:[%s14 + $0x54] sm:$0xf]
        %v4517 = vld [vmem:[%s14 + $0x58] sm:$0xf]
        %v4518 = vld [vmem:[%s14 + $0x5c] sm:$0xf]
        %v4519 = vld [vmem:[%s14 + $0x60] sm:$0xf]
        %v4520 = vld [vmem:[%s14 + $0x64] sm:$0xf]
        %v4521 = vld [vmem:[%s14 + $0x68] sm:$0xf]
        %v4522 = vld [vmem:[%s14 + $0x6c] sm:$0xf]
        %v4523 = vld [vmem:[%s14 + $0x70] sm:$0xf]
        %v4524 = vld [vmem:[%s14 + $0x74] sm:$0xf]
        %v4525 = vld [vmem:[%s14 + $0x78] sm:$0xf]
        %v4526 = vld [vmem:[%s14 + $0x7c] sm:$0xf]
        %v4527 = vld [vmem:[%s15] sm:$0x1]
        %v4529 = vlaneseq
        %v4530 = vshrl.u32 %v4529, 7
        %v4531 = vsub.s32 0, %v4530
        %v4532 = vrot.slane %v4527, %v4531
        %v4566 = vunpack.c.l.b16 %v4495
        %v4567 = vunpack.c.l.b16 %v4496
        %v4568 = vunpack.c.l.b16 %v4497
        %v4569 = vunpack.c.l.b16 %v4498
        %v4570 = vunpack.c.l.b16 %v4499
        %v4571 = vunpack.c.l.b16 %v4500
        %v4572 = vunpack.c.l.b16 %v4501
        %v4573 = vunpack.c.l.b16 %v4502
        %v4574 = vunpack.c.l.b16 %v4503
        %v4575 = vunpack.c.l.b16 %v4504
        %v4576 = vunpack.c.l.b16 %v4505
        %v4577 = vunpack.c.l.b16 %v4506
        %v4578 = vunpack.c.l.b16 %v4507
        %v4579 = vunpack.c.l.b16 %v4508
        %v4580 = vunpack.c.l.b16 %v4509
        %v4581 = vunpack.c.l.b16 %v4510
        %v4582 = vunpack.c.l.b16 %v4511
        %v4583 = vunpack.c.l.b16 %v4512
        %v4584 = vunpack.c.l.b16 %v4513
        %v4585 = vunpack.c.l.b16 %v4514
        %v4586 = vunpack.c.l.b16 %v4515
        %v4587 = vunpack.c.l.b16 %v4516
        %v4588 = vunpack.c.l.b16 %v4517
        %v4589 = vunpack.c.l.b16 %v4518
        %v4590 = vunpack.c.l.b16 %v4519
        %v4591 = vunpack.c.l.b16 %v4520
        %v4592 = vunpack.c.l.b16 %v4521
        %v4593 = vunpack.c.l.b16 %v4522
        %v4594 = vunpack.c.l.b16 %v4523
        %v4595 = vunpack.c.l.b16 %v4524
        %v4596 = vunpack.c.l.b16 %v4525
        %v4597 = vunpack.c.l.b16 %v4526
        %v4598 = vpack.c.b16 %v4567, %v4566
        %v4599 = vpack.c.b16 %v4569, %v4568
        %v4600 = vpack.c.b16 %v4571, %v4570
        %v4601 = vpack.c.b16 %v4573, %v4572
        %v4602 = vpack.c.b16 %v4575, %v4574
        %v4603 = vpack.c.b16 %v4577, %v4576
        %v4604 = vpack.c.b16 %v4579, %v4578
        %v4605 = vpack.c.b16 %v4581, %v4580
        %v4606 = vpack.c.b16 %v4583, %v4582
        %v4607 = vpack.c.b16 %v4585, %v4584
        %v4608 = vpack.c.b16 %v4587, %v4586
        %v4609 = vpack.c.b16 %v4589, %v4588
        %v4610 = vpack.c.b16 %v4591, %v4590
        %v4611 = vpack.c.b16 %v4593, %v4592
        %v4612 = vpack.c.b16 %v4595, %v4594
        %v4613 = vpack.c.b16 %v4597, %v4596
        %4630 = vmatprep.subr.bf16.mxu0 0
        %4631 = vmatpush1.bf16.msra.mxu0 %v4598
        %4632 = vmatprep.subr.bf16.mxu0 0
        %4633 = vmatpush1.bf16.msra.mxu0 %v4599
        %4634 = vmatprep.subr.bf16.mxu0 0
        %4635 = vmatpush1.bf16.msra.mxu0 %v4600
        %4636 = vmatprep.subr.bf16.mxu0 0
        %4637 = vmatpush1.bf16.msra.mxu0 %v4601
        %4638 = vmatprep.subr.bf16.mxu0 0
        %4639 = vmatpush1.bf16.msra.mxu0 %v4602
        %4640 = vmatprep.subr.bf16.mxu0 0
        %4641 = vmatpush1.bf16.msra.mxu0 %v4603
        %4642 = vmatprep.subr.bf16.mxu0 0
        %4643 = vmatpush1.bf16.msra.mxu0 %v4604
        %4644 = vmatprep.subr.bf16.mxu0 0
        %4645 = vmatpush1.bf16.msra.mxu0 %v4605
        %4646 = vmatprep.subr.bf16.mxu0 0
        %4647 = vmatpush1.bf16.msra.mxu0 %v4606
        %4648 = vmatprep.subr.bf16.mxu0 0
        %4649 = vmatpush1.bf16.msra.mxu0 %v4607
        %4650 = vmatprep.subr.bf16.mxu0 0
        %4651 = vmatpush1.bf16.msra.mxu0 %v4608
        %4652 = vmatprep.subr.bf16.mxu0 0
        %4653 = vmatpush1.bf16.msra.mxu0 %v4609
        %4654 = vmatprep.subr.bf16.mxu0 0
        %4655 = vmatpush1.bf16.msra.mxu0 %v4610
        %4656 = vmatprep.subr.bf16.mxu0 0
        %4657 = vmatpush1.bf16.msra.mxu0 %v4611
        %4658 = vmatprep.subr.bf16.mxu0 0
        %4659 = vmatpush1.bf16.msra.mxu0 %v4612
        %4660 = vmatprep.subr.bf16.mxu0 0
        %4661 = vmatpush1.bf16.msra.mxu0 %v4613
        %4662 = vmatprep.mubr.bf16.mxu0 %v4494
        %4663 = vmatmul.mubr.bf16.gmra.mrb[0].mxu0 %v4493
        %v4664 = vpop.f32.mrb[0].mxu0
        %v4665 = vadd.f32 %v4532, %v4664
        %v4666 = vpop.f32.mrb[0].mxu0
        %v4667 = vpop.f32.mrb[0].mxu0
        %v4668 = vpop.f32.mrb[0].mxu0
        %4669 = vdwg.mxu0
        %4670 = vst [vmem:[%s515] sm:$0x3] %v4665
        %s4671 = sand.u32 %s379, 1
        %s4672 = scalar_lea.sflag [#allocation6], %s4671
        %s4673 = sand.u32 %s379, 1
        %s4674 = smul.addr %s4673, 2
        %s4675 = scalar_lea.vmem [#allocation5], %s4674
        // Predicated region
        $region85: #{simple_cnn_forward.1} parent=83 // pred_check
          %p4676 = pneg %p389
        $region86: #{simple_cnn_forward.1} parent=83 // pred_check_branch
          %4678 = sbr.rel (%p4676) target = $region88
        $region87: #{simple_cnn_forward.1} parent=83 // pred_region
          %s4680 = ssub.s32 32, 32
          %4681 = vsyncadd %s4672, %s4680
          %s4682 = smul.addr %s30, 32
          %s4683 = scalar_lea.hbm %s16, %s4682
          %s4685 = sshll.u32 %s4675, 4
          %s4686 = int_to_ptr.vmem [resolvable:$true] %s4685
          %4688 = dma.vmem_to_hbm [thread:$0]  %s4686, 32, %s4683, %s4672
        $region88: #{simple_cnn_forward.1} parent=83 // pred_fallthru
          _
      $region84: #{simple_cnn_forward.1} parent=5 // pred_fallthru
        _
      %p4689 = scmp.le.s32.totalorder 2, %s25
      // Predicated region
      $region89: #{simple_cnn_forward.1} parent=5 // pred_check
        %p4690 = pneg %p4689
      $region90: #{simple_cnn_forward.1} parent=5 // pred_check_branch
        %4692 = sbr.rel (%p4690) target = $region92
      $region91: #{simple_cnn_forward.1} parent=5 // pred_region
        %s4693 = ssub.s32 %s25, 2
        // Predicated region
        $region93: #{simple_cnn_forward.1} parent=91 // pred_check
          %p4694 = pneg %p395
        $region94: #{simple_cnn_forward.1} parent=91 // pred_check_branch
          %4696 = sbr.rel (%p4694) target = $region96
        $region95: #{simple_cnn_forward.1} parent=91 // pred_region
          %s4697 = sand.u32 %s380, 1
          %s4698 = scalar_lea.sflag [#allocation6], %s4697
          %s4699 = sand.u32 %s380, 1
          %s4700 = smul.addr %s4699, 2
          %s4701 = scalar_lea.vmem [#allocation5], %s4700
          %4702 = dma.done %s4698, 32
        $region96: #{simple_cnn_forward.1} parent=91 // pred_fallthru
          _
      $region92: #{simple_cnn_forward.1} parent=5 // pred_fallthru
        _
    $region6: #{simple_cnn_forward.1} parent=1 // loop_footer
      %s29 = sadd.s32 1, %s25
    $region7: #{simple_cnn_forward.1} parent=1 // loop_footer_branch
      %24 = sbr.rel target = $region3
    $region8: #{simple_cnn_forward.1} parent=1 // loop_exit
      _
    %4703 = vsyncpa [#allocation6], 1
    %s4704 = scalar_lea.sflag [#allocation6], 1
    %4705 = vsyncpa %s4704, 1

</llo_original>
